<compile_context>
chip_gen: v6e
topology: v6e:2x2x1
jax: 0.10.0
libtpu: 0.0.40
codegen_flags: <defaults>
</compile_context>

<pallas_src>
import functools
import math

import jax
import jax.numpy as jnp
from jax import lax
from jax.experimental import pallas as pl
from jax.experimental.pallas import tpu as pltpu

_LANE = 128


# --------------------------------------------------------------------------
# Kernel
# --------------------------------------------------------------------------
def feedforward_kernel(xc_ref, xt_ref, xb_ref, win_ref, wd1_ref, wd2_ref,
                       wout_ref, o_ref, *, approximate_gelu: bool):
    # xc_ref:  (1, TH, W, dimp)  current row-tile of the (padded) input
    # xt_ref:  (1, 1,  W, dimp)  row just above the tile (clamped; masked at top)
    # xb_ref:  (1, 1,  W, dimp)  row just below the tile (clamped; masked at bottom)
    # win_ref: (dimp, 2*hidp)    fused project_in weight [x1-half | x2-half]
    # wd1/2:   (3, 3, hidp)      depthwise 3x3 weight halves (compute dtype)
    # wout:    (hidp, dimp)      project_out weight, pre-scaled by gelu's 0.5
    # o_ref:   (1, TH, W, dimp)
    _, TH, W, dimp = xc_ref.shape
    hidp = win_ref.shape[1] // 2
    R = TH + 2
    cd = wd1_ref.dtype                       # depthwise / gate compute dtype

    h_idx = pl.program_id(1)
    n_h = pl.num_programs(1)

    xc = xc_ref[0]                                            # (TH, W, dimp)
    # Zero-mask halo rows at the image boundaries (exact: project_in is bias-free).
    xt = xt_ref[0] * (h_idx > 0).astype(xc.dtype)             # (1, W, dimp)
    xb = xb_ref[0] * (h_idx < n_h - 1).astype(xc.dtype)       # (1, W, dimp)
    x_halo = jnp.concatenate([xt, xc, xb], axis=0)            # (R, W, dimp)

    # ---- project_in: single fused MXU matmul, f32 accumulation, weight-dtype LHS ----
    xm = x_halo.reshape(R * W, dimp).astype(win_ref.dtype)
    h = jnp.dot(xm, win_ref[...], preferred_element_type=jnp.float32)   # (R*W, 2*hidp)
    h1 = h[:, :hidp].astype(cd)          # lane-aligned slices (hidp % 128 == 0)
    h2 = h[:, hidp:].astype(cd)

    # Boundary-column masks, folded into the kx=0 / kx=2 tap weights so the
    # rolled slabs never need their own full-slab masking mul.
    col = lax.broadcasted_iota(jnp.int32, (1, W, 1), 1)
    mask_l = (col > 0).astype(cd)
    mask_r = (col < W - 1).astype(cd)

    def dwconv(hf, wd):
        # hf: (R*W, hidp) flat hidden slab; wd: (3, 3, hidp)
        # Column shifts on the XLU (2-D sublane rotate); the wrapped rows at
        # column 0 / W-1 are zeroed by the folded tap weights below.
        hl = pltpu.roll(hf, 1, axis=0)               # input col w-1 at position w
        hr = pltpu.roll(hf, R * W - 1, axis=0)       # input col w+1 at position w
        # NOTE: reshapes are free views when W % 8 == 0 (sublane-aligned).
        h3 = hf.reshape(R, W, hidp)
        hl3 = hl.reshape(R, W, hidp)
        hr3 = hr.reshape(R, W, hidp)
        wl = wd[:, 0, :][:, None, :] * mask_l        # (3, W, hidp), col 0 zeroed
        wr = wd[:, 2, :][:, None, :] * mask_r        # (3, W, hidp), col W-1 zeroed
        acc = None
        for ky in range(3):                          # 9 taps, row slices are free
            t = (hl3[ky:ky + TH] * wl[ky]
                 + h3[ky:ky + TH] * wd[ky, 1, :]
                 + hr3[ky:ky + TH] * wr[ky])
            acc = t if acc is None else acc + t
        return acc                                   # (TH, W, hidp)

    a1 = dwconv(h1, wd1_ref[...])
    a2 = dwconv(h2, wd2_ref[...])

    # ---- gated GELU; the 0.5 factor lives in w_out (exact power-of-two fold) ----
    if approximate_gelu:
        # tanh form -> single EUP op per element (small deviation from exact erf)
        c0 = 0.7978845608028654      # sqrt(2/pi)
        c1 = 0.044715
        core = a1 * (1.0 + jnp.tanh(c0 * (a1 + c1 * (a1 * a1 * a1))))
    else:
        # exact erf (torch default); erf evaluated in f32 for safety
        erf_t = lax.erf(a1.astype(jnp.float32) * 0.7071067811865476)
        core = a1 * (1.0 + erf_t).astype(cd)
    g = (core * a2).reshape(TH * W, hidp).astype(wout_ref.dtype)

    # ---- project_out (MXU), f32 accumulation ----
    out = jnp.dot(g, wout_ref[...], preferred_element_type=jnp.float32)  # (TH*W, dimp)
    o_ref[0] = out.reshape(TH, W, dimp).astype(o_ref.dtype)


# --------------------------------------------------------------------------
# Wrapper helpers
# --------------------------------------------------------------------------
def _round_up(x, m):
    return (x + m - 1) // m * m


def _cdiv(a, b):
    return -(-a // b)


def _itemsize(dt):
    return jnp.dtype(dt).itemsize


def _vmem_capacity_bytes():
    try:
        return int(pltpu.get_tpu_info().vmem_capacity_bytes)
    except Exception:
        return 64 * 1024 * 1024            # conservative (v7x per-core VMEM)


def _tile_act_bytes(th, W, dimp, hidp, in_b, w_b, cd_b):
    """Conservative per-grid-step activation VMEM estimate (bytes)."""
    R = th + 2
    s = 0
    s += 2 * th * W * dimp * in_b          # double-buffered center input block
    s += 4 * W * dimp * in_b               # two halo blocks, double-buffered
    s += 2 * th * W * dimp * in_b          # double-buffered output block
    s += R * W * dimp * max(in_b, w_b)     # x_halo (+ cast copy feeding the MXU)
    s += R * W * 2 * hidp * 4              # fused project_in result (f32)
    s += 2 * R * W * hidp * cd_b           # h1, h2
    s += 2 * R * W * hidp * cd_b           # rolled slabs (one half live at a time)
    s += 3 * th * W * hidp * cd_b          # a1, a2, gate
    s += th * W * dimp * 4                 # project_out result (f32)
    return s


def _pick_tile_rows(H, W, dimp, hidp, act_budget, in_b, w_b, cd_b, min_tiles):
    best = 1
    for th in range(1, min(H, 512) + 1):
        if _tile_act_bytes(th, W, dimp, hidp, in_b, w_b, cd_b) <= act_budget:
            best = th
    # mild preference for MXU-friendly M = TH*W multiples of 256
    aligned = [t for t in range(max(1, best // 2), best + 1) if (t * W) % 256 == 0]
    if aligned:
        best = max(aligned)
    best = min(best, H)
    if min_tiles > 1 and H > 1:
        # keep >= min_tiles row-tiles so both v7x TensorCores stay busy at small B
        best = min(best, _cdiv(H, min_tiles))
    return max(best, 1)


# --------------------------------------------------------------------------
# Wrapper
# --------------------------------------------------------------------------
def feedforward_pallas(x, w_in, w_dw, w_out, *, tile_rows=None,
                       compute_dtype=None, approximate_gelu=False):
    """x: (B, H, W, dim) NHWC.  w_in: (dim, 2*hid), w_dw: (3, 3, 2*hid),
    w_out: (hid, dim).  Returns (B, H, W, dim)."""
    B, H, W, dim = x.shape
    hid2 = w_in.shape[1]
    hid = hid2 // 2
    assert w_dw.shape == (3, 3, hid2)
    assert w_out.shape == (hid, dim)

    if compute_dtype is None:
        bf = jnp.bfloat16
        compute_dtype = bf if (x.dtype == bf or w_dw.dtype == bf) else jnp.float32
    compute_dtype = jnp.dtype(compute_dtype)

    # --- lane padding: hidden channels and `dim` both rounded to 128 lanes ---
    # (exact: padded channels are zero end to end and are sliced off after).
    hidp = _round_up(hid, _LANE)
    dimp = _round_up(dim, _LANE)
    hpad, dpad = hidp - hid, dimp - dim

    w_in1 = jnp.pad(w_in[:, :hid], ((0, dpad), (0, hpad)))
    w_in2 = jnp.pad(w_in[:, hid:], ((0, dpad), (0, hpad)))
    w_in_f = jnp.concatenate([w_in1, w_in2], axis=1)                  # (dimp, 2*hidp)
    wd1 = jnp.pad(w_dw[..., :hid], ((0, 0), (0, 0), (0, hpad))).astype(compute_dtype)
    wd2 = jnp.pad(w_dw[..., hid:], ((0, 0), (0, 0), (0, hpad))).astype(compute_dtype)
    # gelu's 0.5 folded into project_out (exact: power of two)
    w_outp = jnp.pad(w_out * 0.5, ((0, hpad), (0, dpad)))             # (hidp, dimp)

    # --- VMEM budgeting: device-aware, consistent picker budget & limit ---
    cap = _vmem_capacity_bytes()
    vmem_limit = min(cap * 3 // 4, 96 * 1024 * 1024)   # ~96 MiB on 128 MiB parts, ~48 MiB on v7x
    in_b = _itemsize(x.dtype)
    w_b = _itemsize(w_in_f.dtype)
    cd_b = _itemsize(compute_dtype)
    weight_bytes = (w_in_f.size * _itemsize(w_in_f.dtype)
                    + wd1.size * cd_b + wd2.size * cd_b
                    + w_outp.size * _itemsize(w_outp.dtype))          # single-buffered
    act_budget = max(vmem_limit - weight_bytes - 2 * 1024 * 1024, 1 * 1024 * 1024)

    min_tiles = 2 if B < 2 else 1
    if tile_rows is None:
        th = _pick_tile_rows(H, W, dimp, hidp, act_budget, in_b, w_b, cd_b, min_tiles)
    else:
        th = max(1, min(int(tile_rows), H))
    n_h = _cdiv(H, th)
    Hp = n_h * th

    # Zero-pad H (tail tile) and dim (lanes); exact because every stage is bias-free.
    if Hp != H or dimp != dim:
        x_p = jnp.pad(x, ((0, 0), (0, Hp - H), (0, 0), (0, dimp - dim)))
    else:
        x_p = x

    def center_map(b, h):
        return (b, h, 0, 0)

    def top_map(b, h):
        return (b, jnp.maximum(h * th - 1, 0), 0, 0)

    def bot_map(b, h):
        return (b, jnp.minimum((h + 1) * th, Hp - 1), 0, 0)

    def const2(b, h):
        return (0, 0)

    def const3(b, h):
        return (0, 0, 0)

    kernel = functools.partial(feedforward_kernel, approximate_gelu=approximate_gelu)

    def build(weight_mode, limit):
        wkw = {} if weight_mode is None else {"pipeline_mode": weight_mode}
        return pl.pallas_call(
            kernel,
            out_shape=jax.ShapeDtypeStruct((B, Hp, W, dimp), x.dtype),
            grid_spec=pltpu.PrefetchScalarGridSpec(
                num_scalar_prefetch=0,
                grid=(B, n_h),
                in_specs=[
                    pl.BlockSpec((1, th, W, dimp), center_map),
                    pl.BlockSpec((1, 1, W, dimp), top_map),
                    pl.BlockSpec((1, 1, W, dimp), bot_map),
                    pl.BlockSpec((dimp, 2 * hidp), const2, **wkw),
                    pl.BlockSpec((3, 3, hidp), const3, **wkw),
                    pl.BlockSpec((3, 3, hidp), const3, **wkw),
                    pl.BlockSpec((hidp, dimp), const2, **wkw),
                ],
                out_specs=pl.BlockSpec((1, th, W, dimp), center_map),
            ),
            compiler_params=pltpu.CompilerParams(
                # Both grid axes are independent -> shardable across v7x's 2 TCs.
                dimension_semantics=("parallel", "parallel"),
                vmem_limit_bytes=int(limit),
            ),
        )

    try:
        # Constant-index weights: single-buffered (halves resident weight VMEM).
        out = build(pl.Buffered(1), vmem_limit)(x_p, x_p, x_p, w_in_f, wd1, wd2, w_outp)
    except Exception:
        # Fallback if this JAX version rejects single-buffering of pipelined blocks.
        fb_limit = min(cap - 4 * 1024 * 1024, vmem_limit + weight_bytes)
        out = build(None, fb_limit)(x_p, x_p, x_p, w_in_f, wd1, wd2, w_outp)

    if Hp != H or dimp != dim:
        out = out[:, :H, :, :dim]
    return out


# --------------------------------------------------------------------------
# Pure-JAX reference (mirrors the PyTorch module exactly; NHWC in/out)
# --------------------------------------------------------------------------
def _gelu_exact(x):
    return 0.5 * x * (1.0 + lax.erf(x / jnp.sqrt(2.0).astype(x.dtype)))


def feedforward_reference(x, w_in, w_dw, w_out):
    hid2 = w_in.shape[1]
    xc = jnp.transpose(x, (0, 3, 1, 2))  # NCHW
    h = lax.conv_general_dilated(
        xc, jnp.transpose(w_in)[:, :, None, None], (1, 1), "VALID",
        dimension_numbers=("NCHW", "OIHW", "NCHW"))
    wd = jnp.transpose(w_dw, (2, 0, 1))[:, None, :, :]
    h = lax.conv_general_dilated(
        h, wd, (1, 1), ((1, 1), (1, 1)),
        dimension_numbers=("NCHW", "OIHW", "NCHW"),
        feature_group_count=hid2)
    x1, x2 = jnp.split(h, 2, axis=1)
    g = _gelu_exact(x1) * x2
    out = lax.conv_general_dilated(
        g, jnp.transpose(w_out)[:, :, None, None], (1, 1), "VALID",
        dimension_numbers=("NCHW", "OIHW", "NCHW"))
    return jnp.transpose(out, (0, 2, 3, 1))


if __name__ == "__main__":
    # Small shapes consistent with the module's forward (x is NHWC).
    B, H, W, dim = 2, 16, 16, 4
    f = 3
    hid = int(dim * f)          # 12
    hid2 = hid * 2              # 24

    key = jax.random.PRNGKey(0)
    kx, k1, k2, k3 = jax.random.split(key, 4)

    x = jax.random.normal(kx, (B, H, W, dim), dtype=jnp.float32)
    # Deterministic synthetic parameters (bias=False), stored channels-last:
    #   project_in  Conv2d(dim, 2*hid, 1)                 -> (dim, 2*hid)
    #   dwconv      Conv2d(2*hid, 2*hid, 3, groups=2*hid) -> (3, 3, 2*hid)
    #   project_out Conv2d(hid, dim, 1)                   -> (hid, dim)
    w_in = jax.random.normal(k1, (dim, hid2), jnp.float32) * (1.0 / math.sqrt(dim))
    w_dw = jax.random.normal(k2, (3, 3, hid2), jnp.float32) * (1.0 / 3.0)
    w_out = jax.random.normal(k3, (hid, dim), jnp.float32) * (1.0 / math.sqrt(hid))

    ref = jax.block_until_ready(feedforward_reference(x, w_in, w_dw, w_out))

    # (a) explicit tiling: interior tile boundary + both image edges
    out_a = jax.block_until_ready(feedforward_pallas(x, w_in, w_dw, w_out, tile_rows=8))
    # (b) auto tiling from the VMEM-aware picker (single tile here)
    out_b = jax.block_until_ready(feedforward_pallas(x, w_in, w_dw, w_out))
    # (c) TH that does not divide H: exercises the zero-padded tail tile
    out_c = jax.block_until_ready(feedforward_pallas(x, w_in, w_dw, w_out, tile_rows=5))
    for out in (out_a, out_b, out_c):
        assert out.shape == (B, H, W, dim)
        if not jnp.allclose(out, ref, atol=1e-4, rtol=1e-4):
            raise AssertionError("Pallas kernel mismatch vs reference (exact gelu)")

    # (d) EUP-routed tanh-approx gelu: looser tolerance vs the exact-erf reference
    out_d = jax.block_until_ready(
        feedforward_pallas(x, w_in, w_dw, w_out, tile_rows=8, approximate_gelu=True))
    if not jnp.allclose(out_d, ref, atol=2e-2, rtol=2e-2):
        raise AssertionError("Pallas kernel mismatch vs reference (approx gelu)")

    print("KERNEL_OK")
</pallas_src>

<mosaic_0001>
module attributes {stable_mosaic.version = 11 : i64} {
  func.func @feedforward_kernel(%arg0: i32, %arg1: i32, %arg2: memref<1x8x16x128xf32, #tpu.memory_space<vmem>>, %arg3: memref<1x1x16x128xf32, #tpu.memory_space<vmem>>, %arg4: memref<1x1x16x128xf32, #tpu.memory_space<vmem>>, %arg5: memref<128x256xf32, #tpu.memory_space<vmem>>, %arg6: memref<3x3x128xf32, #tpu.memory_space<vmem>>, %arg7: memref<3x3x128xf32, #tpu.memory_space<vmem>>, %arg8: memref<128x128xf32, #tpu.memory_space<vmem>>, %arg9: memref<1x8x16x128xf32, #tpu.memory_space<vmem>>) attributes {dimension_semantics = [#tpu.dimension_semantics<parallel>, #tpu.dimension_semantics<parallel>], iteration_bounds = array<i64: 2, 2>, scalar_prefetch = 0 : i64, scratch_operands = 0 : i64, tpu.core_type = #tpu.core_type<tc>, window_params = [{transform_indices = @transform_0, window_bounds = array<i64: 1, 8, 16, 128>}, {transform_indices = @transform_1, window_bounds = array<i64: 1, 1, 16, 128>}, {transform_indices = @transform_2, window_bounds = array<i64: 1, 1, 16, 128>}, {pipeline_mode = #tpu.pipeline_mode<synchronous>, transform_indices = @transform_3, window_bounds = array<i64: 128, 256>}, {pipeline_mode = #tpu.pipeline_mode<synchronous>, transform_indices = @transform_4, window_bounds = array<i64: 3, 3, 128>}, {pipeline_mode = #tpu.pipeline_mode<synchronous>, transform_indices = @transform_5, window_bounds = array<i64: 3, 3, 128>}, {pipeline_mode = #tpu.pipeline_mode<synchronous>, transform_indices = @transform_6, window_bounds = array<i64: 128, 128>}, {transform_indices = @transform_7, window_bounds = array<i64: 1, 8, 16, 128>}]} {
    %c0 = arith.constant 0 : index
    %c0_0 = arith.constant 0 : index
    %c0_1 = arith.constant 0 : index
    %c0_2 = arith.constant 0 : index
    %0 = vector.load %arg2[%c0, %c0_0, %c0_1, %c0_2] : memref<1x8x16x128xf32, #tpu.memory_space<vmem>>, vector<1x8x16x128xf32>
    %1 = vector.shape_cast %0 : vector<1x8x16x128xf32> to vector<8x16x128xf32>
    %c0_3 = arith.constant 0 : index
    %c0_4 = arith.constant 0 : index
    %c0_5 = arith.constant 0 : index
    %c0_6 = arith.constant 0 : index
    %2 = vector.load %arg3[%c0_3, %c0_4, %c0_5, %c0_6] : memref<1x1x16x128xf32, #tpu.memory_space<vmem>>, vector<1x1x16x128xf32>
    %3 = vector.shape_cast %2 : vector<1x1x16x128xf32> to vector<1x16x128xf32>
    %c0_i32 = arith.constant 0 : i32
    %4 = arith.cmpi sgt, %arg1, %c0_i32 : i32
    %5 = arith.extui %4 : i1 to i32
    %6 = arith.sitofp %5 : i32 to f32
    %7 = vector.broadcast %6 : f32 to vector<1x16x128xf32>
    %8 = arith.mulf %3, %7 : vector<1x16x128xf32>
    %c0_7 = arith.constant 0 : index
    %c0_8 = arith.constant 0 : index
    %c0_9 = arith.constant 0 : index
    %c0_10 = arith.constant 0 : index
    %9 = vector.load %arg4[%c0_7, %c0_8, %c0_9, %c0_10] : memref<1x1x16x128xf32, #tpu.memory_space<vmem>>, vector<1x1x16x128xf32>
    %10 = vector.shape_cast %9 : vector<1x1x16x128xf32> to vector<1x16x128xf32>
    %c1_i32 = arith.constant 1 : i32
    %11 = arith.cmpi slt, %arg1, %c1_i32 : i32
    %12 = arith.extui %11 : i1 to i32
    %13 = arith.sitofp %12 : i32 to f32
    %14 = vector.broadcast %13 : f32 to vector<1x16x128xf32>
    %15 = arith.mulf %10, %14 : vector<1x16x128xf32>
    %16 = tpu.concatenate %8, %1, %15 in 0 : vector<1x16x128xf32>, vector<8x16x128xf32>, vector<1x16x128xf32> -> vector<10x16x128xf32>
    %17 = vector.shape_cast %16 : vector<10x16x128xf32> to vector<160x128xf32>
    %c0_11 = arith.constant 0 : index
    %c0_12 = arith.constant 0 : index
    %18 = vector.load %arg5[%c0_11, %c0_12] : memref<128x256xf32, #tpu.memory_space<vmem>>, vector<128x256xf32>
    %cst = arith.constant dense<0.000000e+00> : vector<160x256xf32>
    %19 = tpu.matmul %17, %18, %cst {dimension_numbers = #tpu.dot_dimension_numbers<[1], [0], [0], [1], [0, 0, 1, 1], [], []>} : vector<160x128xf32>, vector<128x256xf32>, vector<160x256xf32> -> vector<160x256xf32>
    %20 = vector.extract_strided_slice %19 {offsets = [0, 0], sizes = [160, 128], strides = [1, 1]} : vector<160x256xf32> to vector<160x128xf32>
    %21 = vector.extract_strided_slice %19 {offsets = [0, 128], sizes = [160, 128], strides = [1, 1]} : vector<160x256xf32> to vector<160x128xf32>
    %22 = tpu.iota {dimensions = array<i32: 1>} : vector<1x16x1xi32>
    %c0_i32_13 = arith.constant 0 : i32
    %23 = vector.broadcast %c0_i32_13 : i32 to vector<1x16x1xi32>
    %24 = arith.cmpi sgt, %22, %23 : vector<1x16x1xi32>
    %25 = arith.extui %24 : vector<1x16x1xi1> to vector<1x16x1xi32>
    %26 = arith.sitofp %25 : vector<1x16x1xi32> to vector<1x16x1xf32>
    %c15_i32 = arith.constant 15 : i32
    %27 = vector.broadcast %c15_i32 : i32 to vector<1x16x1xi32>
    %28 = arith.cmpi slt, %22, %27 : vector<1x16x1xi32>
    %29 = arith.extui %28 : vector<1x16x1xi1> to vector<1x16x1xi32>
    %30 = arith.sitofp %29 : vector<1x16x1xi32> to vector<1x16x1xf32>
    %c0_14 = arith.constant 0 : index
    %c0_15 = arith.constant 0 : index
    %c0_16 = arith.constant 0 : index
    %31 = vector.load %arg6[%c0_14, %c0_15, %c0_16] : memref<3x3x128xf32, #tpu.memory_space<vmem>>, vector<3x3x128xf32>
    %c1_i32_17 = arith.constant 1 : i32
    %32 = tpu.dynamic_rotate %20 by %c1_i32_17 dim 0 : vector<160x128xf32>, i32 -> vector<160x128xf32>
    %c159_i32 = arith.constant 159 : i32
    %33 = tpu.dynamic_rotate %20 by %c159_i32 dim 0 : vector<160x128xf32>, i32 -> vector<160x128xf32>
    %34 = vector.shape_cast %20 : vector<160x128xf32> to vector<10x16x128xf32>
    %35 = vector.shape_cast %32 : vector<160x128xf32> to vector<10x16x128xf32>
    %36 = vector.shape_cast %33 : vector<160x128xf32> to vector<10x16x128xf32>
    %37 = vector.extract_strided_slice %31 {offsets = [0, 0, 0], sizes = [3, 1, 128], strides = [1, 1, 1]} : vector<3x3x128xf32> to vector<3x1x128xf32>
    %38 = vector.shape_cast %37 : vector<3x1x128xf32> to vector<3x128xf32>
    %39 = vector.shape_cast %38 : vector<3x128xf32> to vector<3x1x128xf32>
    %40 = vector.broadcast %39 : vector<3x1x128xf32> to vector<3x16x128xf32>
    %41 = vector.broadcast %26 : vector<1x16x1xf32> to vector<3x16x128xf32>
    %42 = arith.mulf %40, %41 : vector<3x16x128xf32>
    %43 = vector.extract_strided_slice %31 {offsets = [0, 2, 0], sizes = [3, 1, 128], strides = [1, 1, 1]} : vector<3x3x128xf32> to vector<3x1x128xf32>
    %44 = vector.shape_cast %43 : vector<3x1x128xf32> to vector<3x128xf32>
    %45 = vector.shape_cast %44 : vector<3x128xf32> to vector<3x1x128xf32>
    %46 = vector.broadcast %45 : vector<3x1x128xf32> to vector<3x16x128xf32>
    %47 = vector.broadcast %30 : vector<1x16x1xf32> to vector<3x16x128xf32>
    %48 = arith.mulf %46, %47 : vector<3x16x128xf32>
    %49 = vector.extract_strided_slice %35 {offsets = [0, 0, 0], sizes = [8, 16, 128], strides = [1, 1, 1]} : vector<10x16x128xf32> to vector<8x16x128xf32>
    %50 = vector.extract_strided_slice %42 {offsets = [0, 0, 0], sizes = [1, 16, 128], strides = [1, 1, 1]} : vector<3x16x128xf32> to vector<1x16x128xf32>
    %51 = vector.shape_cast %50 : vector<1x16x128xf32> to vector<16x128xf32>
    %52 = vector.shape_cast %51 : vector<16x128xf32> to vector<1x16x128xf32>
    %53 = vector.broadcast %52 : vector<1x16x128xf32> to vector<8x16x128xf32>
    %54 = arith.mulf %49, %53 : vector<8x16x128xf32>
    %55 = vector.extract_strided_slice %34 {offsets = [0, 0, 0], sizes = [8, 16, 128], strides = [1, 1, 1]} : vector<10x16x128xf32> to vector<8x16x128xf32>
    %56 = vector.extract_strided_slice %31 {offsets = [0, 1, 0], sizes = [1, 1, 128], strides = [1, 1, 1]} : vector<3x3x128xf32> to vector<1x1x128xf32>
    %57 = vector.shape_cast %56 : vector<1x1x128xf32> to vector<128xf32>
    %58 = vector.shape_cast %57 : vector<128xf32> to vector<1x1x128xf32>
    %59 = vector.broadcast %58 : vector<1x1x128xf32> to vector<8x16x128xf32>
    %60 = arith.mulf %55, %59 : vector<8x16x128xf32>
    %61 = arith.addf %54, %60 : vector<8x16x128xf32>
    %62 = vector.extract_strided_slice %36 {offsets = [0, 0, 0], sizes = [8, 16, 128], strides = [1, 1, 1]} : vector<10x16x128xf32> to vector<8x16x128xf32>
    %63 = vector.extract_strided_slice %48 {offsets = [0, 0, 0], sizes = [1, 16, 128], strides = [1, 1, 1]} : vector<3x16x128xf32> to vector<1x16x128xf32>
    %64 = vector.shape_cast %63 : vector<1x16x128xf32> to vector<16x128xf32>
    %65 = vector.shape_cast %64 : vector<16x128xf32> to vector<1x16x128xf32>
    %66 = vector.broadcast %65 : vector<1x16x128xf32> to vector<8x16x128xf32>
    %67 = arith.mulf %62, %66 : vector<8x16x128xf32>
    %68 = arith.addf %61, %67 : vector<8x16x128xf32>
    %69 = vector.extract_strided_slice %35 {offsets = [1, 0, 0], sizes = [8, 16, 128], strides = [1, 1, 1]} : vector<10x16x128xf32> to vector<8x16x128xf32>
    %70 = vector.extract_strided_slice %42 {offsets = [1, 0, 0], sizes = [1, 16, 128], strides = [1, 1, 1]} : vector<3x16x128xf32> to vector<1x16x128xf32>
    %71 = vector.shape_cast %70 : vector<1x16x128xf32> to vector<16x128xf32>
    %72 = vector.shape_cast %71 : vector<16x128xf32> to vector<1x16x128xf32>
    %73 = vector.broadcast %72 : vector<1x16x128xf32> to vector<8x16x128xf32>
    %74 = arith.mulf %69, %73 : vector<8x16x128xf32>
    %75 = vector.extract_strided_slice %34 {offsets = [1, 0, 0], sizes = [8, 16, 128], strides = [1, 1, 1]} : vector<10x16x128xf32> to vector<8x16x128xf32>
    %76 = vector.extract_strided_slice %31 {offsets = [1, 1, 0], sizes = [1, 1, 128], strides = [1, 1, 1]} : vector<3x3x128xf32> to vector<1x1x128xf32>
    %77 = vector.shape_cast %76 : vector<1x1x128xf32> to vector<128xf32>
    %78 = vector.shape_cast %77 : vector<128xf32> to vector<1x1x128xf32>
    %79 = vector.broadcast %78 : vector<1x1x128xf32> to vector<8x16x128xf32>
    %80 = arith.mulf %75, %79 : vector<8x16x128xf32>
    %81 = arith.addf %74, %80 : vector<8x16x128xf32>
    %82 = vector.extract_strided_slice %36 {offsets = [1, 0, 0], sizes = [8, 16, 128], strides = [1, 1, 1]} : vector<10x16x128xf32> to vector<8x16x128xf32>
    %83 = vector.extract_strided_slice %48 {offsets = [1, 0, 0], sizes = [1, 16, 128], strides = [1, 1, 1]} : vector<3x16x128xf32> to vector<1x16x128xf32>
    %84 = vector.shape_cast %83 : vector<1x16x128xf32> to vector<16x128xf32>
    %85 = vector.shape_cast %84 : vector<16x128xf32> to vector<1x16x128xf32>
    %86 = vector.broadcast %85 : vector<1x16x128xf32> to vector<8x16x128xf32>
    %87 = arith.mulf %82, %86 : vector<8x16x128xf32>
    %88 = arith.addf %81, %87 : vector<8x16x128xf32>
    %89 = arith.addf %68, %88 : vector<8x16x128xf32>
    %90 = vector.extract_strided_slice %35 {offsets = [2, 0, 0], sizes = [8, 16, 128], strides = [1, 1, 1]} : vector<10x16x128xf32> to vector<8x16x128xf32>
    %91 = vector.extract_strided_slice %42 {offsets = [2, 0, 0], sizes = [1, 16, 128], strides = [1, 1, 1]} : vector<3x16x128xf32> to vector<1x16x128xf32>
    %92 = vector.shape_cast %91 : vector<1x16x128xf32> to vector<16x128xf32>
    %93 = vector.shape_cast %92 : vector<16x128xf32> to vector<1x16x128xf32>
    %94 = vector.broadcast %93 : vector<1x16x128xf32> to vector<8x16x128xf32>
    %95 = arith.mulf %90, %94 : vector<8x16x128xf32>
    %96 = vector.extract_strided_slice %34 {offsets = [2, 0, 0], sizes = [8, 16, 128], strides = [1, 1, 1]} : vector<10x16x128xf32> to vector<8x16x128xf32>
    %97 = vector.extract_strided_slice %31 {offsets = [2, 1, 0], sizes = [1, 1, 128], strides = [1, 1, 1]} : vector<3x3x128xf32> to vector<1x1x128xf32>
    %98 = vector.shape_cast %97 : vector<1x1x128xf32> to vector<128xf32>
    %99 = vector.shape_cast %98 : vector<128xf32> to vector<1x1x128xf32>
    %100 = vector.broadcast %99 : vector<1x1x128xf32> to vector<8x16x128xf32>
    %101 = arith.mulf %96, %100 : vector<8x16x128xf32>
    %102 = arith.addf %95, %101 : vector<8x16x128xf32>
    %103 = vector.extract_strided_slice %36 {offsets = [2, 0, 0], sizes = [8, 16, 128], strides = [1, 1, 1]} : vector<10x16x128xf32> to vector<8x16x128xf32>
    %104 = vector.extract_strided_slice %48 {offsets = [2, 0, 0], sizes = [1, 16, 128], strides = [1, 1, 1]} : vector<3x16x128xf32> to vector<1x16x128xf32>
    %105 = vector.shape_cast %104 : vector<1x16x128xf32> to vector<16x128xf32>
    %106 = vector.shape_cast %105 : vector<16x128xf32> to vector<1x16x128xf32>
    %107 = vector.broadcast %106 : vector<1x16x128xf32> to vector<8x16x128xf32>
    %108 = arith.mulf %103, %107 : vector<8x16x128xf32>
    %109 = arith.addf %102, %108 : vector<8x16x128xf32>
    %110 = arith.addf %89, %109 : vector<8x16x128xf32>
    %c0_18 = arith.constant 0 : index
    %c0_19 = arith.constant 0 : index
    %c0_20 = arith.constant 0 : index
    %111 = vector.load %arg7[%c0_18, %c0_19, %c0_20] : memref<3x3x128xf32, #tpu.memory_space<vmem>>, vector<3x3x128xf32>
    %c1_i32_21 = arith.constant 1 : i32
    %112 = tpu.dynamic_rotate %21 by %c1_i32_21 dim 0 : vector<160x128xf32>, i32 -> vector<160x128xf32>
    %c159_i32_22 = arith.constant 159 : i32
    %113 = tpu.dynamic_rotate %21 by %c159_i32_22 dim 0 : vector<160x128xf32>, i32 -> vector<160x128xf32>
    %114 = vector.shape_cast %21 : vector<160x128xf32> to vector<10x16x128xf32>
    %115 = vector.shape_cast %112 : vector<160x128xf32> to vector<10x16x128xf32>
    %116 = vector.shape_cast %113 : vector<160x128xf32> to vector<10x16x128xf32>
    %117 = vector.extract_strided_slice %111 {offsets = [0, 0, 0], sizes = [3, 1, 128], strides = [1, 1, 1]} : vector<3x3x128xf32> to vector<3x1x128xf32>
    %118 = vector.shape_cast %117 : vector<3x1x128xf32> to vector<3x128xf32>
    %119 = vector.shape_cast %118 : vector<3x128xf32> to vector<3x1x128xf32>
    %120 = vector.broadcast %119 : vector<3x1x128xf32> to vector<3x16x128xf32>
    %121 = vector.broadcast %26 : vector<1x16x1xf32> to vector<3x16x128xf32>
    %122 = arith.mulf %120, %121 : vector<3x16x128xf32>
    %123 = vector.extract_strided_slice %111 {offsets = [0, 2, 0], sizes = [3, 1, 128], strides = [1, 1, 1]} : vector<3x3x128xf32> to vector<3x1x128xf32>
    %124 = vector.shape_cast %123 : vector<3x1x128xf32> to vector<3x128xf32>
    %125 = vector.shape_cast %124 : vector<3x128xf32> to vector<3x1x128xf32>
    %126 = vector.broadcast %125 : vector<3x1x128xf32> to vector<3x16x128xf32>
    %127 = vector.broadcast %30 : vector<1x16x1xf32> to vector<3x16x128xf32>
    %128 = arith.mulf %126, %127 : vector<3x16x128xf32>
    %129 = vector.extract_strided_slice %115 {offsets = [0, 0, 0], sizes = [8, 16, 128], strides = [1, 1, 1]} : vector<10x16x128xf32> to vector<8x16x128xf32>
    %130 = vector.extract_strided_slice %122 {offsets = [0, 0, 0], sizes = [1, 16, 128], strides = [1, 1, 1]} : vector<3x16x128xf32> to vector<1x16x128xf32>
    %131 = vector.shape_cast %130 : vector<1x16x128xf32> to vector<16x128xf32>
    %132 = vector.shape_cast %131 : vector<16x128xf32> to vector<1x16x128xf32>
    %133 = vector.broadcast %132 : vector<1x16x128xf32> to vector<8x16x128xf32>
    %134 = arith.mulf %129, %133 : vector<8x16x128xf32>
    %135 = vector.extract_strided_slice %114 {offsets = [0, 0, 0], sizes = [8, 16, 128], strides = [1, 1, 1]} : vector<10x16x128xf32> to vector<8x16x128xf32>
    %136 = vector.extract_strided_slice %111 {offsets = [0, 1, 0], sizes = [1, 1, 128], strides = [1, 1, 1]} : vector<3x3x128xf32> to vector<1x1x128xf32>
    %137 = vector.shape_cast %136 : vector<1x1x128xf32> to vector<128xf32>
    %138 = vector.shape_cast %137 : vector<128xf32> to vector<1x1x128xf32>
    %139 = vector.broadcast %138 : vector<1x1x128xf32> to vector<8x16x128xf32>
    %140 = arith.mulf %135, %139 : vector<8x16x128xf32>
    %141 = arith.addf %134, %140 : vector<8x16x128xf32>
    %142 = vector.extract_strided_slice %116 {offsets = [0, 0, 0], sizes = [8, 16, 128], strides = [1, 1, 1]} : vector<10x16x128xf32> to vector<8x16x128xf32>
    %143 = vector.extract_strided_slice %128 {offsets = [0, 0, 0], sizes = [1, 16, 128], strides = [1, 1, 1]} : vector<3x16x128xf32> to vector<1x16x128xf32>
    %144 = vector.shape_cast %143 : vector<1x16x128xf32> to vector<16x128xf32>
    %145 = vector.shape_cast %144 : vector<16x128xf32> to vector<1x16x128xf32>
    %146 = vector.broadcast %145 : vector<1x16x128xf32> to vector<8x16x128xf32>
    %147 = arith.mulf %142, %146 : vector<8x16x128xf32>
    %148 = arith.addf %141, %147 : vector<8x16x128xf32>
    %149 = vector.extract_strided_slice %115 {offsets = [1, 0, 0], sizes = [8, 16, 128], strides = [1, 1, 1]} : vector<10x16x128xf32> to vector<8x16x128xf32>
    %150 = vector.extract_strided_slice %122 {offsets = [1, 0, 0], sizes = [1, 16, 128], strides = [1, 1, 1]} : vector<3x16x128xf32> to vector<1x16x128xf32>
    %151 = vector.shape_cast %150 : vector<1x16x128xf32> to vector<16x128xf32>
    %152 = vector.shape_cast %151 : vector<16x128xf32> to vector<1x16x128xf32>
    %153 = vector.broadcast %152 : vector<1x16x128xf32> to vector<8x16x128xf32>
    %154 = arith.mulf %149, %153 : vector<8x16x128xf32>
    %155 = vector.extract_strided_slice %114 {offsets = [1, 0, 0], sizes = [8, 16, 128], strides = [1, 1, 1]} : vector<10x16x128xf32> to vector<8x16x128xf32>
    %156 = vector.extract_strided_slice %111 {offsets = [1, 1, 0], sizes = [1, 1, 128], strides = [1, 1, 1]} : vector<3x3x128xf32> to vector<1x1x128xf32>
    %157 = vector.shape_cast %156 : vector<1x1x128xf32> to vector<128xf32>
    %158 = vector.shape_cast %157 : vector<128xf32> to vector<1x1x128xf32>
    %159 = vector.broadcast %158 : vector<1x1x128xf32> to vector<8x16x128xf32>
    %160 = arith.mulf %155, %159 : vector<8x16x128xf32>
    %161 = arith.addf %154, %160 : vector<8x16x128xf32>
    %162 = vector.extract_strided_slice %116 {offsets = [1, 0, 0], sizes = [8, 16, 128], strides = [1, 1, 1]} : vector<10x16x128xf32> to vector<8x16x128xf32>
    %163 = vector.extract_strided_slice %128 {offsets = [1, 0, 0], sizes = [1, 16, 128], strides = [1, 1, 1]} : vector<3x16x128xf32> to vector<1x16x128xf32>
    %164 = vector.shape_cast %163 : vector<1x16x128xf32> to vector<16x128xf32>
    %165 = vector.shape_cast %164 : vector<16x128xf32> to vector<1x16x128xf32>
    %166 = vector.broadcast %165 : vector<1x16x128xf32> to vector<8x16x128xf32>
    %167 = arith.mulf %162, %166 : vector<8x16x128xf32>
    %168 = arith.addf %161, %167 : vector<8x16x128xf32>
    %169 = arith.addf %148, %168 : vector<8x16x128xf32>
    %170 = vector.extract_strided_slice %115 {offsets = [2, 0, 0], sizes = [8, 16, 128], strides = [1, 1, 1]} : vector<10x16x128xf32> to vector<8x16x128xf32>
    %171 = vector.extract_strided_slice %122 {offsets = [2, 0, 0], sizes = [1, 16, 128], strides = [1, 1, 1]} : vector<3x16x128xf32> to vector<1x16x128xf32>
    %172 = vector.shape_cast %171 : vector<1x16x128xf32> to vector<16x128xf32>
    %173 = vector.shape_cast %172 : vector<16x128xf32> to vector<1x16x128xf32>
    %174 = vector.broadcast %173 : vector<1x16x128xf32> to vector<8x16x128xf32>
    %175 = arith.mulf %170, %174 : vector<8x16x128xf32>
    %176 = vector.extract_strided_slice %114 {offsets = [2, 0, 0], sizes = [8, 16, 128], strides = [1, 1, 1]} : vector<10x16x128xf32> to vector<8x16x128xf32>
    %177 = vector.extract_strided_slice %111 {offsets = [2, 1, 0], sizes = [1, 1, 128], strides = [1, 1, 1]} : vector<3x3x128xf32> to vector<1x1x128xf32>
    %178 = vector.shape_cast %177 : vector<1x1x128xf32> to vector<128xf32>
    %179 = vector.shape_cast %178 : vector<128xf32> to vector<1x1x128xf32>
    %180 = vector.broadcast %179 : vector<1x1x128xf32> to vector<8x16x128xf32>
    %181 = arith.mulf %176, %180 : vector<8x16x128xf32>
    %182 = arith.addf %175, %181 : vector<8x16x128xf32>
    %183 = vector.extract_strided_slice %116 {offsets = [2, 0, 0], sizes = [8, 16, 128], strides = [1, 1, 1]} : vector<10x16x128xf32> to vector<8x16x128xf32>
    %184 = vector.extract_strided_slice %128 {offsets = [2, 0, 0], sizes = [1, 16, 128], strides = [1, 1, 1]} : vector<3x16x128xf32> to vector<1x16x128xf32>
    %185 = vector.shape_cast %184 : vector<1x16x128xf32> to vector<16x128xf32>
    %186 = vector.shape_cast %185 : vector<16x128xf32> to vector<1x16x128xf32>
    %187 = vector.broadcast %186 : vector<1x16x128xf32> to vector<8x16x128xf32>
    %188 = arith.mulf %183, %187 : vector<8x16x128xf32>
    %189 = arith.addf %182, %188 : vector<8x16x128xf32>
    %190 = arith.addf %169, %189 : vector<8x16x128xf32>
    %cst_23 = arith.constant 0.707106769 : f32
    %191 = vector.broadcast %cst_23 : f32 to vector<8x16x128xf32>
    %192 = arith.mulf %110, %191 : vector<8x16x128xf32>
    %193 = math.erf %192 : vector<8x16x128xf32>
    %cst_24 = arith.constant 1.000000e+00 : f32
    %194 = vector.broadcast %cst_24 : f32 to vector<8x16x128xf32>
    %195 = arith.addf %194, %193 : vector<8x16x128xf32>
    %196 = arith.mulf %110, %195 : vector<8x16x128xf32>
    %197 = arith.mulf %196, %190 : vector<8x16x128xf32>
    %198 = vector.shape_cast %197 : vector<8x16x128xf32> to vector<128x128xf32>
    %c0_25 = arith.constant 0 : index
    %c0_26 = arith.constant 0 : index
    %199 = vector.load %arg8[%c0_25, %c0_26] : memref<128x128xf32, #tpu.memory_space<vmem>>, vector<128x128xf32>
    %cst_27 = arith.constant dense<0.000000e+00> : vector<128x128xf32>
    %200 = tpu.matmul %198, %199, %cst_27 {dimension_numbers = #tpu.dot_dimension_numbers<[1], [0], [0], [1], [0, 0, 1, 1], [], []>} : vector<128x128xf32>, vector<128x128xf32>, vector<128x128xf32> -> vector<128x128xf32>
    %201 = vector.shape_cast %200 : vector<128x128xf32> to vector<8x16x128xf32>
    %c0_28 = arith.constant 0 : index
    %c0_29 = arith.constant 0 : index
    %c0_30 = arith.constant 0 : index
    %c0_31 = arith.constant 0 : index
    %202 = vector.load %arg9[%c0_28, %c0_29, %c0_30, %c0_31] : memref<1x8x16x128xf32, #tpu.memory_space<vmem>>, vector<1x8x16x128xf32>
    %203 = vector.shape_cast %202 : vector<1x8x16x128xf32> to vector<8x16x128xf32>
    %204 = vector.shape_cast %201 : vector<8x16x128xf32> to vector<1x8x16x128xf32>
    tpu.vector_store %arg9[%c0_28, %c0_29, %c0_30, %c0_31], %204 {strides = array<i32>} : memref<1x8x16x128xf32, #tpu.memory_space<vmem>>, vector<1x8x16x128xf32>,
    return
  }
  func.func @transform_0(%arg0: i32, %arg1: i32) -> (i32, i32, i32, i32) {
    %c0_i32 = arith.constant 0 : i32
    %c0_i32_0 = arith.constant 0 : i32
    %c0_i32_1 = arith.constant 0 : i32
    return %arg0, %arg1, %c0_i32, %c0_i32_0 : i32, i32, i32, i32
  }
  func.func @transform_1(%arg0: i32, %arg1: i32) -> (i32, i32, i32, i32) {
    %c8_i32 = arith.constant 8 : i32
    %0 = arith.muli %arg1, %c8_i32 : i32
    %c1_i32 = arith.constant 1 : i32
    %1 = arith.subi %0, %c1_i32 : i32
    %c0_i32 = arith.constant 0 : i32
    %2 = arith.maxsi %1, %c0_i32 : i32
    %c0_i32_0 = arith.constant 0 : i32
    %c0_i32_1 = arith.constant 0 : i32
    %c0_i32_2 = arith.constant 0 : i32
    return %arg0, %2, %c0_i32_0, %c0_i32_1 : i32, i32, i32, i32
  }
  func.func @transform_2(%arg0: i32, %arg1: i32) -> (i32, i32, i32, i32) {
    %c1_i32 = arith.constant 1 : i32
    %0 = arith.addi %arg1, %c1_i32 : i32
    %c8_i32 = arith.constant 8 : i32
    %1 = arith.muli %0, %c8_i32 : i32
    %c15_i32 = arith.constant 15 : i32
    %2 = arith.minsi %1, %c15_i32 : i32
    %c0_i32 = arith.constant 0 : i32
    %c0_i32_0 = arith.constant 0 : i32
    %c0_i32_1 = arith.constant 0 : i32
    return %arg0, %2, %c0_i32, %c0_i32_0 : i32, i32, i32, i32
  }
  func.func @transform_3(%arg0: i32, %arg1: i32) -> (i32, i32) {
    %c0_i32 = arith.constant 0 : i32
    %c0_i32_0 = arith.constant 0 : i32
    %c0_i32_1 = arith.constant 0 : i32
    return %c0_i32, %c0_i32_0 : i32, i32
  }
  func.func @transform_4(%arg0: i32, %arg1: i32) -> (i32, i32, i32) {
    %c0_i32 = arith.constant 0 : i32
    %c0_i32_0 = arith.constant 0 : i32
    %c0_i32_1 = arith.constant 0 : i32
    %c0_i32_2 = arith.constant 0 : i32
    return %c0_i32, %c0_i32_0, %c0_i32_1 : i32, i32, i32
  }
  func.func @transform_5(%arg0: i32, %arg1: i32) -> (i32, i32, i32) {
    %c0_i32 = arith.constant 0 : i32
    %c0_i32_0 = arith.constant 0 : i32
    %c0_i32_1 = arith.constant 0 : i32
    %c0_i32_2 = arith.constant 0 : i32
    return %c0_i32, %c0_i32_0, %c0_i32_1 : i32, i32, i32
  }
  func.func @transform_6(%arg0: i32, %arg1: i32) -> (i32, i32) {
    %c0_i32 = arith.constant 0 : i32
    %c0_i32_0 = arith.constant 0 : i32
    %c0_i32_1 = arith.constant 0 : i32
    return %c0_i32, %c0_i32_0 : i32, i32
  }
  func.func @transform_7(%arg0: i32, %arg1: i32) -> (i32, i32, i32, i32) {
    %c0_i32 = arith.constant 0 : i32
    %c0_i32_0 = arith.constant 0 : i32
    %c0_i32_1 = arith.constant 0 : i32
    return %arg0, %arg1, %c0_i32, %c0_i32_0 : i32, i32, i32, i32
  }
}

module attributes {stable_mosaic.version = 11 : i64} {
  func.func @feedforward_kernel(%arg0: i32, %arg1: i32, %arg2: memref<1x8x16x128xf32, #tpu.memory_space<vmem>>, %arg3: memref<1x1x16x128xf32, #tpu.memory_space<vmem>>, %arg4: memref<1x1x16x128xf32, #tpu.memory_space<vmem>>, %arg5: memref<128x256xf32, #tpu.memory_space<vmem>>, %arg6: memref<3x3x128xf32, #tpu.memory_space<vmem>>, %arg7: memref<3x3x128xf32, #tpu.memory_space<vmem>>, %arg8: memref<128x128xf32, #tpu.memory_space<vmem>>, %arg9: memref<1x8x16x128xf32, #tpu.memory_space<vmem>>) attributes {dimension_semantics = [#tpu.dimension_semantics<parallel>, #tpu.dimension_semantics<parallel>], iteration_bounds = array<i64: 2, 2>, scalar_prefetch = 0 : i64, scratch_operands = 0 : i64, tpu.core_type = #tpu.core_type<tc>, window_params = [{transform_indices = @transform_0, window_bounds = array<i64: 1, 8, 16, 128>}, {transform_indices = @transform_1, window_bounds = array<i64: 1, 1, 16, 128>}, {transform_indices = @transform_2, window_bounds = array<i64: 1, 1, 16, 128>}, {pipeline_mode = #tpu.pipeline_mode<synchronous>, transform_indices = @transform_3, window_bounds = array<i64: 128, 256>}, {pipeline_mode = #tpu.pipeline_mode<synchronous>, transform_indices = @transform_4, window_bounds = array<i64: 3, 3, 128>}, {pipeline_mode = #tpu.pipeline_mode<synchronous>, transform_indices = @transform_5, window_bounds = array<i64: 3, 3, 128>}, {pipeline_mode = #tpu.pipeline_mode<synchronous>, transform_indices = @transform_6, window_bounds = array<i64: 128, 128>}, {transform_indices = @transform_7, window_bounds = array<i64: 1, 8, 16, 128>}]} {
    %c0 = arith.constant 0 : index
    %c0_0 = arith.constant 0 : index
    %c0_1 = arith.constant 0 : index
    %c0_2 = arith.constant 0 : index
    %0 = vector.load %arg2[%c0, %c0_0, %c0_1, %c0_2] : memref<1x8x16x128xf32, #tpu.memory_space<vmem>>, vector<1x8x16x128xf32>
    %1 = vector.shape_cast %0 : vector<1x8x16x128xf32> to vector<8x16x128xf32>
    %c0_3 = arith.constant 0 : index
    %c0_4 = arith.constant 0 : index
    %c0_5 = arith.constant 0 : index
    %c0_6 = arith.constant 0 : index
    %2 = vector.load %arg3[%c0_3, %c0_4, %c0_5, %c0_6] : memref<1x1x16x128xf32, #tpu.memory_space<vmem>>, vector<1x1x16x128xf32>
    %3 = vector.shape_cast %2 : vector<1x1x16x128xf32> to vector<1x16x128xf32>
    %c0_i32 = arith.constant 0 : i32
    %4 = arith.cmpi sgt, %arg1, %c0_i32 : i32
    %5 = arith.extui %4 : i1 to i32
    %6 = arith.sitofp %5 : i32 to f32
    %7 = vector.broadcast %6 : f32 to vector<1x16x128xf32>
    %8 = arith.mulf %3, %7 : vector<1x16x128xf32>
    %c0_7 = arith.constant 0 : index
    %c0_8 = arith.constant 0 : index
    %c0_9 = arith.constant 0 : index
    %c0_10 = arith.constant 0 : index
    %9 = vector.load %arg4[%c0_7, %c0_8, %c0_9, %c0_10] : memref<1x1x16x128xf32, #tpu.memory_space<vmem>>, vector<1x1x16x128xf32>
    %10 = vector.shape_cast %9 : vector<1x1x16x128xf32> to vector<1x16x128xf32>
    %c1_i32 = arith.constant 1 : i32
    %11 = arith.cmpi slt, %arg1, %c1_i32 : i32
    %12 = arith.extui %11 : i1 to i32
    %13 = arith.sitofp %12 : i32 to f32
    %14 = vector.broadcast %13 : f32 to vector<1x16x128xf32>
    %15 = arith.mulf %10, %14 : vector<1x16x128xf32>
    %16 = tpu.concatenate %8, %1, %15 in 0 : vector<1x16x128xf32>, vector<8x16x128xf32>, vector<1x16x128xf32> -> vector<10x16x128xf32>
    %17 = vector.shape_cast %16 : vector<10x16x128xf32> to vector<160x128xf32>
    %c0_11 = arith.constant 0 : index
    %c0_12 = arith.constant 0 : index
    %18 = vector.load %arg5[%c0_11, %c0_12] : memref<128x256xf32, #tpu.memory_space<vmem>>, vector<128x256xf32>
    %cst = arith.constant dense<0.000000e+00> : vector<160x256xf32>
    %19 = tpu.matmul %17, %18, %cst {dimension_numbers = #tpu.dot_dimension_numbers<[1], [0], [0], [1], [0, 0, 1, 1], [], []>} : vector<160x128xf32>, vector<128x256xf32>, vector<160x256xf32> -> vector<160x256xf32>
    %20 = vector.extract_strided_slice %19 {offsets = [0, 0], sizes = [160, 128], strides = [1, 1]} : vector<160x256xf32> to vector<160x128xf32>
    %21 = vector.extract_strided_slice %19 {offsets = [0, 128], sizes = [160, 128], strides = [1, 1]} : vector<160x256xf32> to vector<160x128xf32>
    %22 = tpu.iota {dimensions = array<i32: 1>} : vector<1x16x1xi32>
    %c0_i32_13 = arith.constant 0 : i32
    %23 = vector.broadcast %c0_i32_13 : i32 to vector<1x16x1xi32>
    %24 = arith.cmpi sgt, %22, %23 : vector<1x16x1xi32>
    %25 = arith.extui %24 : vector<1x16x1xi1> to vector<1x16x1xi32>
    %26 = arith.sitofp %25 : vector<1x16x1xi32> to vector<1x16x1xf32>
    %c15_i32 = arith.constant 15 : i32
    %27 = vector.broadcast %c15_i32 : i32 to vector<1x16x1xi32>
    %28 = arith.cmpi slt, %22, %27 : vector<1x16x1xi32>
    %29 = arith.extui %28 : vector<1x16x1xi1> to vector<1x16x1xi32>
    %30 = arith.sitofp %29 : vector<1x16x1xi32> to vector<1x16x1xf32>
    %c0_14 = arith.constant 0 : index
    %c0_15 = arith.constant 0 : index
    %c0_16 = arith.constant 0 : index
    %31 = vector.load %arg6[%c0_14, %c0_15, %c0_16] : memref<3x3x128xf32, #tpu.memory_space<vmem>>, vector<3x3x128xf32>
    %c1_i32_17 = arith.constant 1 : i32
    %32 = tpu.dynamic_rotate %20 by %c1_i32_17 dim 0 : vector<160x128xf32>, i32 -> vector<160x128xf32>
    %c159_i32 = arith.constant 159 : i32
    %33 = tpu.dynamic_rotate %20 by %c159_i32 dim 0 : vector<160x128xf32>, i32 -> vector<160x128xf32>
    %34 = vector.shape_cast %20 : vector<160x128xf32> to vector<10x16x128xf32>
    %35 = vector.shape_cast %32 : vector<160x128xf32> to vector<10x16x128xf32>
    %36 = vector.shape_cast %33 : vector<160x128xf32> to vector<10x16x128xf32>
    %37 = vector.extract_strided_slice %31 {offsets = [0, 0, 0], sizes = [3, 1, 128], strides = [1, 1, 1]} : vector<3x3x128xf32> to vector<3x1x128xf32>
    %38 = vector.shape_cast %37 : vector<3x1x128xf32> to vector<3x128xf32>
    %39 = vector.shape_cast %38 : vector<3x128xf32> to vector<3x1x128xf32>
    %40 = vector.broadcast %39 : vector<3x1x128xf32> to vector<3x16x128xf32>
    %41 = vector.broadcast %26 : vector<1x16x1xf32> to vector<3x16x128xf32>
    %42 = arith.mulf %40, %41 : vector<3x16x128xf32>
    %43 = vector.extract_strided_slice %31 {offsets = [0, 2, 0], sizes = [3, 1, 128], strides = [1, 1, 1]} : vector<3x3x128xf32> to vector<3x1x128xf32>
    %44 = vector.shape_cast %43 : vector<3x1x128xf32> to vector<3x128xf32>
    %45 = vector.shape_cast %44 : vector<3x128xf32> to vector<3x1x128xf32>
    %46 = vector.broadcast %45 : vector<3x1x128xf32> to vector<3x16x128xf32>
    %47 = vector.broadcast %30 : vector<1x16x1xf32> to vector<3x16x128xf32>
    %48 = arith.mulf %46, %47 : vector<3x16x128xf32>
    %49 = vector.extract_strided_slice %35 {offsets = [0, 0, 0], sizes = [8, 16, 128], strides = [1, 1, 1]} : vector<10x16x128xf32> to vector<8x16x128xf32>
    %50 = vector.extract_strided_slice %42 {offsets = [0, 0, 0], sizes = [1, 16, 128], strides = [1, 1, 1]} : vector<3x16x128xf32> to vector<1x16x128xf32>
    %51 = vector.shape_cast %50 : vector<1x16x128xf32> to vector<16x128xf32>
    %52 = vector.shape_cast %51 : vector<16x128xf32> to vector<1x16x128xf32>
    %53 = vector.broadcast %52 : vector<1x16x128xf32> to vector<8x16x128xf32>
    %54 = arith.mulf %49, %53 : vector<8x16x128xf32>
    %55 = vector.extract_strided_slice %34 {offsets = [0, 0, 0], sizes = [8, 16, 128], strides = [1, 1, 1]} : vector<10x16x128xf32> to vector<8x16x128xf32>
    %56 = vector.extract_strided_slice %31 {offsets = [0, 1, 0], sizes = [1, 1, 128], strides = [1, 1, 1]} : vector<3x3x128xf32> to vector<1x1x128xf32>
    %57 = vector.shape_cast %56 : vector<1x1x128xf32> to vector<128xf32>
    %58 = vector.shape_cast %57 : vector<128xf32> to vector<1x1x128xf32>
    %59 = vector.broadcast %58 : vector<1x1x128xf32> to vector<8x16x128xf32>
    %60 = arith.mulf %55, %59 : vector<8x16x128xf32>
    %61 = arith.addf %54, %60 : vector<8x16x128xf32>
    %62 = vector.extract_strided_slice %36 {offsets = [0, 0, 0], sizes = [8, 16, 128], strides = [1, 1, 1]} : vector<10x16x128xf32> to vector<8x16x128xf32>
    %63 = vector.extract_strided_slice %48 {offsets = [0, 0, 0], sizes = [1, 16, 128], strides = [1, 1, 1]} : vector<3x16x128xf32> to vector<1x16x128xf32>
    %64 = vector.shape_cast %63 : vector<1x16x128xf32> to vector<16x128xf32>
    %65 = vector.shape_cast %64 : vector<16x128xf32> to vector<1x16x128xf32>
    %66 = vector.broadcast %65 : vector<1x16x128xf32> to vector<8x16x128xf32>
    %67 = arith.mulf %62, %66 : vector<8x16x128xf32>
    %68 = arith.addf %61, %67 : vector<8x16x128xf32>
    %69 = vector.extract_strided_slice %35 {offsets = [1, 0, 0], sizes = [8, 16, 128], strides = [1, 1, 1]} : vector<10x16x128xf32> to vector<8x16x128xf32>
    %70 = vector.extract_strided_slice %42 {offsets = [1, 0, 0], sizes = [1, 16, 128], strides = [1, 1, 1]} : vector<3x16x128xf32> to vector<1x16x128xf32>
    %71 = vector.shape_cast %70 : vector<1x16x128xf32> to vector<16x128xf32>
    %72 = vector.shape_cast %71 : vector<16x128xf32> to vector<1x16x128xf32>
    %73 = vector.broadcast %72 : vector<1x16x128xf32> to vector<8x16x128xf32>
    %74 = arith.mulf %69, %73 : vector<8x16x128xf32>
    %75 = vector.extract_strided_slice %34 {offsets = [1, 0, 0], sizes = [8, 16, 128], strides = [1, 1, 1]} : vector<10x16x128xf32> to vector<8x16x128xf32>
    %76 = vector.extract_strided_slice %31 {offsets = [1, 1, 0], sizes = [1, 1, 128], strides = [1, 1, 1]} : vector<3x3x128xf32> to vector<1x1x128xf32>
    %77 = vector.shape_cast %76 : vector<1x1x128xf32> to vector<128xf32>
    %78 = vector.shape_cast %77 : vector<128xf32> to vector<1x1x128xf32>
    %79 = vector.broadcast %78 : vector<1x1x128xf32> to vector<8x16x128xf32>
    %80 = arith.mulf %75, %79 : vector<8x16x128xf32>
    %81 = arith.addf %74, %80 : vector<8x16x128xf32>
    %82 = vector.extract_strided_slice %36 {offsets = [1, 0, 0], sizes = [8, 16, 128], strides = [1, 1, 1]} : vector<10x16x128xf32> to vector<8x16x128xf32>
    %83 = vector.extract_strided_slice %48 {offsets = [1, 0, 0], sizes = [1, 16, 128], strides = [1, 1, 1]} : vector<3x16x128xf32> to vector<1x16x128xf32>
    %84 = vector.shape_cast %83 : vector<1x16x128xf32> to vector<16x128xf32>
    %85 = vector.shape_cast %84 : vector<16x128xf32> to vector<1x16x128xf32>
    %86 = vector.broadcast %85 : vector<1x16x128xf32> to vector<8x16x128xf32>
    %87 = arith.mulf %82, %86 : vector<8x16x128xf32>
    %88 = arith.addf %81, %87 : vector<8x16x128xf32>
    %89 = arith.addf %68, %88 : vector<8x16x128xf32>
    %90 = vector.extract_strided_slice %35 {offsets = [2, 0, 0], sizes = [8, 16, 128], strides = [1, 1, 1]} : vector<10x16x128xf32> to vector<8x16x128xf32>
    %91 = vector.extract_strided_slice %42 {offsets = [2, 0, 0], sizes = [1, 16, 128], strides = [1, 1, 1]} : vector<3x16x128xf32> to vector<1x16x128xf32>
    %92 = vector.shape_cast %91 : vector<1x16x128xf32> to vector<16x128xf32>
    %93 = vector.shape_cast %92 : vector<16x128xf32> to vector<1x16x128xf32>
    %94 = vector.broadcast %93 : vector<1x16x128xf32> to vector<8x16x128xf32>
    %95 = arith.mulf %90, %94 : vector<8x16x128xf32>
    %96 = vector.extract_strided_slice %34 {offsets = [2, 0, 0], sizes = [8, 16, 128], strides = [1, 1, 1]} : vector<10x16x128xf32> to vector<8x16x128xf32>
    %97 = vector.extract_strided_slice %31 {offsets = [2, 1, 0], sizes = [1, 1, 128], strides = [1, 1, 1]} : vector<3x3x128xf32> to vector<1x1x128xf32>
    %98 = vector.shape_cast %97 : vector<1x1x128xf32> to vector<128xf32>
    %99 = vector.shape_cast %98 : vector<128xf32> to vector<1x1x128xf32>
    %100 = vector.broadcast %99 : vector<1x1x128xf32> to vector<8x16x128xf32>
    %101 = arith.mulf %96, %100 : vector<8x16x128xf32>
    %102 = arith.addf %95, %101 : vector<8x16x128xf32>
    %103 = vector.extract_strided_slice %36 {offsets = [2, 0, 0], sizes = [8, 16, 128], strides = [1, 1, 1]} : vector<10x16x128xf32> to vector<8x16x128xf32>
    %104 = vector.extract_strided_slice %48 {offsets = [2, 0, 0], sizes = [1, 16, 128], strides = [1, 1, 1]} : vector<3x16x128xf32> to vector<1x16x128xf32>
    %105 = vector.shape_cast %104 : vector<1x16x128xf32> to vector<16x128xf32>
    %106 = vector.shape_cast %105 : vector<16x128xf32> to vector<1x16x128xf32>
    %107 = vector.broadcast %106 : vector<1x16x128xf32> to vector<8x16x128xf32>
    %108 = arith.mulf %103, %107 : vector<8x16x128xf32>
    %109 = arith.addf %102, %108 : vector<8x16x128xf32>
    %110 = arith.addf %89, %109 : vector<8x16x128xf32>
    %c0_18 = arith.constant 0 : index
    %c0_19 = arith.constant 0 : index
    %c0_20 = arith.constant 0 : index
    %111 = vector.load %arg7[%c0_18, %c0_19, %c0_20] : memref<3x3x128xf32, #tpu.memory_space<vmem>>, vector<3x3x128xf32>
    %c1_i32_21 = arith.constant 1 : i32
    %112 = tpu.dynamic_rotate %21 by %c1_i32_21 dim 0 : vector<160x128xf32>, i32 -> vector<160x128xf32>
    %c159_i32_22 = arith.constant 159 : i32
    %113 = tpu.dynamic_rotate %21 by %c159_i32_22 dim 0 : vector<160x128xf32>, i32 -> vector<160x128xf32>
    %114 = vector.shape_cast %21 : vector<160x128xf32> to vector<10x16x128xf32>
    %115 = vector.shape_cast %112 : vector<160x128xf32> to vector<10x16x128xf32>
    %116 = vector.shape_cast %113 : vector<160x128xf32> to vector<10x16x128xf32>
    %117 = vector.extract_strided_slice %111 {offsets = [0, 0, 0], sizes = [3, 1, 128], strides = [1, 1, 1]} : vector<3x3x128xf32> to vector<3x1x128xf32>
    %118 = vector.shape_cast %117 : vector<3x1x128xf32> to vector<3x128xf32>
    %119 = vector.shape_cast %118 : vector<3x128xf32> to vector<3x1x128xf32>
    %120 = vector.broadcast %119 : vector<3x1x128xf32> to vector<3x16x128xf32>
    %121 = vector.broadcast %26 : vector<1x16x1xf32> to vector<3x16x128xf32>
    %122 = arith.mulf %120, %121 : vector<3x16x128xf32>
    %123 = vector.extract_strided_slice %111 {offsets = [0, 2, 0], sizes = [3, 1, 128], strides = [1, 1, 1]} : vector<3x3x128xf32> to vector<3x1x128xf32>
    %124 = vector.shape_cast %123 : vector<3x1x128xf32> to vector<3x128xf32>
    %125 = vector.shape_cast %124 : vector<3x128xf32> to vector<3x1x128xf32>
    %126 = vector.broadcast %125 : vector<3x1x128xf32> to vector<3x16x128xf32>
    %127 = vector.broadcast %30 : vector<1x16x1xf32> to vector<3x16x128xf32>
    %128 = arith.mulf %126, %127 : vector<3x16x128xf32>
    %129 = vector.extract_strided_slice %115 {offsets = [0, 0, 0], sizes = [8, 16, 128], strides = [1, 1, 1]} : vector<10x16x128xf32> to vector<8x16x128xf32>
    %130 = vector.extract_strided_slice %122 {offsets = [0, 0, 0], sizes = [1, 16, 128], strides = [1, 1, 1]} : vector<3x16x128xf32> to vector<1x16x128xf32>
    %131 = vector.shape_cast %130 : vector<1x16x128xf32> to vector<16x128xf32>
    %132 = vector.shape_cast %131 : vector<16x128xf32> to vector<1x16x128xf32>
    %133 = vector.broadcast %132 : vector<1x16x128xf32> to vector<8x16x128xf32>
    %134 = arith.mulf %129, %133 : vector<8x16x128xf32>
    %135 = vector.extract_strided_slice %114 {offsets = [0, 0, 0], sizes = [8, 16, 128], strides = [1, 1, 1]} : vector<10x16x128xf32> to vector<8x16x128xf32>
    %136 = vector.extract_strided_slice %111 {offsets = [0, 1, 0], sizes = [1, 1, 128], strides = [1, 1, 1]} : vector<3x3x128xf32> to vector<1x1x128xf32>
    %137 = vector.shape_cast %136 : vector<1x1x128xf32> to vector<128xf32>
    %138 = vector.shape_cast %137 : vector<128xf32> to vector<1x1x128xf32>
    %139 = vector.broadcast %138 : vector<1x1x128xf32> to vector<8x16x128xf32>
    %140 = arith.mulf %135, %139 : vector<8x16x128xf32>
    %141 = arith.addf %134, %140 : vector<8x16x128xf32>
    %142 = vector.extract_strided_slice %116 {offsets = [0, 0, 0], sizes = [8, 16, 128], strides = [1, 1, 1]} : vector<10x16x128xf32> to vector<8x16x128xf32>
    %143 = vector.extract_strided_slice %128 {offsets = [0, 0, 0], sizes = [1, 16, 128], strides = [1, 1, 1]} : vector<3x16x128xf32> to vector<1x16x128xf32>
    %144 = vector.shape_cast %143 : vector<1x16x128xf32> to vector<16x128xf32>
    %145 = vector.shape_cast %144 : vector<16x128xf32> to vector<1x16x128xf32>
    %146 = vector.broadcast %145 : vector<1x16x128xf32> to vector<8x16x128xf32>
    %147 = arith.mulf %142, %146 : vector<8x16x128xf32>
    %148 = arith.addf %141, %147 : vector<8x16x128xf32>
    %149 = vector.extract_strided_slice %115 {offsets = [1, 0, 0], sizes = [8, 16, 128], strides = [1, 1, 1]} : vector<10x16x128xf32> to vector<8x16x128xf32>
    %150 = vector.extract_strided_slice %122 {offsets = [1, 0, 0], sizes = [1, 16, 128], strides = [1, 1, 1]} : vector<3x16x128xf32> to vector<1x16x128xf32>
    %151 = vector.shape_cast %150 : vector<1x16x128xf32> to vector<16x128xf32>
    %152 = vector.shape_cast %151 : vector<16x128xf32> to vector<1x16x128xf32>
    %153 = vector.broadcast %152 : vector<1x16x128xf32> to vector<8x16x128xf32>
    %154 = arith.mulf %149, %153 : vector<8x16x128xf32>
    %155 = vector.extract_strided_slice %114 {offsets = [1, 0, 0], sizes = [8, 16, 128], strides = [1, 1, 1]} : vector<10x16x128xf32> to vector<8x16x128xf32>
    %156 = vector.extract_strided_slice %111 {offsets = [1, 1, 0], sizes = [1, 1, 128], strides = [1, 1, 1]} : vector<3x3x128xf32> to vector<1x1x128xf32>
    %157 = vector.shape_cast %156 : vector<1x1x128xf32> to vector<128xf32>
    %158 = vector.shape_cast %157 : vector<128xf32> to vector<1x1x128xf32>
    %159 = vector.broadcast %158 : vector<1x1x128xf32> to vector<8x16x128xf32>
    %160 = arith.mulf %155, %159 : vector<8x16x128xf32>
    %161 = arith.addf %154, %160 : vector<8x16x128xf32>
    %162 = vector.extract_strided_slice %116 {offsets = [1, 0, 0], sizes = [8, 16, 128], strides = [1, 1, 1]} : vector<10x16x128xf32> to vector<8x16x128xf32>
    %163 = vector.extract_strided_slice %128 {offsets = [1, 0, 0], sizes = [1, 16, 128], strides = [1, 1, 1]} : vector<3x16x128xf32> to vector<1x16x128xf32>
    %164 = vector.shape_cast %163 : vector<1x16x128xf32> to vector<16x128xf32>
    %165 = vector.shape_cast %164 : vector<16x128xf32> to vector<1x16x128xf32>
    %166 = vector.broadcast %165 : vector<1x16x128xf32> to vector<8x16x128xf32>
    %167 = arith.mulf %162, %166 : vector<8x16x128xf32>
    %168 = arith.addf %161, %167 : vector<8x16x128xf32>
    %169 = arith.addf %148, %168 : vector<8x16x128xf32>
    %170 = vector.extract_strided_slice %115 {offsets = [2, 0, 0], sizes = [8, 16, 128], strides = [1, 1, 1]} : vector<10x16x128xf32> to vector<8x16x128xf32>
    %171 = vector.extract_strided_slice %122 {offsets = [2, 0, 0], sizes = [1, 16, 128], strides = [1, 1, 1]} : vector<3x16x128xf32> to vector<1x16x128xf32>
    %172 = vector.shape_cast %171 : vector<1x16x128xf32> to vector<16x128xf32>
    %173 = vector.shape_cast %172 : vector<16x128xf32> to vector<1x16x128xf32>
    %174 = vector.broadcast %173 : vector<1x16x128xf32> to vector<8x16x128xf32>
    %175 = arith.mulf %170, %174 : vector<8x16x128xf32>
    %176 = vector.extract_strided_slice %114 {offsets = [2, 0, 0], sizes = [8, 16, 128], strides = [1, 1, 1]} : vector<10x16x128xf32> to vector<8x16x128xf32>
    %177 = vector.extract_strided_slice %111 {offsets = [2, 1, 0], sizes = [1, 1, 128], strides = [1, 1, 1]} : vector<3x3x128xf32> to vector<1x1x128xf32>
    %178 = vector.shape_cast %177 : vector<1x1x128xf32> to vector<128xf32>
    %179 = vector.shape_cast %178 : vector<128xf32> to vector<1x1x128xf32>
    %180 = vector.broadcast %179 : vector<1x1x128xf32> to vector<8x16x128xf32>
    %181 = arith.mulf %176, %180 : vector<8x16x128xf32>
    %182 = arith.addf %175, %181 : vector<8x16x128xf32>
    %183 = vector.extract_strided_slice %116 {offsets = [2, 0, 0], sizes = [8, 16, 128], strides = [1, 1, 1]} : vector<10x16x128xf32> to vector<8x16x128xf32>
    %184 = vector.extract_strided_slice %128 {offsets = [2, 0, 0], sizes = [1, 16, 128], strides = [1, 1, 1]} : vector<3x16x128xf32> to vector<1x16x128xf32>
    %185 = vector.shape_cast %184 : vector<1x16x128xf32> to vector<16x128xf32>
    %186 = vector.shape_cast %185 : vector<16x128xf32> to vector<1x16x128xf32>
    %187 = vector.broadcast %186 : vector<1x16x128xf32> to vector<8x16x128xf32>
    %188 = arith.mulf %183, %187 : vector<8x16x128xf32>
    %189 = arith.addf %182, %188 : vector<8x16x128xf32>
    %190 = arith.addf %169, %189 : vector<8x16x128xf32>
    %cst_23 = arith.constant 0.707106769 : f32
    %191 = vector.broadcast %cst_23 : f32 to vector<8x16x128xf32>
    %192 = arith.mulf %110, %191 : vector<8x16x128xf32>
    %193 = math.erf %192 : vector<8x16x128xf32>
    %cst_24 = arith.constant 1.000000e+00 : f32
    %194 = vector.broadcast %cst_24 : f32 to vector<8x16x128xf32>
    %195 = arith.addf %194, %193 : vector<8x16x128xf32>
    %196 = arith.mulf %110, %195 : vector<8x16x128xf32>
    %197 = arith.mulf %196, %190 : vector<8x16x128xf32>
    %198 = vector.shape_cast %197 : vector<8x16x128xf32> to vector<128x128xf32>
    %c0_25 = arith.constant 0 : index
    %c0_26 = arith.constant 0 : index
    %199 = vector.load %arg8[%c0_25, %c0_26] : memref<128x128xf32, #tpu.memory_space<vmem>>, vector<128x128xf32>
    %cst_27 = arith.constant dense<0.000000e+00> : vector<128x128xf32>
    %200 = tpu.matmul %198, %199, %cst_27 {dimension_numbers = #tpu.dot_dimension_numbers<[1], [0], [0], [1], [0, 0, 1, 1], [], []>} : vector<128x128xf32>, vector<128x128xf32>, vector<128x128xf32> -> vector<128x128xf32>
    %201 = vector.shape_cast %200 : vector<128x128xf32> to vector<8x16x128xf32>
    %c0_28 = arith.constant 0 : index
    %c0_29 = arith.constant 0 : index
    %c0_30 = arith.constant 0 : index
    %c0_31 = arith.constant 0 : index
    %202 = vector.load %arg9[%c0_28, %c0_29, %c0_30, %c0_31] : memref<1x8x16x128xf32, #tpu.memory_space<vmem>>, vector<1x8x16x128xf32>
    %203 = vector.shape_cast %202 : vector<1x8x16x128xf32> to vector<8x16x128xf32>
    %204 = vector.shape_cast %201 : vector<8x16x128xf32> to vector<1x8x16x128xf32>
    tpu.vector_store %arg9[%c0_28, %c0_29, %c0_30, %c0_31], %204 {strides = array<i32>} : memref<1x8x16x128xf32, #tpu.memory_space<vmem>>, vector<1x8x16x128xf32>,
    return
  }
  func.func @transform_0(%arg0: i32, %arg1: i32) -> (i32, i32, i32, i32) {
    %c0_i32 = arith.constant 0 : i32
    %c0_i32_0 = arith.constant 0 : i32
    %c0_i32_1 = arith.constant 0 : i32
    return %arg0, %arg1, %c0_i32, %c0_i32_0 : i32, i32, i32, i32
  }
  func.func @transform_1(%arg0: i32, %arg1: i32) -> (i32, i32, i32, i32) {
    %c8_i32 = arith.constant 8 : i32
    %0 = arith.muli %arg1, %c8_i32 : i32
    %c1_i32 = arith.constant 1 : i32
    %1 = arith.subi %0, %c1_i32 : i32
    %c0_i32 = arith.constant 0 : i32
    %2 = arith.maxsi %1, %c0_i32 : i32
    %c0_i32_0 = arith.constant 0 : i32
    %c0_i32_1 = arith.constant 0 : i32
    %c0_i32_2 = arith.constant 0 : i32
    return %arg0, %2, %c0_i32_0, %c0_i32_1 : i32, i32, i32, i32
  }
  func.func @transform_2(%arg0: i32, %arg1: i32) -> (i32, i32, i32, i32) {
    %c1_i32 = arith.constant 1 : i32
    %0 = arith.addi %arg1, %c1_i32 : i32
    %c8_i32 = arith.constant 8 : i32
    %1 = arith.muli %0, %c8_i32 : i32
    %c15_i32 = arith.constant 15 : i32
    %2 = arith.minsi %1, %c15_i32 : i32
    %c0_i32 = arith.constant 0 : i32
    %c0_i32_0 = arith.constant 0 : i32
    %c0_i32_1 = arith.constant 0 : i32
    return %arg0, %2, %c0_i32, %c0_i32_0 : i32, i32, i32, i32
  }
  func.func @transform_3(%arg0: i32, %arg1: i32) -> (i32, i32) {
    %c0_i32 = arith.constant 0 : i32
    %c0_i32_0 = arith.constant 0 : i32
    %c0_i32_1 = arith.constant 0 : i32
    return %c0_i32, %c0_i32_0 : i32, i32
  }
  func.func @transform_4(%arg0: i32, %arg1: i32) -> (i32, i32, i32) {
    %c0_i32 = arith.constant 0 : i32
    %c0_i32_0 = arith.constant 0 : i32
    %c0_i32_1 = arith.constant 0 : i32
    %c0_i32_2 = arith.constant 0 : i32
    return %c0_i32, %c0_i32_0, %c0_i32_1 : i32, i32, i32
  }
  func.func @transform_5(%arg0: i32, %arg1: i32) -> (i32, i32, i32) {
    %c0_i32 = arith.constant 0 : i32
    %c0_i32_0 = arith.constant 0 : i32
    %c0_i32_1 = arith.constant 0 : i32
    %c0_i32_2 = arith.constant 0 : i32
    return %c0_i32, %c0_i32_0, %c0_i32_1 : i32, i32, i32
  }
  func.func @transform_6(%arg0: i32, %arg1: i32) -> (i32, i32) {
    %c0_i32 = arith.constant 0 : i32
    %c0_i32_0 = arith.constant 0 : i32
    %c0_i32_1 = arith.constant 0 : i32
    return %c0_i32, %c0_i32_0 : i32, i32
  }
  func.func @transform_7(%arg0: i32, %arg1: i32) -> (i32, i32, i32, i32) {
    %c0_i32 = arith.constant 0 : i32
    %c0_i32_0 = arith.constant 0 : i32
    %c0_i32_1 = arith.constant 0 : i32
    return %arg0, %arg1, %c0_i32, %c0_i32_0 : i32, i32, i32, i32
  }
}

</mosaic_0001>

<llo_original>
// kernel: tpu_custom_call.1
$region0: #{tpu_custom_call.1}
  #allocation0 [shape = 'u32[]', space=smem, size = 0x4, offset = 0x4, fixed_abs, tag = 'smem constant byte address 0x4 - core index']
  #allocation1 [shape = 'u32[144,128]{1,0:T(1,128)}', space=vmem, size = 0x12000, scoped, tag = 'internal scratch']
  %s0 = inlined_call_operand.hbm [shape: f32[2,16,16,128], index: 0, kind: input, shape index: {}]
  %s1 = inlined_call_operand.hbm [shape: f32[2,16,16,128], index: 1, kind: input, shape index: {}]
  %s2 = inlined_call_operand.hbm [shape: f32[2,16,16,128], index: 2, kind: input, shape index: {}]
  %s3 = inlined_call_operand.hbm [shape: f32[128,256], index: 3, kind: input, shape index: {}]
  %s4 = inlined_call_operand.hbm [shape: f32[3,3,128], index: 4, kind: input, shape index: {}]
  %s5 = inlined_call_operand.hbm [shape: f32[3,3,128], index: 5, kind: input, shape index: {}]
  %s6 = inlined_call_operand.hbm [shape: f32[128,128], index: 6, kind: input, shape index: {}]
  %s7 = inlined_call_operand.hbm [shape: f32[2,16,16,128], index: 7, kind: output, shape index: {}]
  %s8 = sld [smem:[#allocation0]]
  $region89: #{tpu_custom_call.1} parent=0
    _
  %s10 = ssub.s32 1, %s8
  %s11 = scalar_select 0, %s10, %s8
  $region1: #{tpu_custom_call.1} parent=0
    #allocation2 [shape = 'u8[131072]{0}', space=vmem, size = 0x20000, scoped, tag = 'input window, operand 0']
    #allocation3 [shape = 's32[2]{0}', space=sflag, size = 0x8, scoped, tag = 'scoped memory for tpu_custom_call.1']
    #allocation4 [shape = 's32[2]{0}', space=sflag, size = 0x8, scoped, tag = 'scoped memory for tpu_custom_call.1']
    #allocation5 [shape = 'u8[16384]{0}', space=vmem, size = 0x4000, scoped, tag = 'input window, operand 1']
    #allocation6 [shape = 's32[2]{0}', space=sflag, size = 0x8, scoped, tag = 'scoped memory for tpu_custom_call.1']
    #allocation7 [shape = 'u8[16384]{0}', space=vmem, size = 0x4000, scoped, tag = 'input window, operand 2']
    #allocation8 [shape = 'u8[131072]{0}', space=vmem, size = 0x20000, scoped, tag = 'input window, operand 3, single buffered']
    #allocation9 [shape = 's32[1]{0}', space=sflag, size = 0x4, scoped, tag = 'scoped memory for tpu_custom_call.1']
    #allocation10 [shape = 'u8[6144]{0}', space=vmem, size = 0x1800, scoped, tag = 'input window, operand 4, single buffered']
    #allocation11 [shape = 'u8[6144]{0}', space=vmem, size = 0x1800, scoped, tag = 'input window, operand 5, single buffered']
    #allocation12 [shape = 's32[1]{0}', space=sflag, size = 0x4, scoped, tag = 'scoped memory for tpu_custom_call.1']
    #allocation13 [shape = 'u8[65536]{0}', space=vmem, size = 0x10000, scoped, tag = 'input window, operand 6, single buffered']
    #allocation14 [shape = 'u8[131072]{0}', space=vmem, size = 0x20000, scoped, tag = 'output window, operand 0']
    %12 = vsyncpa [#allocation3], 0
    %s13 = scalar_lea.sflag [#allocation3], 1
    %14 = vsyncpa %s13, 0
    %15 = vsyncpa [#allocation6], 0
    %s16 = scalar_lea.sflag [#allocation6], 1
    %17 = vsyncpa %s16, 0
    %18 = vsyncpa [#allocation9], 0
    %19 = vsyncpa [#allocation12], 0
    %20 = vsyncpa [#allocation4], 0
    %s21 = scalar_lea.sflag [#allocation4], 1
    %22 = vsyncpa %s21, 0
    loop: start=0, step=1, limit=6
    $region2: #{tpu_custom_call.1} parent=1 // loop_pre_header
      _
    $region3: #{tpu_custom_call.1} parent=1 // loop_header
      %s24 = sphi 0, %s28
      %p25 = scmp.ge.s32.totalorder %s24, 6
      %s31 = sphi 0, %s43
      %s32 = sphi 0, %s39
      %s33 = sphi 0, %s31
      %s34 = sphi 0, %s32
      %s35 = sphi 0, %s33
      %s36 = sphi 0, %s34
      %s48 = sphi 0, %s50
      %s51 = sphi 0, %s48
      %s52 = sphi 0, %s51
      %s68 = sphi 0, %s52
      %s84 = sphi 0, %s86
      %s87 = sphi 0, %s84
      %s88 = sphi 0, %s87
      %s104 = sphi 0, %s88
      %s120 = sphi 0, %s122
      %s123 = sphi 0, %s120
      %s124 = sphi 0, %s123
      %s140 = sphi 0, %s124
      %s144 = sphi 0, %s144
      %s146 = sphi 0, %s144
      %s147 = sphi 0, %s146
      %s161 = sphi 0, %s147
      %s165 = sphi 0, %s165
      %s167 = sphi 0, %s165
      %s168 = sphi 0, %s167
      %s182 = sphi 0, %s168
      %s186 = sphi 0, %s186
      %s188 = sphi 0, %s186
      %s189 = sphi 0, %s188
      %s203 = sphi 0, %s189
      %s207 = sphi 0, %s207
      %s209 = sphi 0, %s207
      %s210 = sphi 0, %s209
      %s224 = sphi 0, %s210
      %s232 = sphi 0, %s234
      %s235 = sphi 0, %s232
      %s236 = sphi 0, %s235
      %s252 = sphi 0, %s236
    $region4: #{tpu_custom_call.1} parent=1 // loop_header_branch
      %27 = sbr.rel (%p25) target = $region8
    $region5: #{tpu_custom_call.1} parent=1 // loop_body
      %s29 = ssub.s32 %s24, 1
      %s30 = ssub.s32 %s24, 2
      %s37 = sadd.s32 1, %s32
      %p38 = scmp.ge.s32.totalorder %s37, 2
      %s39 = scalar_select %p38, 0, %s37
      %s40 = sadd.s32 1, %s31
      %s41 = scalar_select %p38, %s40, %s31
      %p42 = scmp.ge.s32.totalorder %s41, 2
      %s43 = scalar_select %p42, 0, %s41
      %s44 = ssub.s32 %s31, %s43
      %s45 = ssub.s32 %s32, %s39
      %s46 = sor.u32 %s44, %s45
      %p47 = scmp.eq.s32.totalorder %s46, 0
      %s49 = sadd.s32 %s48, 1
      %s50 = scalar_select %p47, %s48, %s49
      %p53 = pneg %p47
      %p54 = scmp.eq.s32.totalorder %s24, 3
      %p55 = por %p53, %p54
      %p56 = scmp.ne.s32.totalorder %s48, %s51
      %p57 = scmp.eq.s32.totalorder %s24, 0
      %p58 = por %p56, %p57
      %p59 = scmp.ne.s32.totalorder %s48, %s51
      %p60 = scmp.eq.s32.totalorder %s29, 3
      %p61 = por %p59, %p60
      %p62 = scmp.ne.s32.totalorder %s51, %s52
      %p63 = scmp.eq.s32.totalorder %s29, 0
      %p64 = por %p62, %p63
      %p65 = scmp.ne.s32.totalorder %s51, %s52
      %p66 = scmp.eq.s32.totalorder %s30, 3
      %p67 = por %p65, %p66
      %p69 = scmp.ne.s32.totalorder %s52, %s68
      %p70 = scmp.eq.s32.totalorder %s30, 0
      %p71 = por %p69, %p70
      %s72 = smul.u32 %s32, 8
      %s73 = ssub.s32 %s72, 1
      %p74 = scmp.gt.s32.totalorder %s73, 0
      %s75 = scalar_select %p74, %s73, 0
      %s76 = smul.u32 %s39, 8
      %s77 = ssub.s32 %s76, 1
      %p78 = scmp.gt.s32.totalorder %s77, 0
      %s79 = scalar_select %p78, %s77, 0
      %s80 = ssub.s32 %s31, %s43
      %s81 = ssub.s32 %s75, %s79
      %s82 = sor.u32 %s80, %s81
      %p83 = scmp.eq.s32.totalorder %s82, 0
      %s85 = sadd.s32 %s84, 1
      %s86 = scalar_select %p83, %s84, %s85
      %p89 = pneg %p83
      %p90 = scmp.eq.s32.totalorder %s24, 3
      %p91 = por %p89, %p90
      %p92 = scmp.ne.s32.totalorder %s84, %s87
      %p93 = scmp.eq.s32.totalorder %s24, 0
      %p94 = por %p92, %p93
      %p95 = scmp.ne.s32.totalorder %s84, %s87
      %p96 = scmp.eq.s32.totalorder %s29, 3
      %p97 = por %p95, %p96
      %p98 = scmp.ne.s32.totalorder %s87, %s88
      %p99 = scmp.eq.s32.totalorder %s29, 0
      %p100 = por %p98, %p99
      %p101 = scmp.ne.s32.totalorder %s87, %s88
      %p102 = scmp.eq.s32.totalorder %s30, 3
      %p103 = por %p101, %p102
      %p105 = scmp.ne.s32.totalorder %s88, %s104
      %p106 = scmp.eq.s32.totalorder %s30, 0
      %p107 = por %p105, %p106
      %s108 = sadd.s32 %s32, 1
      %s109 = smul.u32 %s108, 8
      %p110 = scmp.lt.s32.totalorder %s109, 15
      %s111 = scalar_select %p110, %s109, 15
      %s112 = sadd.s32 %s39, 1
      %s113 = smul.u32 %s112, 8
      %p114 = scmp.lt.s32.totalorder %s113, 15
      %s115 = scalar_select %p114, %s113, 15
      %s116 = ssub.s32 %s31, %s43
      %s117 = ssub.s32 %s111, %s115
      %s118 = sor.u32 %s116, %s117
      %p119 = scmp.eq.s32.totalorder %s118, 0
      %s121 = sadd.s32 %s120, 1
      %s122 = scalar_select %p119, %s120, %s121
      %p125 = pneg %p119
      %p126 = scmp.eq.s32.totalorder %s24, 3
      %p127 = por %p125, %p126
      %p128 = scmp.ne.s32.totalorder %s120, %s123
      %p129 = scmp.eq.s32.totalorder %s24, 0
      %p130 = por %p128, %p129
      %p131 = scmp.ne.s32.totalorder %s120, %s123
      %p132 = scmp.eq.s32.totalorder %s29, 3
      %p133 = por %p131, %p132
      %p134 = scmp.ne.s32.totalorder %s123, %s124
      %p135 = scmp.eq.s32.totalorder %s29, 0
      %p136 = por %p134, %p135
      %p137 = scmp.ne.s32.totalorder %s123, %s124
      %p138 = scmp.eq.s32.totalorder %s30, 3
      %p139 = por %p137, %p138
      %p141 = scmp.ne.s32.totalorder %s124, %s140
      %p142 = scmp.eq.s32.totalorder %s30, 0
      %p143 = por %p141, %p142
      %s145 = sadd.s32 %s144, 1
      %p148 = scmp.eq.s32.totalorder %s24, 3
      %p149 = scmp.ne.s32.totalorder %s144, %s146
      %p150 = scmp.eq.s32.totalorder %s24, 0
      %p151 = por %p149, %p150
      %p152 = scmp.ne.s32.totalorder %s144, %s146
      %p153 = scmp.eq.s32.totalorder %s29, 3
      %p154 = por %p152, %p153
      %p155 = scmp.ne.s32.totalorder %s146, %s147
      %p156 = scmp.eq.s32.totalorder %s29, 0
      %p157 = por %p155, %p156
      %p158 = scmp.ne.s32.totalorder %s146, %s147
      %p159 = scmp.eq.s32.totalorder %s30, 3
      %p160 = por %p158, %p159
      %p162 = scmp.ne.s32.totalorder %s147, %s161
      %p163 = scmp.eq.s32.totalorder %s30, 0
      %p164 = por %p162, %p163
      %s166 = sadd.s32 %s165, 1
      %p169 = scmp.eq.s32.totalorder %s24, 3
      %p170 = scmp.ne.s32.totalorder %s165, %s167
      %p171 = scmp.eq.s32.totalorder %s24, 0
      %p172 = por %p170, %p171
      %p173 = scmp.ne.s32.totalorder %s165, %s167
      %p174 = scmp.eq.s32.totalorder %s29, 3
      %p175 = por %p173, %p174
      %p176 = scmp.ne.s32.totalorder %s167, %s168
      %p177 = scmp.eq.s32.totalorder %s29, 0
      %p178 = por %p176, %p177
      %p179 = scmp.ne.s32.totalorder %s167, %s168
      %p180 = scmp.eq.s32.totalorder %s30, 3
      %p181 = por %p179, %p180
      %p183 = scmp.ne.s32.totalorder %s168, %s182
      %p184 = scmp.eq.s32.totalorder %s30, 0
      %p185 = por %p183, %p184
      %s187 = sadd.s32 %s186, 1
      %p190 = scmp.eq.s32.totalorder %s24, 3
      %p191 = scmp.ne.s32.totalorder %s186, %s188
      %p192 = scmp.eq.s32.totalorder %s24, 0
      %p193 = por %p191, %p192
      %p194 = scmp.ne.s32.totalorder %s186, %s188
      %p195 = scmp.eq.s32.totalorder %s29, 3
      %p196 = por %p194, %p195
      %p197 = scmp.ne.s32.totalorder %s188, %s189
      %p198 = scmp.eq.s32.totalorder %s29, 0
      %p199 = por %p197, %p198
      %p200 = scmp.ne.s32.totalorder %s188, %s189
      %p201 = scmp.eq.s32.totalorder %s30, 3
      %p202 = por %p200, %p201
      %p204 = scmp.ne.s32.totalorder %s189, %s203
      %p205 = scmp.eq.s32.totalorder %s30, 0
      %p206 = por %p204, %p205
      %s208 = sadd.s32 %s207, 1
      %p211 = scmp.eq.s32.totalorder %s24, 3
      %p212 = scmp.ne.s32.totalorder %s207, %s209
      %p213 = scmp.eq.s32.totalorder %s24, 0
      %p214 = por %p212, %p213
      %p215 = scmp.ne.s32.totalorder %s207, %s209
      %p216 = scmp.eq.s32.totalorder %s29, 3
      %p217 = por %p215, %p216
      %p218 = scmp.ne.s32.totalorder %s209, %s210
      %p219 = scmp.eq.s32.totalorder %s29, 0
      %p220 = por %p218, %p219
      %p221 = scmp.ne.s32.totalorder %s209, %s210
      %p222 = scmp.eq.s32.totalorder %s30, 3
      %p223 = por %p221, %p222
      %p225 = scmp.ne.s32.totalorder %s210, %s224
      %p226 = scmp.eq.s32.totalorder %s30, 0
      %p227 = por %p225, %p226
      %s228 = ssub.s32 %s31, %s43
      %s229 = ssub.s32 %s32, %s39
      %s230 = sor.u32 %s228, %s229
      %p231 = scmp.eq.s32.totalorder %s230, 0
      %s233 = sadd.s32 %s232, 1
      %s234 = scalar_select %p231, %s232, %s233
      %p237 = pneg %p231
      %p238 = scmp.eq.s32.totalorder %s24, 3
      %p239 = por %p237, %p238
      %p240 = scmp.ne.s32.totalorder %s232, %s235
      %p241 = scmp.eq.s32.totalorder %s24, 0
      %p242 = por %p240, %p241
      %p243 = scmp.ne.s32.totalorder %s232, %s235
      %p244 = scmp.eq.s32.totalorder %s29, 3
      %p245 = por %p243, %p244
      %p246 = scmp.ne.s32.totalorder %s235, %s236
      %p247 = scmp.eq.s32.totalorder %s29, 0
      %p248 = por %p246, %p247
      %p249 = scmp.ne.s32.totalorder %s235, %s236
      %p250 = scmp.eq.s32.totalorder %s30, 3
      %p251 = por %p249, %p250
      %p253 = scmp.ne.s32.totalorder %s236, %s252
      %p254 = scmp.eq.s32.totalorder %s30, 0
      %p255 = por %p253, %p254
      %p256 = scmp.le.s32.totalorder 1, %s24
      %p257 = scmp.lt.s32.totalorder %s24, 5
      %p258 = pnand %p256, %p257
      %p259 = pneg %p258
      // Predicated region
      $region9: #{tpu_custom_call.1} parent=5 // pred_check
        _
      $region10: #{tpu_custom_call.1} parent=5 // pred_check_branch
        %261 = sbr.rel (%p258) target = $region12
      $region11: #{tpu_custom_call.1} parent=5 // pred_region
        %s262 = ssub.s32 %s24, 1
        // Predicated region
        $region13: #{tpu_custom_call.1} parent=11 // pred_check
          %p263 = pneg %p157
        $region14: #{tpu_custom_call.1} parent=11 // pred_check_branch
          %265 = sbr.rel (%p263) target = $region16
        $region15: #{tpu_custom_call.1} parent=11 // pred_region
          %s267 = ssub.s32 4096, 4096
          %268 = vsyncadd [#allocation9], %s267
          %s269 = sshll.u32 [#allocation8], 4
          %s270 = int_to_ptr.vmem [resolvable:$true] %s269
          %275 = dma.hbm_to_vmem [thread:$0]  %s3, 4096, %s270, [#allocation9], 256, 256, 16
        $region16: #{tpu_custom_call.1} parent=11 // pred_fallthru
          _
        // Predicated region
        $region17: #{tpu_custom_call.1} parent=11 // pred_check
          %p276 = pneg %p178
        $region18: #{tpu_custom_call.1} parent=11 // pred_check_branch
          %278 = sbr.rel (%p276) target = $region20
        $region19: #{tpu_custom_call.1} parent=11 // pred_region
          %s280 = ssub.s32 192, 192
          %281 = vsyncadd [#allocation9], %s280
          %s282 = sshll.u32 [#allocation10], 4
          %s283 = int_to_ptr.vmem [resolvable:$true] %s282
          %288 = dma.hbm_to_vmem [thread:$0]  %s4, 192, %s283, [#allocation9], 64, 64, 4
        $region20: #{tpu_custom_call.1} parent=11 // pred_fallthru
          _
        // Predicated region
        $region21: #{tpu_custom_call.1} parent=11 // pred_check
          %p289 = pneg %p199
        $region22: #{tpu_custom_call.1} parent=11 // pred_check_branch
          %291 = sbr.rel (%p289) target = $region24
        $region23: #{tpu_custom_call.1} parent=11 // pred_region
          %s293 = ssub.s32 192, 192
          %294 = vsyncadd [#allocation12], %s293
          %s295 = sshll.u32 [#allocation11], 4
          %s296 = int_to_ptr.vmem [resolvable:$true] %s295
          %301 = dma.hbm_to_vmem [thread:$0]  %s5, 192, %s296, [#allocation12], 64, 64, 4
        $region24: #{tpu_custom_call.1} parent=11 // pred_fallthru
          _
        // Predicated region
        $region25: #{tpu_custom_call.1} parent=11 // pred_check
          %p302 = pneg %p220
        $region26: #{tpu_custom_call.1} parent=11 // pred_check_branch
          %304 = sbr.rel (%p302) target = $region28
        $region27: #{tpu_custom_call.1} parent=11 // pred_region
          %s306 = ssub.s32 2048, 2048
          %307 = vsyncadd [#allocation12], %s306
          %s308 = sshll.u32 [#allocation13], 4
          %s309 = int_to_ptr.vmem [resolvable:$true] %s308
          %314 = dma.hbm_to_vmem [thread:$0]  %s6, 2048, %s309, [#allocation12], 128, 128, 8
        $region28: #{tpu_custom_call.1} parent=11 // pred_fallthru
          _
      $region12: #{tpu_custom_call.1} parent=5 // pred_fallthru
        _
      %p315 = scmp.lt.s32.totalorder %s24, 4
      // Predicated region
      $region29: #{tpu_custom_call.1} parent=5 // pred_check
        %p316 = pneg %p315
      $region30: #{tpu_custom_call.1} parent=5 // pred_check_branch
        %318 = sbr.rel (%p316) target = $region32
      $region31: #{tpu_custom_call.1} parent=5 // pred_region
        // Predicated region
        $region33: #{tpu_custom_call.1} parent=31 // pred_check
          %p319 = pneg %p58
        $region34: #{tpu_custom_call.1} parent=31 // pred_check_branch
          %321 = sbr.rel (%p319) target = $region36
        $region35: #{tpu_custom_call.1} parent=31 // pred_region
          %s322 = sand.u32 %s48, 1
          %s323 = scalar_lea.sflag [#allocation3], %s322
          %s324 = sand.u32 %s48, 1
          %s325 = smul.addr %s324, 128
          %s326 = scalar_lea.vmem [#allocation2], %s325
          %s327 = smul.u32 8, %s32
          %s329 = ssub.s32 2048, 2048
          %330 = vsyncadd %s323, %s329
          %s331 = smul.addr %s327, 2
          %s332 = smul.addr %s31, 32
          %s333 = sadd.s32 %s331, %s332
          %s334 = smul.addr %s333, 128
          %s335 = scalar_lea.hbm %s0, %s334
          %s336 = sshll.u32 %s326, 4
          %s337 = int_to_ptr.vmem [resolvable:$true] %s336
          %342 = dma.hbm_to_vmem [thread:$0]  %s335, 2048, %s337, %s323, 128, 128, 8
        $region36: #{tpu_custom_call.1} parent=31 // pred_fallthru
          _
        // Predicated region
        $region37: #{tpu_custom_call.1} parent=31 // pred_check
          %p343 = pneg %p94
        $region38: #{tpu_custom_call.1} parent=31 // pred_check_branch
          %345 = sbr.rel (%p343) target = $region40
        $region39: #{tpu_custom_call.1} parent=31 // pred_region
          %s346 = sand.u32 %s24, 1
          %s347 = scalar_lea.sflag [#allocation6], %s346
          %s348 = sand.u32 %s84, 1
          %s349 = smul.addr %s348, 16
          %s350 = scalar_lea.vmem [#allocation5], %s349
          %s351 = smul.u32 %s32, 8
          %s352 = ssub.s32 %s351, 1
          %p353 = scmp.gt.s32.totalorder %s352, 0
          %s354 = scalar_select %p353, %s352, 0
          %s356 = ssub.s32 256, 256
          %357 = vsyncadd %s347, %s356
          %s358 = smul.addr %s354, 2
          %s359 = smul.addr %s31, 32
          %s360 = sadd.s32 %s358, %s359
          %s361 = smul.addr %s360, 128
          %s362 = scalar_lea.hbm %s1, %s361
          %s363 = sshll.u32 %s350, 4
          %s364 = int_to_ptr.vmem [resolvable:$true] %s363
          %369 = dma.hbm_to_vmem [thread:$0]  %s362, 256, %s364, %s347, 128, 128, 8
        $region40: #{tpu_custom_call.1} parent=31 // pred_fallthru
          _
        // Predicated region
        $region41: #{tpu_custom_call.1} parent=31 // pred_check
          %p370 = pneg %p130
        $region42: #{tpu_custom_call.1} parent=31 // pred_check_branch
          %372 = sbr.rel (%p370) target = $region44
        $region43: #{tpu_custom_call.1} parent=31 // pred_region
          %s373 = sand.u32 %s24, 1
          %s374 = scalar_lea.sflag [#allocation6], %s373
          %s375 = sand.u32 %s120, 1
          %s376 = smul.addr %s375, 16
          %s377 = scalar_lea.vmem [#allocation7], %s376
          %s378 = sadd.s32 %s32, 1
          %s379 = smul.u32 %s378, 8
          %p380 = scmp.lt.s32.totalorder %s379, 15
          %s381 = scalar_select %p380, %s379, 15
          %s383 = ssub.s32 256, 256
          %384 = vsyncadd %s374, %s383
          %s385 = smul.addr %s381, 2
          %s386 = smul.addr %s31, 32
          %s387 = sadd.s32 %s385, %s386
          %s388 = smul.addr %s387, 128
          %s389 = scalar_lea.hbm %s2, %s388
          %s390 = sshll.u32 %s377, 4
          %s391 = int_to_ptr.vmem [resolvable:$true] %s390
          %396 = dma.hbm_to_vmem [thread:$0]  %s389, 256, %s391, %s374, 128, 128, 8
        $region44: #{tpu_custom_call.1} parent=31 // pred_fallthru
          _
      $region32: #{tpu_custom_call.1} parent=5 // pred_fallthru
        _
      %p397 = scmp.le.s32.totalorder 1, %s24
      %p398 = scmp.lt.s32.totalorder %s24, 5
      %p399 = pnand %p397, %p398
      %p400 = pneg %p399
      // Predicated region
      $region45: #{tpu_custom_call.1} parent=5 // pred_check
        _
      $region46: #{tpu_custom_call.1} parent=5 // pred_check_branch
        %402 = sbr.rel (%p399) target = $region48
      $region47: #{tpu_custom_call.1} parent=5 // pred_region
        %s403 = ssub.s32 %s24, 1
        %s404 = sand.u32 %s51, 1
        %s405 = scalar_lea.sflag [#allocation3], %s404
        %s406 = sand.u32 %s51, 1
        %s407 = smul.addr %s406, 128
        %s408 = scalar_lea.vmem [#allocation2], %s407
        // Predicated region
        $region49: #{tpu_custom_call.1} parent=47 // pred_check
          %p409 = pneg %p64
        $region50: #{tpu_custom_call.1} parent=47 // pred_check_branch
          %411 = sbr.rel (%p409) target = $region52
        $region51: #{tpu_custom_call.1} parent=47 // pred_region
          %412 = dma.done %s405, 2048
        $region52: #{tpu_custom_call.1} parent=47 // pred_fallthru
          _
        %s413 = sand.u32 %s29, 1
        %s414 = scalar_lea.sflag [#allocation6], %s413
        %s415 = sand.u32 %s87, 1
        %s416 = smul.addr %s415, 16
        %s417 = scalar_lea.vmem [#allocation5], %s416
        // Predicated region
        $region53: #{tpu_custom_call.1} parent=47 // pred_check
          %p418 = pneg %p100
        $region54: #{tpu_custom_call.1} parent=47 // pred_check_branch
          %420 = sbr.rel (%p418) target = $region56
        $region55: #{tpu_custom_call.1} parent=47 // pred_region
          %421 = dma.done %s414, 256
        $region56: #{tpu_custom_call.1} parent=47 // pred_fallthru
          _
        %s422 = sand.u32 %s29, 1
        %s423 = scalar_lea.sflag [#allocation6], %s422
        %s424 = sand.u32 %s123, 1
        %s425 = smul.addr %s424, 16
        %s426 = scalar_lea.vmem [#allocation7], %s425
        // Predicated region
        $region57: #{tpu_custom_call.1} parent=47 // pred_check
          %p427 = pneg %p136
        $region58: #{tpu_custom_call.1} parent=47 // pred_check_branch
          %429 = sbr.rel (%p427) target = $region60
        $region59: #{tpu_custom_call.1} parent=47 // pred_region
          %430 = dma.done %s423, 256
        $region60: #{tpu_custom_call.1} parent=47 // pred_fallthru
          _
        // Predicated region
        $region61: #{tpu_custom_call.1} parent=47 // pred_check
          %p431 = pneg %p157
        $region62: #{tpu_custom_call.1} parent=47 // pred_check_branch
          %433 = sbr.rel (%p431) target = $region64
        $region63: #{tpu_custom_call.1} parent=47 // pred_region
          %434 = dma.done [#allocation9], 4096
        $region64: #{tpu_custom_call.1} parent=47 // pred_fallthru
          _
        // Predicated region
        $region65: #{tpu_custom_call.1} parent=47 // pred_check
          %p435 = pneg %p178
        $region66: #{tpu_custom_call.1} parent=47 // pred_check_branch
          %437 = sbr.rel (%p435) target = $region68
        $region67: #{tpu_custom_call.1} parent=47 // pred_region
          %438 = dma.done [#allocation9], 192
        $region68: #{tpu_custom_call.1} parent=47 // pred_fallthru
          _
        // Predicated region
        $region69: #{tpu_custom_call.1} parent=47 // pred_check
          %p439 = pneg %p199
        $region70: #{tpu_custom_call.1} parent=47 // pred_check_branch
          %441 = sbr.rel (%p439) target = $region72
        $region71: #{tpu_custom_call.1} parent=47 // pred_region
          %442 = dma.done [#allocation12], 192
        $region72: #{tpu_custom_call.1} parent=47 // pred_fallthru
          _
        // Predicated region
        $region73: #{tpu_custom_call.1} parent=47 // pred_check
          %p443 = pneg %p220
        $region74: #{tpu_custom_call.1} parent=47 // pred_check_branch
          %445 = sbr.rel (%p443) target = $region76
        $region75: #{tpu_custom_call.1} parent=47 // pred_region
          %446 = dma.done [#allocation12], 2048
        $region76: #{tpu_custom_call.1} parent=47 // pred_fallthru
          _
        %s447 = sand.u32 %s51, 1
        %s448 = scalar_lea.sflag [#allocation3], %s447
        %s449 = sand.u32 %s51, 1
        %s450 = smul.addr %s449, 128
        %s451 = scalar_lea.vmem [#allocation2], %s450
        %p452 = pneg %p64
        %p453 = pneg %p61
        %s454 = sand.u32 %s29, 1
        %s455 = scalar_lea.sflag [#allocation6], %s454
        %s456 = sand.u32 %s87, 1
        %s457 = smul.addr %s456, 16
        %s458 = scalar_lea.vmem [#allocation5], %s457
        %p459 = pneg %p100
        %p460 = pneg %p97
        %s461 = sand.u32 %s29, 1
        %s462 = scalar_lea.sflag [#allocation6], %s461
        %s463 = sand.u32 %s123, 1
        %s464 = smul.addr %s463, 16
        %s465 = scalar_lea.vmem [#allocation7], %s464
        %p466 = pneg %p136
        %p467 = pneg %p133
        %p468 = pneg %p157
        %p469 = pneg %p154
        %p470 = pneg %p178
        %p471 = pneg %p175
        %p472 = pneg %p199
        %p473 = pneg %p196
        %p474 = pneg %p220
        %p475 = pneg %p217
        %p476 = pneg %p248
        %p477 = pneg %p245
        %s478 = sand.u32 %s235, 1
        %s479 = scalar_lea.sflag [#allocation4], %s478
        %s480 = sand.u32 %s235, 1
        %s481 = smul.addr %s480, 128
        %s482 = scalar_lea.vmem [#allocation14], %s481
        %s483 = smul.u32 8, %s34
        %s484 = smul.u32 %s34, 8
        %s485 = ssub.s32 %s484, 1
        %p486 = scmp.gt.s32.totalorder %s485, 0
        %s487 = scalar_select %p486, %s485, 0
        %s488 = sadd.s32 %s34, 1
        %s489 = smul.u32 %s488, 8
        %p490 = scmp.lt.s32.totalorder %s489, 15
        %s491 = scalar_select %p490, %s489, 15
        %s492 = smul.u32 8, %s34
        %v493 = vld [vmem:[%s408] sm:$0xff]
        %v494 = vld [vmem:[%s408 + $0x8] sm:$0xff]
        %v495 = vld [vmem:[%s408 + $0x10] sm:$0xff]
        %v496 = vld [vmem:[%s408 + $0x18] sm:$0xff]
        %v497 = vld [vmem:[%s408 + $0x20] sm:$0xff]
        %v498 = vld [vmem:[%s408 + $0x28] sm:$0xff]
        %v499 = vld [vmem:[%s408 + $0x30] sm:$0xff]
        %v500 = vld [vmem:[%s408 + $0x38] sm:$0xff]
        %v501 = vld [vmem:[%s408 + $0x40] sm:$0xff]
        %v502 = vld [vmem:[%s408 + $0x48] sm:$0xff]
        %v503 = vld [vmem:[%s408 + $0x50] sm:$0xff]
        %v504 = vld [vmem:[%s408 + $0x58] sm:$0xff]
        %v505 = vld [vmem:[%s408 + $0x60] sm:$0xff]
        %v506 = vld [vmem:[%s408 + $0x68] sm:$0xff]
        %v507 = vld [vmem:[%s408 + $0x70] sm:$0xff]
        %v508 = vld [vmem:[%s408 + $0x78] sm:$0xff]
        %v509 = vld [vmem:[%s417] sm:$0xff]
        %v510 = vld [vmem:[%s417 + $0x8] sm:$0xff]
        %p511 = scmp.gt.s32.totalorder %s34, 0
        %s512 = scalar_select %p511, 1, 0
        %s513 = scvt.s32.f32 %s512
        %v514 = vstv %s513
        %v515 = vmul.f32 %v509, %v514
        %v516 = vmul.f32 %v510, %v514
        %v517 = vld [vmem:[%s426] sm:$0xff]
        %v518 = vld [vmem:[%s426 + $0x8] sm:$0xff]
        %p519 = scmp.lt.s32.totalorder %s34, 1
        %s520 = scalar_select %p519, 1, 0
        %s521 = scvt.s32.f32 %s520
        %v522 = vstv %s521
        %v523 = vmul.f32 %v517, %v522
        %v524 = vmul.f32 %v518, %v522
        %v525 = vld [vmem:[#allocation8] sm:$0xff]
        %v526 = vld [vmem:[#allocation8 + $0x8] sm:$0xff]
        %v527 = vld [vmem:[#allocation8 + $0x10] sm:$0xff]
        %v528 = vld [vmem:[#allocation8 + $0x18] sm:$0xff]
        %v529 = vld [vmem:[#allocation8 + $0x20] sm:$0xff]
        %v530 = vld [vmem:[#allocation8 + $0x28] sm:$0xff]
        %v531 = vld [vmem:[#allocation8 + $0x30] sm:$0xff]
        %v532 = vld [vmem:[#allocation8 + $0x38] sm:$0xff]
        %v533 = vld [vmem:[#allocation8 + $0x40] sm:$0xff]
        %v534 = vld [vmem:[#allocation8 + $0x48] sm:$0xff]
        %v535 = vld [vmem:[#allocation8 + $0x50] sm:$0xff]
        %v536 = vld [vmem:[#allocation8 + $0x58] sm:$0xff]
        %v537 = vld [vmem:[#allocation8 + $0x60] sm:$0xff]
        %v538 = vld [vmem:[#allocation8 + $0x68] sm:$0xff]
        %v539 = vld [vmem:[#allocation8 + $0x70] sm:$0xff]
        %v540 = vld [vmem:[#allocation8 + $0x78] sm:$0xff]
        %v541 = vld [vmem:[#allocation8 + $0x80] sm:$0xff]
        %v542 = vld [vmem:[#allocation8 + $0x88] sm:$0xff]
        %v543 = vld [vmem:[#allocation8 + $0x90] sm:$0xff]
        %v544 = vld [vmem:[#allocation8 + $0x98] sm:$0xff]
        %v545 = vld [vmem:[#allocation8 + $0xa0] sm:$0xff]
        %v546 = vld [vmem:[#allocation8 + $0xa8] sm:$0xff]
        %v547 = vld [vmem:[#allocation8 + $0xb0] sm:$0xff]
        %v548 = vld [vmem:[#allocation8 + $0xb8] sm:$0xff]
        %v549 = vld [vmem:[#allocation8 + $0xc0] sm:$0xff]
        %v550 = vld [vmem:[#allocation8 + $0xc8] sm:$0xff]
        %v551 = vld [vmem:[#allocation8 + $0xd0] sm:$0xff]
        %v552 = vld [vmem:[#allocation8 + $0xd8] sm:$0xff]
        %v553 = vld [vmem:[#allocation8 + $0xe0] sm:$0xff]
        %v554 = vld [vmem:[#allocation8 + $0xe8] sm:$0xff]
        %v555 = vld [vmem:[#allocation8 + $0xf0] sm:$0xff]
        %v556 = vld [vmem:[#allocation8 + $0xf8] sm:$0xff]
        %557 = vmatprep.subr.mxu0 %v556
        %558 = vmatpush1.msra.mxu0 %v555
        %559 = vmatprep.subr.mxu0 %v554
        %560 = vmatpush1.msra.mxu0 %v553
        %561 = vmatprep.subr.mxu0 %v552
        %562 = vmatpush1.msra.mxu0 %v551
        %563 = vmatprep.subr.mxu0 %v550
        %564 = vmatpush1.msra.mxu0 %v549
        %565 = vmatprep.subr.mxu0 %v548
        %566 = vmatpush1.msra.mxu0 %v547
        %567 = vmatprep.subr.mxu0 %v546
        %568 = vmatpush1.msra.mxu0 %v545
        %569 = vmatprep.subr.mxu0 %v544
        %570 = vmatpush1.msra.mxu0 %v543
        %571 = vmatprep.subr.mxu0 %v542
        %572 = vmatpush1.msra.mxu0 %v541
        %573 = vmatprep.subr.mxu0 %v540
        %574 = vmatpush1.msra.mxu0 %v539
        %575 = vmatprep.subr.mxu0 %v538
        %576 = vmatpush1.msra.mxu0 %v537
        %577 = vmatprep.subr.mxu0 %v536
        %578 = vmatpush1.msra.mxu0 %v535
        %579 = vmatprep.subr.mxu0 %v534
        %580 = vmatpush1.msra.mxu0 %v533
        %581 = vmatprep.subr.mxu0 %v532
        %582 = vmatpush1.msra.mxu0 %v531
        %583 = vmatprep.subr.mxu0 %v530
        %584 = vmatpush1.msra.mxu0 %v529
        %585 = vmatprep.subr.mxu0 %v528
        %586 = vmatpush1.msra.mxu0 %v527
        %587 = vmatprep.subr.mxu0 %v526
        %588 = vmatpush1.msra.mxu0 %v525
        %589 = vmatprep.subr.mxu0 0.0
        %590 = vmatpush2.msra.mxu0 0.0
        %591 = vmatprep.subr.mxu0 0.0
        %592 = vmatpush2.msra.mxu0 0.0
        %593 = vmatprep.subr.mxu0 0.0
        %594 = vmatpush2.msra.mxu0 0.0
        %595 = vmatprep.subr.mxu0 0.0
        %596 = vmatpush2.msra.mxu0 0.0
        %597 = vmatprep.subr.mxu0 0.0
        %598 = vmatpush2.msra.mxu0 0.0
        %599 = vmatprep.subr.mxu0 0.0
        %600 = vmatpush2.msra.mxu0 0.0
        %601 = vmatprep.subr.mxu0 0.0
        %602 = vmatpush2.msra.mxu0 0.0
        %603 = vmatprep.subr.mxu0 0.0
        %604 = vmatpush2.msra.mxu0 0.0
        %605 = vmatprep.subr.mxu0 0.0
        %606 = vmatpush2.msra.mxu0 0.0
        %607 = vmatprep.subr.mxu0 0.0
        %608 = vmatpush2.msra.mxu0 0.0
        %609 = vmatprep.subr.mxu0 0.0
        %610 = vmatpush2.msra.mxu0 0.0
        %611 = vmatprep.subr.mxu0 0.0
        %612 = vmatpush2.msra.mxu0 0.0
        %613 = vmatprep.subr.mxu0 0.0
        %614 = vmatpush2.msra.mxu0 0.0
        %615 = vmatprep.subr.mxu0 0.0
        %616 = vmatpush2.msra.mxu0 0.0
        %617 = vmatprep.subr.mxu0 0.0
        %618 = vmatpush2.msra.mxu0 0.0
        %619 = vmatprep.subr.mxu0 0.0
        %620 = vmatpush2.msra.mxu0 0.0
        %621 = vmatprep.mubr.f32.mxu0 0.0
        %622 = vmatmul.mubr.f32.gmra.mxu0 %v515
        %v623 = vpop.f32.mrf.mxu0
        %v624 = vadd.f32 0.0, %v623
        %v625 = vpop.f32.mrf.mxu0
        %v626 = vadd.f32 0.0, %v625
        %627 = vmatprep.mubr.f32.mxu0 0.0
        %628 = vmatmul.mubr.f32.gmra.mxu0 %v516
        %v629 = vpop.f32.mrf.mxu0
        %v630 = vadd.f32 0.0, %v629
        %v631 = vpop.f32.mrf.mxu0
        %v632 = vadd.f32 0.0, %v631
        %633 = vmatprep.mubr.f32.mxu0 0.0
        %634 = vmatmul.mubr.f32.gmra.mxu0 %v493
        %v635 = vpop.f32.mrf.mxu0
        %v636 = vadd.f32 0.0, %v635
        %v637 = vpop.f32.mrf.mxu0
        %v638 = vadd.f32 0.0, %v637
        %639 = vmatprep.mubr.f32.mxu0 0.0
        %640 = vmatmul.mubr.f32.gmra.mxu0 %v494
        %v641 = vpop.f32.mrf.mxu0
        %v642 = vadd.f32 0.0, %v641
        %v643 = vpop.f32.mrf.mxu0
        %v644 = vadd.f32 0.0, %v643
        %645 = vmatprep.mubr.f32.mxu0 0.0
        %646 = vmatmul.mubr.f32.gmra.mxu0 %v495
        %v647 = vpop.f32.mrf.mxu0
        %v648 = vadd.f32 0.0, %v647
        %v649 = vpop.f32.mrf.mxu0
        %v650 = vadd.f32 0.0, %v649
        %651 = vmatprep.mubr.f32.mxu0 0.0
        %652 = vmatmul.mubr.f32.gmra.mxu0 %v496
        %v653 = vpop.f32.mrf.mxu0
        %v654 = vadd.f32 0.0, %v653
        %v655 = vpop.f32.mrf.mxu0
        %v656 = vadd.f32 0.0, %v655
        %657 = vmatprep.mubr.f32.mxu0 0.0
        %658 = vmatmul.mubr.f32.gmra.mxu0 %v497
        %v659 = vpop.f32.mrf.mxu0
        %v660 = vadd.f32 0.0, %v659
        %v661 = vpop.f32.mrf.mxu0
        %v662 = vadd.f32 0.0, %v661
        %663 = vmatprep.mubr.f32.mxu0 0.0
        %664 = vmatmul.mubr.f32.gmra.mxu0 %v498
        %v665 = vpop.f32.mrf.mxu0
        %v666 = vadd.f32 0.0, %v665
        %v667 = vpop.f32.mrf.mxu0
        %v668 = vadd.f32 0.0, %v667
        %669 = vmatprep.mubr.f32.mxu0 0.0
        %670 = vmatmul.mubr.f32.gmra.mxu0 %v499
        %v671 = vpop.f32.mrf.mxu0
        %v672 = vadd.f32 0.0, %v671
        %v673 = vpop.f32.mrf.mxu0
        %v674 = vadd.f32 0.0, %v673
        %675 = vmatprep.mubr.f32.mxu0 0.0
        %676 = vmatmul.mubr.f32.gmra.mxu0 %v500
        %v677 = vpop.f32.mrf.mxu0
        %v678 = vadd.f32 0.0, %v677
        %v679 = vpop.f32.mrf.mxu0
        %v680 = vadd.f32 0.0, %v679
        %681 = vmatprep.mubr.f32.mxu0 0.0
        %682 = vmatmul.mubr.f32.gmra.mxu0 %v501
        %v683 = vpop.f32.mrf.mxu0
        %v684 = vadd.f32 0.0, %v683
        %v685 = vpop.f32.mrf.mxu0
        %v686 = vadd.f32 0.0, %v685
        %687 = vmatprep.mubr.f32.mxu0 0.0
        %688 = vmatmul.mubr.f32.gmra.mxu0 %v502
        %v689 = vpop.f32.mrf.mxu0
        %v690 = vadd.f32 0.0, %v689
        %v691 = vpop.f32.mrf.mxu0
        %v692 = vadd.f32 0.0, %v691
        %693 = vmatprep.mubr.f32.mxu0 0.0
        %694 = vmatmul.mubr.f32.gmra.mxu0 %v503
        %v695 = vpop.f32.mrf.mxu0
        %v696 = vadd.f32 0.0, %v695
        %v697 = vpop.f32.mrf.mxu0
        %v698 = vadd.f32 0.0, %v697
        %699 = vmatprep.mubr.f32.mxu0 0.0
        %700 = vmatmul.mubr.f32.gmra.mxu0 %v504
        %v701 = vpop.f32.mrf.mxu0
        %v702 = vadd.f32 0.0, %v701
        %v703 = vpop.f32.mrf.mxu0
        %v704 = vadd.f32 0.0, %v703
        %705 = vmatprep.mubr.f32.mxu0 0.0
        %706 = vmatmul.mubr.f32.gmra.mxu0 %v505
        %v707 = vpop.f32.mrf.mxu0
        %v708 = vadd.f32 0.0, %v707
        %v709 = vpop.f32.mrf.mxu0
        %v710 = vadd.f32 0.0, %v709
        %711 = vmatprep.mubr.f32.mxu0 0.0
        %712 = vmatmul.mubr.f32.gmra.mxu0 %v506
        %v713 = vpop.f32.mrf.mxu0
        %v714 = vadd.f32 0.0, %v713
        %v715 = vpop.f32.mrf.mxu0
        %v716 = vadd.f32 0.0, %v715
        %717 = vmatprep.mubr.f32.mxu0 0.0
        %718 = vmatmul.mubr.f32.gmra.mxu0 %v507
        %v719 = vpop.f32.mrf.mxu0
        %v720 = vadd.f32 0.0, %v719
        %v721 = vpop.f32.mrf.mxu0
        %v722 = vadd.f32 0.0, %v721
        %723 = vmatprep.mubr.f32.mxu0 0.0
        %724 = vmatmul.mubr.f32.gmra.mxu0 %v508
        %v725 = vpop.f32.mrf.mxu0
        %v726 = vadd.f32 0.0, %v725
        %v727 = vpop.f32.mrf.mxu0
        %v728 = vadd.f32 0.0, %v727
        %729 = vmatprep.mubr.f32.mxu0 0.0
        %730 = vmatmul.mubr.f32.gmra.mxu0 %v523
        %v731 = vpop.f32.mrf.mxu0
        %v732 = vadd.f32 0.0, %v731
        %v733 = vpop.f32.mrf.mxu0
        %v734 = vadd.f32 0.0, %v733
        %735 = vmatprep.mubr.f32.mxu0 0.0
        %736 = vmatmul.mubr.f32.gmra.mxu0 %v524
        %v737 = vpop.f32.mrf.mxu0
        %v738 = vadd.f32 0.0, %v737
        %v739 = vpop.f32.mrf.mxu0
        %v740 = vadd.f32 0.0, %v739
        %741 = vdwg.mxu0
        %v742 = vlaneseq
        %v743 = vshrl.u32 %v742, 7
        %v744 = vadd.s32 %v743, 8
        %vm745 = vcmp.gt.s32.totalorder %v743, 0
        %vm746 = vcmp.gt.s32.totalorder %v744, 0
        %v747 = vsel %vm745, 1, 0
        %v748 = vsel %vm746, 1, 0
        %v749 = vcvt.s32.f32 %v747
        %v750 = vcvt.s32.f32 %v748
        %vm751 = vcmp.lt.s32.totalorder %v743, 15
        %vm752 = vcmp.lt.s32.totalorder %v744, 15
        %v753 = vsel %vm751, 1, 0
        %v754 = vsel %vm752, 1, 0
        %v755 = vcvt.s32.f32 %v753
        %v756 = vcvt.s32.f32 %v754
        %v757 = vld [vmem:[#allocation10] sm:$0x7]
        %v758 = vld [vmem:[#allocation10 + $0x4] sm:$0x7]
        %v759 = vld [vmem:[#allocation10 + $0x8] sm:$0x7]
        %v760 = vrot.slane %v624, 7
        %v761 = vrot.slane %v630, 7
        %v762 = vrot.slane %v636, 7
        %v763 = vrot.slane %v642, 7
        %v764 = vrot.slane %v648, 7
        %v765 = vrot.slane %v654, 7
        %v766 = vrot.slane %v660, 7
        %v767 = vrot.slane %v666, 7
        %v768 = vrot.slane %v672, 7
        %v769 = vrot.slane %v678, 7
        %v770 = vrot.slane %v684, 7
        %v771 = vrot.slane %v690, 7
        %v772 = vrot.slane %v696, 7
        %v773 = vrot.slane %v702, 7
        %v774 = vrot.slane %v708, 7
        %v775 = vrot.slane %v714, 7
        %v776 = vrot.slane %v720, 7
        %v777 = vrot.slane %v726, 7
        %v778 = vrot.slane %v732, 7
        %v779 = vrot.slane %v738, 7
        %vm780 = vcmp.lt.s32.totalorder %v743, 1
        %v781 = vsel %vm780, %v778, %v779
        %v782 = vsel %vm780, %v777, %v778
        %v783 = vsel %vm780, %v776, %v777
        %v784 = vsel %vm780, %v775, %v776
        %v785 = vsel %vm780, %v774, %v775
        %v786 = vsel %vm780, %v773, %v774
        %v787 = vsel %vm780, %v772, %v773
        %v788 = vsel %vm780, %v771, %v772
        %v789 = vsel %vm780, %v770, %v771
        %v790 = vsel %vm780, %v769, %v770
        %v791 = vsel %vm780, %v768, %v769
        %v792 = vsel %vm780, %v767, %v768
        %v793 = vsel %vm780, %v766, %v767
        %v794 = vsel %vm780, %v765, %v766
        %v795 = vsel %vm780, %v764, %v765
        %v796 = vsel %vm780, %v763, %v764
        %v797 = vsel %vm780, %v762, %v763
        %v798 = vsel %vm780, %v761, %v762
        %v799 = vsel %vm780, %v760, %v761
        %v800 = vsel %vm780, %v779, %v760
        %v801 = vrot.slane %v624, 1
        %v802 = vrot.slane %v630, 1
        %v803 = vrot.slane %v636, 1
        %v804 = vrot.slane %v642, 1
        %v805 = vrot.slane %v648, 1
        %v806 = vrot.slane %v654, 1
        %v807 = vrot.slane %v660, 1
        %v808 = vrot.slane %v666, 1
        %v809 = vrot.slane %v672, 1
        %v810 = vrot.slane %v678, 1
        %v811 = vrot.slane %v684, 1
        %v812 = vrot.slane %v690, 1
        %v813 = vrot.slane %v696, 1
        %v814 = vrot.slane %v702, 1
        %v815 = vrot.slane %v708, 1
        %v816 = vrot.slane %v714, 1
        %v817 = vrot.slane %v720, 1
        %v818 = vrot.slane %v726, 1
        %v819 = vrot.slane %v732, 1
        %v820 = vrot.slane %v738, 1
        %vm821 = vcmp.lt.s32.totalorder %v743, 7
        %v822 = vsel %vm821, %v819, %v820
        %v823 = vsel %vm821, %v818, %v819
        %v824 = vsel %vm821, %v817, %v818
        %v825 = vsel %vm821, %v816, %v817
        %v826 = vsel %vm821, %v815, %v816
        %v827 = vsel %vm821, %v814, %v815
        %v828 = vsel %vm821, %v813, %v814
        %v829 = vsel %vm821, %v812, %v813
        %v830 = vsel %vm821, %v811, %v812
        %v831 = vsel %vm821, %v810, %v811
        %v832 = vsel %vm821, %v809, %v810
        %v833 = vsel %vm821, %v808, %v809
        %v834 = vsel %vm821, %v807, %v808
        %v835 = vsel %vm821, %v806, %v807
        %v836 = vsel %vm821, %v805, %v806
        %v837 = vsel %vm821, %v804, %v805
        %v838 = vsel %vm821, %v803, %v804
        %v839 = vsel %vm821, %v802, %v803
        %v840 = vsel %vm821, %v801, %v802
        %v841 = vsel %vm821, %v820, %v801
        %v842 = vlaneseq
        %v843 = vshrl.u32 %v842, 7
        %v844 = vsub.s32 0, %v843
        %v845 = vrot.slane %v757, %v844
        %v846 = vlaneseq
        %v847 = vshrl.u32 %v846, 7
        %v848 = vsub.s32 0, %v847
        %v849 = vrot.slane %v758, %v848
        %v850 = vlaneseq
        %v851 = vshrl.u32 %v850, 7
        %v852 = vsub.s32 0, %v851
        %v853 = vrot.slane %v759, %v852
        %v854 = vmul.f32 %v845, %v749
        %v855 = vmul.f32 %v845, %v750
        %v856 = vmul.f32 %v849, %v749
        %v857 = vmul.f32 %v849, %v750
        %v858 = vmul.f32 %v853, %v749
        %v859 = vmul.f32 %v853, %v750
        %v860 = vlaneseq
        %v861 = vshrl.u32 %v860, 7
        %v862 = vsub.s32 2, %v861
        %v863 = vrot.slane %v757, %v862
        %v864 = vlaneseq
        %v865 = vshrl.u32 %v864, 7
        %v866 = vsub.s32 2, %v865
        %v867 = vrot.slane %v758, %v866
        %v868 = vlaneseq
        %v869 = vshrl.u32 %v868, 7
        %v870 = vsub.s32 2, %v869
        %v871 = vrot.slane %v759, %v870
        %v872 = vmul.f32 %v863, %v755
        %v873 = vmul.f32 %v863, %v756
        %v874 = vmul.f32 %v867, %v755
        %v875 = vmul.f32 %v867, %v756
        %v876 = vmul.f32 %v871, %v755
        %v877 = vmul.f32 %v871, %v756
        %v878 = vmul.f32 %v800, %v854
        %v879 = vmul.f32 %v799, %v855
        %v880 = vmul.f32 %v798, %v854
        %v881 = vmul.f32 %v797, %v855
        %v882 = vmul.f32 %v796, %v854
        %v883 = vmul.f32 %v795, %v855
        %v884 = vmul.f32 %v794, %v854
        %v885 = vmul.f32 %v793, %v855
        %v886 = vmul.f32 %v792, %v854
        %v887 = vmul.f32 %v791, %v855
        %v888 = vmul.f32 %v790, %v854
        %v889 = vmul.f32 %v789, %v855
        %v890 = vmul.f32 %v788, %v854
        %v891 = vmul.f32 %v787, %v855
        %v892 = vmul.f32 %v786, %v854
        %v893 = vmul.f32 %v785, %v855
        %v894 = vlaneseq
        %v895 = vshrl.u32 %v894, 7
        %v896 = vsub.s32 1, %v895
        %v897 = vrot.slane %v757, %v896
        %v898 = vmul.f32 %v624, %v897
        %v899 = vmul.f32 %v630, %v897
        %v900 = vmul.f32 %v636, %v897
        %v901 = vmul.f32 %v642, %v897
        %v902 = vmul.f32 %v648, %v897
        %v903 = vmul.f32 %v654, %v897
        %v904 = vmul.f32 %v660, %v897
        %v905 = vmul.f32 %v666, %v897
        %v906 = vmul.f32 %v672, %v897
        %v907 = vmul.f32 %v678, %v897
        %v908 = vmul.f32 %v684, %v897
        %v909 = vmul.f32 %v690, %v897
        %v910 = vmul.f32 %v696, %v897
        %v911 = vmul.f32 %v702, %v897
        %v912 = vmul.f32 %v708, %v897
        %v913 = vmul.f32 %v714, %v897
        %v914 = vadd.f32 %v878, %v898
        %v915 = vadd.f32 %v879, %v899
        %v916 = vadd.f32 %v880, %v900
        %v917 = vadd.f32 %v881, %v901
        %v918 = vadd.f32 %v882, %v902
        %v919 = vadd.f32 %v883, %v903
        %v920 = vadd.f32 %v884, %v904
        %v921 = vadd.f32 %v885, %v905
        %v922 = vadd.f32 %v886, %v906
        %v923 = vadd.f32 %v887, %v907
        %v924 = vadd.f32 %v888, %v908
        %v925 = vadd.f32 %v889, %v909
        %v926 = vadd.f32 %v890, %v910
        %v927 = vadd.f32 %v891, %v911
        %v928 = vadd.f32 %v892, %v912
        %v929 = vadd.f32 %v893, %v913
        %v930 = vmul.f32 %v840, %v872
        %v931 = vmul.f32 %v839, %v873
        %v932 = vmul.f32 %v838, %v872
        %v933 = vmul.f32 %v837, %v873
        %v934 = vmul.f32 %v836, %v872
        %v935 = vmul.f32 %v835, %v873
        %v936 = vmul.f32 %v834, %v872
        %v937 = vmul.f32 %v833, %v873
        %v938 = vmul.f32 %v832, %v872
        %v939 = vmul.f32 %v831, %v873
        %v940 = vmul.f32 %v830, %v872
        %v941 = vmul.f32 %v829, %v873
        %v942 = vmul.f32 %v828, %v872
        %v943 = vmul.f32 %v827, %v873
        %v944 = vmul.f32 %v826, %v872
        %v945 = vmul.f32 %v825, %v873
        %v946 = vadd.f32 %v914, %v930
        %v947 = vadd.f32 %v915, %v931
        %v948 = vadd.f32 %v916, %v932
        %v949 = vadd.f32 %v917, %v933
        %v950 = vadd.f32 %v918, %v934
        %v951 = vadd.f32 %v919, %v935
        %v952 = vadd.f32 %v920, %v936
        %v953 = vadd.f32 %v921, %v937
        %v954 = vadd.f32 %v922, %v938
        %v955 = vadd.f32 %v923, %v939
        %v956 = vadd.f32 %v924, %v940
        %v957 = vadd.f32 %v925, %v941
        %v958 = vadd.f32 %v926, %v942
        %v959 = vadd.f32 %v927, %v943
        %v960 = vadd.f32 %v928, %v944
        %v961 = vadd.f32 %v929, %v945
        %v962 = vmul.f32 %v798, %v856
        %v963 = vmul.f32 %v797, %v857
        %v964 = vmul.f32 %v796, %v856
        %v965 = vmul.f32 %v795, %v857
        %v966 = vmul.f32 %v794, %v856
        %v967 = vmul.f32 %v793, %v857
        %v968 = vmul.f32 %v792, %v856
        %v969 = vmul.f32 %v791, %v857
        %v970 = vmul.f32 %v790, %v856
        %v971 = vmul.f32 %v789, %v857
        %v972 = vmul.f32 %v788, %v856
        %v973 = vmul.f32 %v787, %v857
        %v974 = vmul.f32 %v786, %v856
        %v975 = vmul.f32 %v785, %v857
        %v976 = vmul.f32 %v784, %v856
        %v977 = vmul.f32 %v783, %v857
        %v978 = vlaneseq
        %v979 = vshrl.u32 %v978, 7
        %v980 = vsub.s32 1, %v979
        %v981 = vrot.slane %v758, %v980
        %v982 = vmul.f32 %v636, %v981
        %v983 = vmul.f32 %v642, %v981
        %v984 = vmul.f32 %v648, %v981
        %v985 = vmul.f32 %v654, %v981
        %v986 = vmul.f32 %v660, %v981
        %v987 = vmul.f32 %v666, %v981
        %v988 = vmul.f32 %v672, %v981
        %v989 = vmul.f32 %v678, %v981
        %v990 = vmul.f32 %v684, %v981
        %v991 = vmul.f32 %v690, %v981
        %v992 = vmul.f32 %v696, %v981
        %v993 = vmul.f32 %v702, %v981
        %v994 = vmul.f32 %v708, %v981
        %v995 = vmul.f32 %v714, %v981
        %v996 = vmul.f32 %v720, %v981
        %v997 = vmul.f32 %v726, %v981
        %v998 = vadd.f32 %v962, %v982
        %v999 = vadd.f32 %v963, %v983
        %v1000 = vadd.f32 %v964, %v984
        %v1001 = vadd.f32 %v965, %v985
        %v1002 = vadd.f32 %v966, %v986
        %v1003 = vadd.f32 %v967, %v987
        %v1004 = vadd.f32 %v968, %v988
        %v1005 = vadd.f32 %v969, %v989
        %v1006 = vadd.f32 %v970, %v990
        %v1007 = vadd.f32 %v971, %v991
        %v1008 = vadd.f32 %v972, %v992
        %v1009 = vadd.f32 %v973, %v993
        %v1010 = vadd.f32 %v974, %v994
        %v1011 = vadd.f32 %v975, %v995
        %v1012 = vadd.f32 %v976, %v996
        %v1013 = vadd.f32 %v977, %v997
        %v1014 = vmul.f32 %v838, %v874
        %v1015 = vmul.f32 %v837, %v875
        %v1016 = vmul.f32 %v836, %v874
        %v1017 = vmul.f32 %v835, %v875
        %v1018 = vmul.f32 %v834, %v874
        %v1019 = vmul.f32 %v833, %v875
        %v1020 = vmul.f32 %v832, %v874
        %v1021 = vmul.f32 %v831, %v875
        %v1022 = vmul.f32 %v830, %v874
        %v1023 = vmul.f32 %v829, %v875
        %v1024 = vmul.f32 %v828, %v874
        %v1025 = vmul.f32 %v827, %v875
        %v1026 = vmul.f32 %v826, %v874
        %v1027 = vmul.f32 %v825, %v875
        %v1028 = vmul.f32 %v824, %v874
        %v1029 = vmul.f32 %v823, %v875
        %v1030 = vadd.f32 %v998, %v1014
        %v1031 = vadd.f32 %v999, %v1015
        %v1032 = vadd.f32 %v1000, %v1016
        %v1033 = vadd.f32 %v1001, %v1017
        %v1034 = vadd.f32 %v1002, %v1018
        %v1035 = vadd.f32 %v1003, %v1019
        %v1036 = vadd.f32 %v1004, %v1020
        %v1037 = vadd.f32 %v1005, %v1021
        %v1038 = vadd.f32 %v1006, %v1022
        %v1039 = vadd.f32 %v1007, %v1023
        %v1040 = vadd.f32 %v1008, %v1024
        %v1041 = vadd.f32 %v1009, %v1025
        %v1042 = vadd.f32 %v1010, %v1026
        %v1043 = vadd.f32 %v1011, %v1027
        %v1044 = vadd.f32 %v1012, %v1028
        %v1045 = vadd.f32 %v1013, %v1029
        %v1046 = vadd.f32 %v946, %v1030
        %v1047 = vadd.f32 %v947, %v1031
        %v1048 = vadd.f32 %v948, %v1032
        %v1049 = vadd.f32 %v949, %v1033
        %v1050 = vadd.f32 %v950, %v1034
        %v1051 = vadd.f32 %v951, %v1035
        %v1052 = vadd.f32 %v952, %v1036
        %v1053 = vadd.f32 %v953, %v1037
        %v1054 = vadd.f32 %v954, %v1038
        %v1055 = vadd.f32 %v955, %v1039
        %v1056 = vadd.f32 %v956, %v1040
        %v1057 = vadd.f32 %v957, %v1041
        %v1058 = vadd.f32 %v958, %v1042
        %v1059 = vadd.f32 %v959, %v1043
        %v1060 = vadd.f32 %v960, %v1044
        %v1061 = vadd.f32 %v961, %v1045
        %v1062 = vmul.f32 %v796, %v858
        %v1063 = vmul.f32 %v795, %v859
        %v1064 = vmul.f32 %v794, %v858
        %v1065 = vmul.f32 %v793, %v859
        %v1066 = vmul.f32 %v792, %v858
        %v1067 = vmul.f32 %v791, %v859
        %v1068 = vmul.f32 %v790, %v858
        %v1069 = vmul.f32 %v789, %v859
        %v1070 = vmul.f32 %v788, %v858
        %v1071 = vmul.f32 %v787, %v859
        %v1072 = vmul.f32 %v786, %v858
        %v1073 = vmul.f32 %v785, %v859
        %v1074 = vmul.f32 %v784, %v858
        %v1075 = vmul.f32 %v783, %v859
        %v1076 = vmul.f32 %v782, %v858
        %v1077 = vmul.f32 %v781, %v859
        %v1078 = vlaneseq
        %v1079 = vshrl.u32 %v1078, 7
        %v1080 = vsub.s32 1, %v1079
        %v1081 = vrot.slane %v759, %v1080
        %v1082 = vmul.f32 %v648, %v1081
        %v1083 = vmul.f32 %v654, %v1081
        %v1084 = vmul.f32 %v660, %v1081
        %v1085 = vmul.f32 %v666, %v1081
        %v1086 = vmul.f32 %v672, %v1081
        %v1087 = vmul.f32 %v678, %v1081
        %v1088 = vmul.f32 %v684, %v1081
        %v1089 = vmul.f32 %v690, %v1081
        %v1090 = vmul.f32 %v696, %v1081
        %v1091 = vmul.f32 %v702, %v1081
        %v1092 = vmul.f32 %v708, %v1081
        %v1093 = vmul.f32 %v714, %v1081
        %v1094 = vmul.f32 %v720, %v1081
        %v1095 = vmul.f32 %v726, %v1081
        %v1096 = vmul.f32 %v732, %v1081
        %v1097 = vmul.f32 %v738, %v1081
        %v1098 = vadd.f32 %v1062, %v1082
        %v1099 = vadd.f32 %v1063, %v1083
        %v1100 = vadd.f32 %v1064, %v1084
        %v1101 = vadd.f32 %v1065, %v1085
        %v1102 = vadd.f32 %v1066, %v1086
        %v1103 = vadd.f32 %v1067, %v1087
        %v1104 = vadd.f32 %v1068, %v1088
        %v1105 = vadd.f32 %v1069, %v1089
        %v1106 = vadd.f32 %v1070, %v1090
        %v1107 = vadd.f32 %v1071, %v1091
        %v1108 = vadd.f32 %v1072, %v1092
        %v1109 = vadd.f32 %v1073, %v1093
        %v1110 = vadd.f32 %v1074, %v1094
        %v1111 = vadd.f32 %v1075, %v1095
        %v1112 = vadd.f32 %v1076, %v1096
        %v1113 = vadd.f32 %v1077, %v1097
        %v1114 = vmul.f32 %v836, %v876
        %v1115 = vmul.f32 %v835, %v877
        %v1116 = vmul.f32 %v834, %v876
        %v1117 = vmul.f32 %v833, %v877
        %v1118 = vmul.f32 %v832, %v876
        %v1119 = vmul.f32 %v831, %v877
        %v1120 = vmul.f32 %v830, %v876
        %v1121 = vmul.f32 %v829, %v877
        %v1122 = vmul.f32 %v828, %v876
        %v1123 = vmul.f32 %v827, %v877
        %v1124 = vmul.f32 %v826, %v876
        %v1125 = vmul.f32 %v825, %v877
        %v1126 = vmul.f32 %v824, %v876
        %v1127 = vmul.f32 %v823, %v877
        %v1128 = vmul.f32 %v822, %v876
        %v1129 = vmul.f32 %v841, %v877
        %v1130 = vadd.f32 %v1098, %v1114
        %v1131 = vadd.f32 %v1099, %v1115
        %v1132 = vadd.f32 %v1100, %v1116
        %v1133 = vadd.f32 %v1101, %v1117
        %v1134 = vadd.f32 %v1102, %v1118
        %v1135 = vadd.f32 %v1103, %v1119
        %v1136 = vadd.f32 %v1104, %v1120
        %v1137 = vadd.f32 %v1105, %v1121
        %v1138 = vadd.f32 %v1106, %v1122
        %v1139 = vadd.f32 %v1107, %v1123
        %v1140 = vadd.f32 %v1108, %v1124
        %v1141 = vadd.f32 %v1109, %v1125
        %v1142 = vadd.f32 %v1110, %v1126
        %v1143 = vadd.f32 %v1111, %v1127
        %v1144 = vadd.f32 %v1112, %v1128
        %v1145 = vadd.f32 %v1113, %v1129
        %v1146 = vadd.f32 %v1046, %v1130
        %v1147 = vadd.f32 %v1047, %v1131
        %v1148 = vadd.f32 %v1048, %v1132
        %v1149 = vadd.f32 %v1049, %v1133
        %v1150 = vadd.f32 %v1050, %v1134
        %v1151 = vadd.f32 %v1051, %v1135
        %v1152 = vadd.f32 %v1052, %v1136
        %v1153 = vadd.f32 %v1053, %v1137
        %v1154 = vadd.f32 %v1054, %v1138
        %v1155 = vadd.f32 %v1055, %v1139
        %v1156 = vadd.f32 %v1056, %v1140
        %v1157 = vadd.f32 %v1057, %v1141
        %v1158 = vadd.f32 %v1058, %v1142
        %v1159 = vadd.f32 %v1059, %v1143
        %v1160 = vadd.f32 %v1060, %v1144
        %v1161 = vadd.f32 %v1061, %v1145
        %v1162 = vld [vmem:[#allocation11] sm:$0x7]
        %v1163 = vld [vmem:[#allocation11 + $0x4] sm:$0x7]
        %v1164 = vld [vmem:[#allocation11 + $0x8] sm:$0x7]
        %v1165 = vrot.slane %v626, 7
        %v1166 = vrot.slane %v632, 7
        %v1167 = vrot.slane %v638, 7
        %v1168 = vrot.slane %v644, 7
        %v1169 = vrot.slane %v650, 7
        %v1170 = vrot.slane %v656, 7
        %v1171 = vrot.slane %v662, 7
        %v1172 = vrot.slane %v668, 7
        %v1173 = vrot.slane %v674, 7
        %v1174 = vrot.slane %v680, 7
        %v1175 = vrot.slane %v686, 7
        %v1176 = vrot.slane %v692, 7
        %v1177 = vrot.slane %v698, 7
        %v1178 = vrot.slane %v704, 7
        %v1179 = vrot.slane %v710, 7
        %v1180 = vrot.slane %v716, 7
        %v1181 = vrot.slane %v722, 7
        %v1182 = vrot.slane %v728, 7
        %v1183 = vrot.slane %v734, 7
        %v1184 = vrot.slane %v740, 7
        %v1185 = vsel %vm780, %v1183, %v1184
        %v1186 = vsel %vm780, %v1182, %v1183
        %v1187 = vsel %vm780, %v1181, %v1182
        %v1188 = vsel %vm780, %v1180, %v1181
        %v1189 = vsel %vm780, %v1179, %v1180
        %v1190 = vsel %vm780, %v1178, %v1179
        %v1191 = vsel %vm780, %v1177, %v1178
        %v1192 = vsel %vm780, %v1176, %v1177
        %v1193 = vsel %vm780, %v1175, %v1176
        %v1194 = vsel %vm780, %v1174, %v1175
        %v1195 = vsel %vm780, %v1173, %v1174
        %v1196 = vsel %vm780, %v1172, %v1173
        %v1197 = vsel %vm780, %v1171, %v1172
        %v1198 = vsel %vm780, %v1170, %v1171
        %v1199 = vsel %vm780, %v1169, %v1170
        %v1200 = vsel %vm780, %v1168, %v1169
        %v1201 = vsel %vm780, %v1167, %v1168
        %v1202 = vsel %vm780, %v1166, %v1167
        %v1203 = vsel %vm780, %v1165, %v1166
        %v1204 = vsel %vm780, %v1184, %v1165
        %v1205 = vrot.slane %v626, 1
        %v1206 = vrot.slane %v632, 1
        %v1207 = vrot.slane %v638, 1
        %v1208 = vrot.slane %v644, 1
        %v1209 = vrot.slane %v650, 1
        %v1210 = vrot.slane %v656, 1
        %v1211 = vrot.slane %v662, 1
        %v1212 = vrot.slane %v668, 1
        %v1213 = vrot.slane %v674, 1
        %v1214 = vrot.slane %v680, 1
        %v1215 = vrot.slane %v686, 1
        %v1216 = vrot.slane %v692, 1
        %v1217 = vrot.slane %v698, 1
        %v1218 = vrot.slane %v704, 1
        %v1219 = vrot.slane %v710, 1
        %v1220 = vrot.slane %v716, 1
        %v1221 = vrot.slane %v722, 1
        %v1222 = vrot.slane %v728, 1
        %v1223 = vrot.slane %v734, 1
        %v1224 = vrot.slane %v740, 1
        %v1225 = vsel %vm821, %v1223, %v1224
        %v1226 = vsel %vm821, %v1222, %v1223
        %v1227 = vsel %vm821, %v1221, %v1222
        %v1228 = vsel %vm821, %v1220, %v1221
        %v1229 = vsel %vm821, %v1219, %v1220
        %v1230 = vsel %vm821, %v1218, %v1219
        %v1231 = vsel %vm821, %v1217, %v1218
        %v1232 = vsel %vm821, %v1216, %v1217
        %v1233 = vsel %vm821, %v1215, %v1216
        %v1234 = vsel %vm821, %v1214, %v1215
        %v1235 = vsel %vm821, %v1213, %v1214
        %v1236 = vsel %vm821, %v1212, %v1213
        %v1237 = vsel %vm821, %v1211, %v1212
        %v1238 = vsel %vm821, %v1210, %v1211
        %v1239 = vsel %vm821, %v1209, %v1210
        %v1240 = vsel %vm821, %v1208, %v1209
        %v1241 = vsel %vm821, %v1207, %v1208
        %v1242 = vsel %vm821, %v1206, %v1207
        %v1243 = vsel %vm821, %v1205, %v1206
        %v1244 = vsel %vm821, %v1224, %v1205
        %v1245 = vlaneseq
        %v1246 = vshrl.u32 %v1245, 7
        %v1247 = vsub.s32 0, %v1246
        %v1248 = vrot.slane %v1162, %v1247
        %v1249 = vlaneseq
        %v1250 = vshrl.u32 %v1249, 7
        %v1251 = vsub.s32 0, %v1250
        %v1252 = vrot.slane %v1163, %v1251
        %v1253 = vlaneseq
        %v1254 = vshrl.u32 %v1253, 7
        %v1255 = vsub.s32 0, %v1254
        %v1256 = vrot.slane %v1164, %v1255
        %v1257 = vmul.f32 %v1248, %v749
        %v1258 = vmul.f32 %v1248, %v750
        %v1259 = vmul.f32 %v1252, %v749
        %v1260 = vmul.f32 %v1252, %v750
        %v1261 = vmul.f32 %v1256, %v749
        %v1262 = vmul.f32 %v1256, %v750
        %v1263 = vlaneseq
        %v1264 = vshrl.u32 %v1263, 7
        %v1265 = vsub.s32 2, %v1264
        %v1266 = vrot.slane %v1162, %v1265
        %v1267 = vlaneseq
        %v1268 = vshrl.u32 %v1267, 7
        %v1269 = vsub.s32 2, %v1268
        %v1270 = vrot.slane %v1163, %v1269
        %v1271 = vlaneseq
        %v1272 = vshrl.u32 %v1271, 7
        %v1273 = vsub.s32 2, %v1272
        %v1274 = vrot.slane %v1164, %v1273
        %v1275 = vmul.f32 %v1266, %v755
        %v1276 = vmul.f32 %v1266, %v756
        %v1277 = vmul.f32 %v1270, %v755
        %v1278 = vmul.f32 %v1270, %v756
        %v1279 = vmul.f32 %v1274, %v755
        %v1280 = vmul.f32 %v1274, %v756
        %v1281 = vmul.f32 %v1204, %v1257
        %v1282 = vmul.f32 %v1203, %v1258
        %v1283 = vmul.f32 %v1202, %v1257
        %v1284 = vmul.f32 %v1201, %v1258
        %v1285 = vmul.f32 %v1200, %v1257
        %v1286 = vmul.f32 %v1199, %v1258
        %v1287 = vmul.f32 %v1198, %v1257
        %v1288 = vmul.f32 %v1197, %v1258
        %v1289 = vmul.f32 %v1196, %v1257
        %v1290 = vmul.f32 %v1195, %v1258
        %v1291 = vmul.f32 %v1194, %v1257
        %v1292 = vmul.f32 %v1193, %v1258
        %v1293 = vmul.f32 %v1192, %v1257
        %v1294 = vmul.f32 %v1191, %v1258
        %v1295 = vmul.f32 %v1190, %v1257
        %v1296 = vmul.f32 %v1189, %v1258
        %v1297 = vlaneseq
        %v1298 = vshrl.u32 %v1297, 7
        %v1299 = vsub.s32 1, %v1298
        %v1300 = vrot.slane %v1162, %v1299
        %v1301 = vmul.f32 %v626, %v1300
        %v1302 = vmul.f32 %v632, %v1300
        %v1303 = vmul.f32 %v638, %v1300
        %v1304 = vmul.f32 %v644, %v1300
        %v1305 = vmul.f32 %v650, %v1300
        %v1306 = vmul.f32 %v656, %v1300
        %v1307 = vmul.f32 %v662, %v1300
        %v1308 = vmul.f32 %v668, %v1300
        %v1309 = vmul.f32 %v674, %v1300
        %v1310 = vmul.f32 %v680, %v1300
        %v1311 = vmul.f32 %v686, %v1300
        %v1312 = vmul.f32 %v692, %v1300
        %v1313 = vmul.f32 %v698, %v1300
        %v1314 = vmul.f32 %v704, %v1300
        %v1315 = vmul.f32 %v710, %v1300
        %v1316 = vmul.f32 %v716, %v1300
        %v1317 = vadd.f32 %v1281, %v1301
        %v1318 = vadd.f32 %v1282, %v1302
        %v1319 = vadd.f32 %v1283, %v1303
        %v1320 = vadd.f32 %v1284, %v1304
        %v1321 = vadd.f32 %v1285, %v1305
        %v1322 = vadd.f32 %v1286, %v1306
        %v1323 = vadd.f32 %v1287, %v1307
        %v1324 = vadd.f32 %v1288, %v1308
        %v1325 = vadd.f32 %v1289, %v1309
        %v1326 = vadd.f32 %v1290, %v1310
        %v1327 = vadd.f32 %v1291, %v1311
        %v1328 = vadd.f32 %v1292, %v1312
        %v1329 = vadd.f32 %v1293, %v1313
        %v1330 = vadd.f32 %v1294, %v1314
        %v1331 = vadd.f32 %v1295, %v1315
        %v1332 = vadd.f32 %v1296, %v1316
        %v1333 = vmul.f32 %v1243, %v1275
        %v1334 = vmul.f32 %v1242, %v1276
        %v1335 = vmul.f32 %v1241, %v1275
        %v1336 = vmul.f32 %v1240, %v1276
        %v1337 = vmul.f32 %v1239, %v1275
        %v1338 = vmul.f32 %v1238, %v1276
        %v1339 = vmul.f32 %v1237, %v1275
        %v1340 = vmul.f32 %v1236, %v1276
        %v1341 = vmul.f32 %v1235, %v1275
        %v1342 = vmul.f32 %v1234, %v1276
        %v1343 = vmul.f32 %v1233, %v1275
        %v1344 = vmul.f32 %v1232, %v1276
        %v1345 = vmul.f32 %v1231, %v1275
        %v1346 = vmul.f32 %v1230, %v1276
        %v1347 = vmul.f32 %v1229, %v1275
        %v1348 = vmul.f32 %v1228, %v1276
        %v1349 = vadd.f32 %v1317, %v1333
        %v1350 = vadd.f32 %v1318, %v1334
        %v1351 = vadd.f32 %v1319, %v1335
        %v1352 = vadd.f32 %v1320, %v1336
        %v1353 = vadd.f32 %v1321, %v1337
        %v1354 = vadd.f32 %v1322, %v1338
        %v1355 = vadd.f32 %v1323, %v1339
        %v1356 = vadd.f32 %v1324, %v1340
        %v1357 = vadd.f32 %v1325, %v1341
        %v1358 = vadd.f32 %v1326, %v1342
        %v1359 = vadd.f32 %v1327, %v1343
        %v1360 = vadd.f32 %v1328, %v1344
        %v1361 = vadd.f32 %v1329, %v1345
        %v1362 = vadd.f32 %v1330, %v1346
        %v1363 = vadd.f32 %v1331, %v1347
        %v1364 = vadd.f32 %v1332, %v1348
        %v1365 = vmul.f32 %v1202, %v1259
        %v1366 = vmul.f32 %v1201, %v1260
        %v1367 = vmul.f32 %v1200, %v1259
        %v1368 = vmul.f32 %v1199, %v1260
        %v1369 = vmul.f32 %v1198, %v1259
        %v1370 = vmul.f32 %v1197, %v1260
        %v1371 = vmul.f32 %v1196, %v1259
        %v1372 = vmul.f32 %v1195, %v1260
        %v1373 = vmul.f32 %v1194, %v1259
        %v1374 = vmul.f32 %v1193, %v1260
        %v1375 = vmul.f32 %v1192, %v1259
        %v1376 = vmul.f32 %v1191, %v1260
        %v1377 = vmul.f32 %v1190, %v1259
        %v1378 = vmul.f32 %v1189, %v1260
        %v1379 = vmul.f32 %v1188, %v1259
        %v1380 = vmul.f32 %v1187, %v1260
        %v1381 = vlaneseq
        %v1382 = vshrl.u32 %v1381, 7
        %v1383 = vsub.s32 1, %v1382
        %v1384 = vrot.slane %v1163, %v1383
        %v1385 = vmul.f32 %v638, %v1384
        %v1386 = vmul.f32 %v644, %v1384
        %v1387 = vmul.f32 %v650, %v1384
        %v1388 = vmul.f32 %v656, %v1384
        %v1389 = vmul.f32 %v662, %v1384
        %v1390 = vmul.f32 %v668, %v1384
        %v1391 = vmul.f32 %v674, %v1384
        %v1392 = vmul.f32 %v680, %v1384
        %v1393 = vmul.f32 %v686, %v1384
        %v1394 = vmul.f32 %v692, %v1384
        %v1395 = vmul.f32 %v698, %v1384
        %v1396 = vmul.f32 %v704, %v1384
        %v1397 = vmul.f32 %v710, %v1384
        %v1398 = vmul.f32 %v716, %v1384
        %v1399 = vmul.f32 %v722, %v1384
        %v1400 = vmul.f32 %v728, %v1384
        %v1401 = vadd.f32 %v1365, %v1385
        %v1402 = vadd.f32 %v1366, %v1386
        %v1403 = vadd.f32 %v1367, %v1387
        %v1404 = vadd.f32 %v1368, %v1388
        %v1405 = vadd.f32 %v1369, %v1389
        %v1406 = vadd.f32 %v1370, %v1390
        %v1407 = vadd.f32 %v1371, %v1391
        %v1408 = vadd.f32 %v1372, %v1392
        %v1409 = vadd.f32 %v1373, %v1393
        %v1410 = vadd.f32 %v1374, %v1394
        %v1411 = vadd.f32 %v1375, %v1395
        %v1412 = vadd.f32 %v1376, %v1396
        %v1413 = vadd.f32 %v1377, %v1397
        %v1414 = vadd.f32 %v1378, %v1398
        %v1415 = vadd.f32 %v1379, %v1399
        %v1416 = vadd.f32 %v1380, %v1400
        %v1417 = vmul.f32 %v1241, %v1277
        %v1418 = vmul.f32 %v1240, %v1278
        %v1419 = vmul.f32 %v1239, %v1277
        %v1420 = vmul.f32 %v1238, %v1278
        %v1421 = vmul.f32 %v1237, %v1277
        %v1422 = vmul.f32 %v1236, %v1278
        %v1423 = vmul.f32 %v1235, %v1277
        %v1424 = vmul.f32 %v1234, %v1278
        %v1425 = vmul.f32 %v1233, %v1277
        %v1426 = vmul.f32 %v1232, %v1278
        %v1427 = vmul.f32 %v1231, %v1277
        %v1428 = vmul.f32 %v1230, %v1278
        %v1429 = vmul.f32 %v1229, %v1277
        %v1430 = vmul.f32 %v1228, %v1278
        %v1431 = vmul.f32 %v1227, %v1277
        %v1432 = vmul.f32 %v1226, %v1278
        %v1433 = vadd.f32 %v1401, %v1417
        %v1434 = vadd.f32 %v1402, %v1418
        %v1435 = vadd.f32 %v1403, %v1419
        %v1436 = vadd.f32 %v1404, %v1420
        %v1437 = vadd.f32 %v1405, %v1421
        %v1438 = vadd.f32 %v1406, %v1422
        %v1439 = vadd.f32 %v1407, %v1423
        %v1440 = vadd.f32 %v1408, %v1424
        %v1441 = vadd.f32 %v1409, %v1425
        %v1442 = vadd.f32 %v1410, %v1426
        %v1443 = vadd.f32 %v1411, %v1427
        %v1444 = vadd.f32 %v1412, %v1428
        %v1445 = vadd.f32 %v1413, %v1429
        %v1446 = vadd.f32 %v1414, %v1430
        %v1447 = vadd.f32 %v1415, %v1431
        %v1448 = vadd.f32 %v1416, %v1432
        %v1449 = vadd.f32 %v1349, %v1433
        %v1450 = vadd.f32 %v1350, %v1434
        %v1451 = vadd.f32 %v1351, %v1435
        %v1452 = vadd.f32 %v1352, %v1436
        %v1453 = vadd.f32 %v1353, %v1437
        %v1454 = vadd.f32 %v1354, %v1438
        %v1455 = vadd.f32 %v1355, %v1439
        %v1456 = vadd.f32 %v1356, %v1440
        %v1457 = vadd.f32 %v1357, %v1441
        %v1458 = vadd.f32 %v1358, %v1442
        %v1459 = vadd.f32 %v1359, %v1443
        %v1460 = vadd.f32 %v1360, %v1444
        %v1461 = vadd.f32 %v1361, %v1445
        %v1462 = vadd.f32 %v1362, %v1446
        %v1463 = vadd.f32 %v1363, %v1447
        %v1464 = vadd.f32 %v1364, %v1448
        %v1465 = vmul.f32 %v1200, %v1261
        %v1466 = vmul.f32 %v1199, %v1262
        %v1467 = vmul.f32 %v1198, %v1261
        %v1468 = vmul.f32 %v1197, %v1262
        %v1469 = vmul.f32 %v1196, %v1261
        %v1470 = vmul.f32 %v1195, %v1262
        %v1471 = vmul.f32 %v1194, %v1261
        %v1472 = vmul.f32 %v1193, %v1262
        %v1473 = vmul.f32 %v1192, %v1261
        %v1474 = vmul.f32 %v1191, %v1262
        %v1475 = vmul.f32 %v1190, %v1261
        %v1476 = vmul.f32 %v1189, %v1262
        %v1477 = vmul.f32 %v1188, %v1261
        %v1478 = vmul.f32 %v1187, %v1262
        %v1479 = vmul.f32 %v1186, %v1261
        %v1480 = vmul.f32 %v1185, %v1262
        %v1481 = vlaneseq
        %v1482 = vshrl.u32 %v1481, 7
        %v1483 = vsub.s32 1, %v1482
        %v1484 = vrot.slane %v1164, %v1483
        %v1485 = vmul.f32 %v650, %v1484
        %v1486 = vmul.f32 %v656, %v1484
        %v1487 = vmul.f32 %v662, %v1484
        %v1488 = vmul.f32 %v668, %v1484
        %v1489 = vmul.f32 %v674, %v1484
        %v1490 = vmul.f32 %v680, %v1484
        %v1491 = vmul.f32 %v686, %v1484
        %v1492 = vmul.f32 %v692, %v1484
        %v1493 = vmul.f32 %v698, %v1484
        %v1494 = vmul.f32 %v704, %v1484
        %v1495 = vmul.f32 %v710, %v1484
        %v1496 = vmul.f32 %v716, %v1484
        %v1497 = vmul.f32 %v722, %v1484
        %v1498 = vmul.f32 %v728, %v1484
        %v1499 = vmul.f32 %v734, %v1484
        %v1500 = vmul.f32 %v740, %v1484
        %v1501 = vadd.f32 %v1465, %v1485
        %v1502 = vadd.f32 %v1466, %v1486
        %v1503 = vadd.f32 %v1467, %v1487
        %v1504 = vadd.f32 %v1468, %v1488
        %v1505 = vadd.f32 %v1469, %v1489
        %v1506 = vadd.f32 %v1470, %v1490
        %v1507 = vadd.f32 %v1471, %v1491
        %v1508 = vadd.f32 %v1472, %v1492
        %v1509 = vadd.f32 %v1473, %v1493
        %v1510 = vadd.f32 %v1474, %v1494
        %v1511 = vadd.f32 %v1475, %v1495
        %v1512 = vadd.f32 %v1476, %v1496
        %v1513 = vadd.f32 %v1477, %v1497
        %v1514 = vadd.f32 %v1478, %v1498
        %v1515 = vadd.f32 %v1479, %v1499
        %v1516 = vadd.f32 %v1480, %v1500
        %v1517 = vmul.f32 %v1239, %v1279
        %v1518 = vmul.f32 %v1238, %v1280
        %v1519 = vmul.f32 %v1237, %v1279
        %v1520 = vmul.f32 %v1236, %v1280
        %v1521 = vmul.f32 %v1235, %v1279
        %v1522 = vmul.f32 %v1234, %v1280
        %v1523 = vmul.f32 %v1233, %v1279
        %v1524 = vmul.f32 %v1232, %v1280
        %v1525 = vmul.f32 %v1231, %v1279
        %v1526 = vmul.f32 %v1230, %v1280
        %v1527 = vmul.f32 %v1229, %v1279
        %v1528 = vmul.f32 %v1228, %v1280
        %v1529 = vmul.f32 %v1227, %v1279
        %v1530 = vmul.f32 %v1226, %v1280
        %v1531 = vmul.f32 %v1225, %v1279
        %v1532 = vmul.f32 %v1244, %v1280
        %v1533 = vadd.f32 %v1501, %v1517
        %v1534 = vadd.f32 %v1502, %v1518
        %v1535 = vadd.f32 %v1503, %v1519
        %v1536 = vadd.f32 %v1504, %v1520
        %v1537 = vadd.f32 %v1505, %v1521
        %v1538 = vadd.f32 %v1506, %v1522
        %v1539 = vadd.f32 %v1507, %v1523
        %v1540 = vadd.f32 %v1508, %v1524
        %v1541 = vadd.f32 %v1509, %v1525
        %v1542 = vadd.f32 %v1510, %v1526
        %v1543 = vadd.f32 %v1511, %v1527
        %v1544 = vadd.f32 %v1512, %v1528
        %v1545 = vadd.f32 %v1513, %v1529
        %v1546 = vadd.f32 %v1514, %v1530
        %v1547 = vadd.f32 %v1515, %v1531
        %v1548 = vadd.f32 %v1516, %v1532
        %v1549 = vadd.f32 %v1449, %v1533
        %v1550 = vadd.f32 %v1450, %v1534
        %v1551 = vadd.f32 %v1451, %v1535
        %v1552 = vadd.f32 %v1452, %v1536
        %v1553 = vadd.f32 %v1453, %v1537
        %v1554 = vadd.f32 %v1454, %v1538
        %v1555 = vadd.f32 %v1455, %v1539
        %v1556 = vadd.f32 %v1456, %v1540
        %v1557 = vadd.f32 %v1457, %v1541
        %v1558 = vadd.f32 %v1458, %v1542
        %v1559 = vadd.f32 %v1459, %v1543
        %v1560 = vadd.f32 %v1460, %v1544
        %v1561 = vadd.f32 %v1461, %v1545
        %v1562 = vadd.f32 %v1462, %v1546
        %v1563 = vadd.f32 %v1463, %v1547
        %v1564 = vadd.f32 %v1464, %v1548
        %v1565 = vmul.f32 %v1146, 0.70710677
        %v1566 = vmul.f32 %v1147, 0.70710677
        %v1567 = vmul.f32 %v1148, 0.70710677
        %v1568 = vmul.f32 %v1149, 0.70710677
        %v1569 = vmul.f32 %v1150, 0.70710677
        %v1570 = vmul.f32 %v1151, 0.70710677
        %v1571 = vmul.f32 %v1152, 0.70710677
        %v1572 = vmul.f32 %v1153, 0.70710677
        %v1573 = vmul.f32 %v1154, 0.70710677
        %v1574 = vmul.f32 %v1155, 0.70710677
        %v1575 = vmul.f32 %v1156, 0.70710677
        %v1576 = vmul.f32 %v1157, 0.70710677
        %v1577 = vmul.f32 %v1158, 0.70710677
        %v1578 = vmul.f32 %v1159, 0.70710677
        %v1579 = vmul.f32 %v1160, 0.70710677
        %v1580 = vmul.f32 %v1161, 0.70710677
        %v1581 = verf.f32.pop %v1565
        %v1582 = verf.f32.pop %v1566
        %v1583 = verf.f32.pop %v1567
        %v1584 = verf.f32.pop %v1568
        %v1585 = verf.f32.pop %v1569
        %v1586 = verf.f32.pop %v1570
        %v1587 = verf.f32.pop %v1571
        %v1588 = verf.f32.pop %v1572
        %v1589 = verf.f32.pop %v1573
        %v1590 = verf.f32.pop %v1574
        %v1591 = verf.f32.pop %v1575
        %v1592 = verf.f32.pop %v1576
        %v1593 = verf.f32.pop %v1577
        %v1594 = verf.f32.pop %v1578
        %v1595 = verf.f32.pop %v1579
        %v1596 = verf.f32.pop %v1580
        %v1597 = vadd.f32 %v1581, 1.0
        %v1598 = vadd.f32 %v1582, 1.0
        %v1599 = vadd.f32 %v1583, 1.0
        %v1600 = vadd.f32 %v1584, 1.0
        %v1601 = vadd.f32 %v1585, 1.0
        %v1602 = vadd.f32 %v1586, 1.0
        %v1603 = vadd.f32 %v1587, 1.0
        %v1604 = vadd.f32 %v1588, 1.0
        %v1605 = vadd.f32 %v1589, 1.0
        %v1606 = vadd.f32 %v1590, 1.0
        %v1607 = vadd.f32 %v1591, 1.0
        %v1608 = vadd.f32 %v1592, 1.0
        %v1609 = vadd.f32 %v1593, 1.0
        %v1610 = vadd.f32 %v1594, 1.0
        %v1611 = vadd.f32 %v1595, 1.0
        %v1612 = vadd.f32 %v1596, 1.0
        %v1613 = vmul.f32 %v1146, %v1597
        %v1614 = vmul.f32 %v1147, %v1598
        %v1615 = vmul.f32 %v1148, %v1599
        %v1616 = vmul.f32 %v1149, %v1600
        %v1617 = vmul.f32 %v1150, %v1601
        %v1618 = vmul.f32 %v1151, %v1602
        %v1619 = vmul.f32 %v1152, %v1603
        %v1620 = vmul.f32 %v1153, %v1604
        %v1621 = vmul.f32 %v1154, %v1605
        %v1622 = vmul.f32 %v1155, %v1606
        %v1623 = vmul.f32 %v1156, %v1607
        %v1624 = vmul.f32 %v1157, %v1608
        %v1625 = vmul.f32 %v1158, %v1609
        %v1626 = vmul.f32 %v1159, %v1610
        %v1627 = vmul.f32 %v1160, %v1611
        %v1628 = vmul.f32 %v1161, %v1612
        %v1629 = vmul.f32 %v1613, %v1549
        %v1630 = vmul.f32 %v1614, %v1550
        %v1631 = vmul.f32 %v1615, %v1551
        %v1632 = vmul.f32 %v1616, %v1552
        %v1633 = vmul.f32 %v1617, %v1553
        %v1634 = vmul.f32 %v1618, %v1554
        %v1635 = vmul.f32 %v1619, %v1555
        %v1636 = vmul.f32 %v1620, %v1556
        %v1637 = vmul.f32 %v1621, %v1557
        %v1638 = vmul.f32 %v1622, %v1558
        %v1639 = vmul.f32 %v1623, %v1559
        %v1640 = vmul.f32 %v1624, %v1560
        %v1641 = vmul.f32 %v1625, %v1561
        %v1642 = vmul.f32 %v1626, %v1562
        %v1643 = vmul.f32 %v1627, %v1563
        %v1644 = vmul.f32 %v1628, %v1564
        %v1645 = vld [vmem:[#allocation13] sm:$0xff]
        %v1646 = vld [vmem:[#allocation13 + $0x8] sm:$0xff]
        %v1647 = vld [vmem:[#allocation13 + $0x10] sm:$0xff]
        %v1648 = vld [vmem:[#allocation13 + $0x18] sm:$0xff]
        %v1649 = vld [vmem:[#allocation13 + $0x20] sm:$0xff]
        %v1650 = vld [vmem:[#allocation13 + $0x28] sm:$0xff]
        %v1651 = vld [vmem:[#allocation13 + $0x30] sm:$0xff]
        %v1652 = vld [vmem:[#allocation13 + $0x38] sm:$0xff]
        %v1653 = vld [vmem:[#allocation13 + $0x40] sm:$0xff]
        %v1654 = vld [vmem:[#allocation13 + $0x48] sm:$0xff]
        %v1655 = vld [vmem:[#allocation13 + $0x50] sm:$0xff]
        %v1656 = vld [vmem:[#allocation13 + $0x58] sm:$0xff]
        %v1657 = vld [vmem:[#allocation13 + $0x60] sm:$0xff]
        %v1658 = vld [vmem:[#allocation13 + $0x68] sm:$0xff]
        %v1659 = vld [vmem:[#allocation13 + $0x70] sm:$0xff]
        %v1660 = vld [vmem:[#allocation13 + $0x78] sm:$0xff]
        %1661 = vmatprep.subr.mxu0 0.0
        %1662 = vmatpush1.msra.mxu0 %v1660
        %1663 = vmatprep.subr.mxu0 0.0
        %1664 = vmatpush1.msra.mxu0 %v1659
        %1665 = vmatprep.subr.mxu0 0.0
        %1666 = vmatpush1.msra.mxu0 %v1658
        %1667 = vmatprep.subr.mxu0 0.0
        %1668 = vmatpush1.msra.mxu0 %v1657
        %1669 = vmatprep.subr.mxu0 0.0
        %1670 = vmatpush1.msra.mxu0 %v1656
        %1671 = vmatprep.subr.mxu0 0.0
        %1672 = vmatpush1.msra.mxu0 %v1655
        %1673 = vmatprep.subr.mxu0 0.0
        %1674 = vmatpush1.msra.mxu0 %v1654
        %1675 = vmatprep.subr.mxu0 0.0
        %1676 = vmatpush1.msra.mxu0 %v1653
        %1677 = vmatprep.subr.mxu0 0.0
        %1678 = vmatpush1.msra.mxu0 %v1652
        %1679 = vmatprep.subr.mxu0 0.0
        %1680 = vmatpush1.msra.mxu0 %v1651
        %1681 = vmatprep.subr.mxu0 0.0
        %1682 = vmatpush1.msra.mxu0 %v1650
        %1683 = vmatprep.subr.mxu0 0.0
        %1684 = vmatpush1.msra.mxu0 %v1649
        %1685 = vmatprep.subr.mxu0 0.0
        %1686 = vmatpush1.msra.mxu0 %v1648
        %1687 = vmatprep.subr.mxu0 0.0
        %1688 = vmatpush1.msra.mxu0 %v1647
        %1689 = vmatprep.subr.mxu0 0.0
        %1690 = vmatpush1.msra.mxu0 %v1646
        %1691 = vmatprep.subr.mxu0 0.0
        %1692 = vmatpush1.msra.mxu0 %v1645
        %1693 = vmatprep.subr.mxu0 0.0
        %1694 = vmatpush2.msra.mxu0 0.0
        %1695 = vmatprep.subr.mxu0 0.0
        %1696 = vmatpush2.msra.mxu0 0.0
        %1697 = vmatprep.subr.mxu0 0.0
        %1698 = vmatpush2.msra.mxu0 0.0
        %1699 = vmatprep.subr.mxu0 0.0
        %1700 = vmatpush2.msra.mxu0 0.0
        %1701 = vmatprep.subr.mxu0 0.0
        %1702 = vmatpush2.msra.mxu0 0.0
        %1703 = vmatprep.subr.mxu0 0.0
        %1704 = vmatpush2.msra.mxu0 0.0
        %1705 = vmatprep.subr.mxu0 0.0
        %1706 = vmatpush2.msra.mxu0 0.0
        %1707 = vmatprep.subr.mxu0 0.0
        %1708 = vmatpush2.msra.mxu0 0.0
        %1709 = vmatprep.subr.mxu0 0.0
        %1710 = vmatpush2.msra.mxu0 0.0
        %1711 = vmatprep.subr.mxu0 0.0
        %1712 = vmatpush2.msra.mxu0 0.0
        %1713 = vmatprep.subr.mxu0 0.0
        %1714 = vmatpush2.msra.mxu0 0.0
        %1715 = vmatprep.subr.mxu0 0.0
        %1716 = vmatpush2.msra.mxu0 0.0
        %1717 = vmatprep.subr.mxu0 0.0
        %1718 = vmatpush2.msra.mxu0 0.0
        %1719 = vmatprep.subr.mxu0 0.0
        %1720 = vmatpush2.msra.mxu0 0.0
        %1721 = vmatprep.subr.mxu0 0.0
        %1722 = vmatpush2.msra.mxu0 0.0
        %1723 = vmatprep.subr.mxu0 0.0
        %1724 = vmatpush2.msra.mxu0 0.0
        %1725 = vmatprep.mubr.f32.mxu0 0.0
        %1726 = vmatmul.mubr.f32.gmra.mxu0 %v1629
        %v1727 = vpop.f32.mrf.mxu0
        %v1728 = vadd.f32 0.0, %v1727
        %v1729 = vpop.f32.mrf.mxu0
        %1730 = vmatprep.mubr.f32.mxu0 0.0
        %1731 = vmatmul.mubr.f32.gmra.mxu0 %v1630
        %v1732 = vpop.f32.mrf.mxu0
        %v1733 = vadd.f32 0.0, %v1732
        %v1734 = vpop.f32.mrf.mxu0
        %1735 = vmatprep.mubr.f32.mxu0 0.0
        %1736 = vmatmul.mubr.f32.gmra.mxu0 %v1631
        %v1737 = vpop.f32.mrf.mxu0
        %v1738 = vadd.f32 0.0, %v1737
        %v1739 = vpop.f32.mrf.mxu0
        %1740 = vmatprep.mubr.f32.mxu0 0.0
        %1741 = vmatmul.mubr.f32.gmra.mxu0 %v1632
        %v1742 = vpop.f32.mrf.mxu0
        %v1743 = vadd.f32 0.0, %v1742
        %v1744 = vpop.f32.mrf.mxu0
        %1745 = vmatprep.mubr.f32.mxu0 0.0
        %1746 = vmatmul.mubr.f32.gmra.mxu0 %v1633
        %v1747 = vpop.f32.mrf.mxu0
        %v1748 = vadd.f32 0.0, %v1747
        %v1749 = vpop.f32.mrf.mxu0
        %1750 = vmatprep.mubr.f32.mxu0 0.0
        %1751 = vmatmul.mubr.f32.gmra.mxu0 %v1634
        %v1752 = vpop.f32.mrf.mxu0
        %v1753 = vadd.f32 0.0, %v1752
        %v1754 = vpop.f32.mrf.mxu0
        %1755 = vmatprep.mubr.f32.mxu0 0.0
        %1756 = vmatmul.mubr.f32.gmra.mxu0 %v1635
        %v1757 = vpop.f32.mrf.mxu0
        %v1758 = vadd.f32 0.0, %v1757
        %v1759 = vpop.f32.mrf.mxu0
        %1760 = vmatprep.mubr.f32.mxu0 0.0
        %1761 = vmatmul.mubr.f32.gmra.mxu0 %v1636
        %v1762 = vpop.f32.mrf.mxu0
        %v1763 = vadd.f32 0.0, %v1762
        %v1764 = vpop.f32.mrf.mxu0
        %1765 = vmatprep.mubr.f32.mxu0 0.0
        %1766 = vmatmul.mubr.f32.gmra.mxu0 %v1637
        %v1767 = vpop.f32.mrf.mxu0
        %v1768 = vadd.f32 0.0, %v1767
        %v1769 = vpop.f32.mrf.mxu0
        %1770 = vmatprep.mubr.f32.mxu0 0.0
        %1771 = vmatmul.mubr.f32.gmra.mxu0 %v1638
        %v1772 = vpop.f32.mrf.mxu0
        %v1773 = vadd.f32 0.0, %v1772
        %v1774 = vpop.f32.mrf.mxu0
        %1775 = vmatprep.mubr.f32.mxu0 0.0
        %1776 = vmatmul.mubr.f32.gmra.mxu0 %v1639
        %v1777 = vpop.f32.mrf.mxu0
        %v1778 = vadd.f32 0.0, %v1777
        %v1779 = vpop.f32.mrf.mxu0
        %1780 = vmatprep.mubr.f32.mxu0 0.0
        %1781 = vmatmul.mubr.f32.gmra.mxu0 %v1640
        %v1782 = vpop.f32.mrf.mxu0
        %v1783 = vadd.f32 0.0, %v1782
        %v1784 = vpop.f32.mrf.mxu0
        %1785 = vmatprep.mubr.f32.mxu0 0.0
        %1786 = vmatmul.mubr.f32.gmra.mxu0 %v1641
        %v1787 = vpop.f32.mrf.mxu0
        %v1788 = vadd.f32 0.0, %v1787
        %v1789 = vpop.f32.mrf.mxu0
        %1790 = vmatprep.mubr.f32.mxu0 0.0
        %1791 = vmatmul.mubr.f32.gmra.mxu0 %v1642
        %v1792 = vpop.f32.mrf.mxu0
        %v1793 = vadd.f32 0.0, %v1792
        %v1794 = vpop.f32.mrf.mxu0
        %1795 = vmatprep.mubr.f32.mxu0 0.0
        %1796 = vmatmul.mubr.f32.gmra.mxu0 %v1643
        %v1797 = vpop.f32.mrf.mxu0
        %v1798 = vadd.f32 0.0, %v1797
        %v1799 = vpop.f32.mrf.mxu0
        %1800 = vmatprep.mubr.f32.mxu0 0.0
        %1801 = vmatmul.mubr.f32.gmra.mxu0 %v1644
        %v1802 = vpop.f32.mrf.mxu0
        %v1803 = vadd.f32 0.0, %v1802
        %v1804 = vpop.f32.mrf.mxu0
        %1805 = vdwg.mxu0
        %1806 = vst [vmem:[%s482] sm:$0xff] %v1728
        %1807 = vst [vmem:[%s482 + $0x8] sm:$0xff] %v1733
        %1808 = vst [vmem:[%s482 + $0x10] sm:$0xff] %v1738
        %1809 = vst [vmem:[%s482 + $0x18] sm:$0xff] %v1743
        %1810 = vst [vmem:[%s482 + $0x20] sm:$0xff] %v1748
        %1811 = vst [vmem:[%s482 + $0x28] sm:$0xff] %v1753
        %1812 = vst [vmem:[%s482 + $0x30] sm:$0xff] %v1758
        %1813 = vst [vmem:[%s482 + $0x38] sm:$0xff] %v1763
        %1814 = vst [vmem:[%s482 + $0x40] sm:$0xff] %v1768
        %1815 = vst [vmem:[%s482 + $0x48] sm:$0xff] %v1773
        %1816 = vst [vmem:[%s482 + $0x50] sm:$0xff] %v1778
        %1817 = vst [vmem:[%s482 + $0x58] sm:$0xff] %v1783
        %1818 = vst [vmem:[%s482 + $0x60] sm:$0xff] %v1788
        %1819 = vst [vmem:[%s482 + $0x68] sm:$0xff] %v1793
        %1820 = vst [vmem:[%s482 + $0x70] sm:$0xff] %v1798
        %1821 = vst [vmem:[%s482 + $0x78] sm:$0xff] %v1803
        %s1822 = sand.u32 %s235, 1
        %s1823 = scalar_lea.sflag [#allocation4], %s1822
        %s1824 = sand.u32 %s235, 1
        %s1825 = smul.addr %s1824, 128
        %s1826 = scalar_lea.vmem [#allocation14], %s1825
        // Predicated region
        $region77: #{tpu_custom_call.1} parent=47 // pred_check
          %p1827 = pneg %p245
        $region78: #{tpu_custom_call.1} parent=47 // pred_check_branch
          %1829 = sbr.rel (%p1827) target = $region80
        $region79: #{tpu_custom_call.1} parent=47 // pred_region
          %s1830 = smul.u32 8, %s34
          %s1832 = ssub.s32 2048, 2048
          %1833 = vsyncadd %s1823, %s1832
          %s1834 = smul.addr %s1830, 2
          %s1835 = smul.addr %s33, 32
          %s1836 = sadd.s32 %s1834, %s1835
          %s1837 = smul.addr %s1836, 128
          %s1838 = scalar_lea.hbm %s7, %s1837
          %s1839 = sshll.u32 %s1826, 4
          %s1840 = int_to_ptr.vmem [resolvable:$true] %s1839
          %1845 = dma.vmem_to_hbm [thread:$0]  %s1840, 2048, %s1838, %s1823, 128, 128, 8
        $region80: #{tpu_custom_call.1} parent=47 // pred_fallthru
          _
      $region48: #{tpu_custom_call.1} parent=5 // pred_fallthru
        _
      %p1846 = scmp.le.s32.totalorder 2, %s24
      // Predicated region
      $region81: #{tpu_custom_call.1} parent=5 // pred_check
        %p1847 = pneg %p1846
      $region82: #{tpu_custom_call.1} parent=5 // pred_check_branch
        %1849 = sbr.rel (%p1847) target = $region84
      $region83: #{tpu_custom_call.1} parent=5 // pred_region
        %s1850 = ssub.s32 %s24, 2
        // Predicated region
        $region85: #{tpu_custom_call.1} parent=83 // pred_check
          %p1851 = pneg %p251
        $region86: #{tpu_custom_call.1} parent=83 // pred_check_branch
          %1853 = sbr.rel (%p1851) target = $region88
        $region87: #{tpu_custom_call.1} parent=83 // pred_region
          %s1854 = sand.u32 %s236, 1
          %s1855 = scalar_lea.sflag [#allocation4], %s1854
          %s1856 = sand.u32 %s236, 1
          %s1857 = smul.addr %s1856, 128
          %s1858 = scalar_lea.vmem [#allocation14], %s1857
          %1859 = dma.done %s1855, 2048
        $region88: #{tpu_custom_call.1} parent=83 // pred_fallthru
          _
      $region84: #{tpu_custom_call.1} parent=5 // pred_fallthru
        _
    $region6: #{tpu_custom_call.1} parent=1 // loop_footer
      %s28 = sadd.s32 1, %s24
    $region7: #{tpu_custom_call.1} parent=1 // loop_footer_branch
      %23 = sbr.rel target = $region3
    $region8: #{tpu_custom_call.1} parent=1 // loop_exit
      _
    %1860 = vsyncpa [#allocation3], 1
    %s1861 = scalar_lea.sflag [#allocation3], 1
    %1862 = vsyncpa %s1861, 1
    %1863 = vsyncpa [#allocation6], 1
    %s1864 = scalar_lea.sflag [#allocation6], 1
    %1865 = vsyncpa %s1864, 1
    %1866 = vsyncpa [#allocation9], 1
    %1867 = vsyncpa [#allocation12], 1
    %1868 = vsyncpa [#allocation4], 1
    %s1869 = scalar_lea.sflag [#allocation4], 1
    %1870 = vsyncpa %s1869, 1

// kernel: tpu_custom_call.1
$region0: #{tpu_custom_call.1}
  #allocation0 [shape = 'u32[]', space=smem, size = 0x4, offset = 0x4, fixed_abs, tag = 'smem constant byte address 0x4 - core index']
  #allocation1 [shape = 'u32[144,128]{1,0:T(1,128)}', space=vmem, size = 0x12000, scoped, tag = 'internal scratch']
  %s0 = inlined_call_operand.hbm [shape: f32[2,16,16,128], index: 0, kind: input, shape index: {}]
  %s1 = inlined_call_operand.hbm [shape: f32[2,16,16,128], index: 1, kind: input, shape index: {}]
  %s2 = inlined_call_operand.hbm [shape: f32[2,16,16,128], index: 2, kind: input, shape index: {}]
  %s3 = inlined_call_operand.hbm [shape: f32[128,256], index: 3, kind: input, shape index: {}]
  %s4 = inlined_call_operand.hbm [shape: f32[3,3,128], index: 4, kind: input, shape index: {}]
  %s5 = inlined_call_operand.hbm [shape: f32[3,3,128], index: 5, kind: input, shape index: {}]
  %s6 = inlined_call_operand.hbm [shape: f32[128,128], index: 6, kind: input, shape index: {}]
  %s7 = inlined_call_operand.hbm [shape: f32[2,16,16,128], index: 7, kind: output, shape index: {}]
  %s8 = sld [smem:[#allocation0]]
  $region89: #{tpu_custom_call.1} parent=0
    _
  %s10 = ssub.s32 1, %s8
  %s11 = scalar_select 0, %s10, %s8
  $region1: #{tpu_custom_call.1} parent=0
    #allocation2 [shape = 'u8[131072]{0}', space=vmem, size = 0x20000, scoped, tag = 'input window, operand 0']
    #allocation3 [shape = 's32[2]{0}', space=sflag, size = 0x8, scoped, tag = 'scoped memory for tpu_custom_call.1']
    #allocation4 [shape = 's32[2]{0}', space=sflag, size = 0x8, scoped, tag = 'scoped memory for tpu_custom_call.1']
    #allocation5 [shape = 'u8[16384]{0}', space=vmem, size = 0x4000, scoped, tag = 'input window, operand 1']
    #allocation6 [shape = 's32[2]{0}', space=sflag, size = 0x8, scoped, tag = 'scoped memory for tpu_custom_call.1']
    #allocation7 [shape = 'u8[16384]{0}', space=vmem, size = 0x4000, scoped, tag = 'input window, operand 2']
    #allocation8 [shape = 'u8[131072]{0}', space=vmem, size = 0x20000, scoped, tag = 'input window, operand 3, single buffered']
    #allocation9 [shape = 's32[1]{0}', space=sflag, size = 0x4, scoped, tag = 'scoped memory for tpu_custom_call.1']
    #allocation10 [shape = 'u8[6144]{0}', space=vmem, size = 0x1800, scoped, tag = 'input window, operand 4, single buffered']
    #allocation11 [shape = 'u8[6144]{0}', space=vmem, size = 0x1800, scoped, tag = 'input window, operand 5, single buffered']
    #allocation12 [shape = 's32[1]{0}', space=sflag, size = 0x4, scoped, tag = 'scoped memory for tpu_custom_call.1']
    #allocation13 [shape = 'u8[65536]{0}', space=vmem, size = 0x10000, scoped, tag = 'input window, operand 6, single buffered']
    #allocation14 [shape = 'u8[131072]{0}', space=vmem, size = 0x20000, scoped, tag = 'output window, operand 0']
    %12 = vsyncpa [#allocation3], 0
    %s13 = scalar_lea.sflag [#allocation3], 1
    %14 = vsyncpa %s13, 0
    %15 = vsyncpa [#allocation6], 0
    %s16 = scalar_lea.sflag [#allocation6], 1
    %17 = vsyncpa %s16, 0
    %18 = vsyncpa [#allocation9], 0
    %19 = vsyncpa [#allocation12], 0
    %20 = vsyncpa [#allocation4], 0
    %s21 = scalar_lea.sflag [#allocation4], 1
    %22 = vsyncpa %s21, 0
    loop: start=0, step=1, limit=6
    $region2: #{tpu_custom_call.1} parent=1 // loop_pre_header
      _
    $region3: #{tpu_custom_call.1} parent=1 // loop_header
      %s24 = sphi 0, %s28
      %p25 = scmp.ge.s32.totalorder %s24, 6
      %s31 = sphi 0, %s43
      %s32 = sphi 0, %s39
      %s33 = sphi 0, %s31
      %s34 = sphi 0, %s32
      %s35 = sphi 0, %s33
      %s36 = sphi 0, %s34
      %s48 = sphi 0, %s50
      %s51 = sphi 0, %s48
      %s52 = sphi 0, %s51
      %s68 = sphi 0, %s52
      %s84 = sphi 0, %s86
      %s87 = sphi 0, %s84
      %s88 = sphi 0, %s87
      %s104 = sphi 0, %s88
      %s120 = sphi 0, %s122
      %s123 = sphi 0, %s120
      %s124 = sphi 0, %s123
      %s140 = sphi 0, %s124
      %s144 = sphi 0, %s144
      %s146 = sphi 0, %s144
      %s147 = sphi 0, %s146
      %s161 = sphi 0, %s147
      %s165 = sphi 0, %s165
      %s167 = sphi 0, %s165
      %s168 = sphi 0, %s167
      %s182 = sphi 0, %s168
      %s186 = sphi 0, %s186
      %s188 = sphi 0, %s186
      %s189 = sphi 0, %s188
      %s203 = sphi 0, %s189
      %s207 = sphi 0, %s207
      %s209 = sphi 0, %s207
      %s210 = sphi 0, %s209
      %s224 = sphi 0, %s210
      %s232 = sphi 0, %s234
      %s235 = sphi 0, %s232
      %s236 = sphi 0, %s235
      %s252 = sphi 0, %s236
    $region4: #{tpu_custom_call.1} parent=1 // loop_header_branch
      %27 = sbr.rel (%p25) target = $region8
    $region5: #{tpu_custom_call.1} parent=1 // loop_body
      %s29 = ssub.s32 %s24, 1
      %s30 = ssub.s32 %s24, 2
      %s37 = sadd.s32 1, %s32
      %p38 = scmp.ge.s32.totalorder %s37, 2
      %s39 = scalar_select %p38, 0, %s37
      %s40 = sadd.s32 1, %s31
      %s41 = scalar_select %p38, %s40, %s31
      %p42 = scmp.ge.s32.totalorder %s41, 2
      %s43 = scalar_select %p42, 0, %s41
      %s44 = ssub.s32 %s31, %s43
      %s45 = ssub.s32 %s32, %s39
      %s46 = sor.u32 %s44, %s45
      %p47 = scmp.eq.s32.totalorder %s46, 0
      %s49 = sadd.s32 %s48, 1
      %s50 = scalar_select %p47, %s48, %s49
      %p53 = pneg %p47
      %p54 = scmp.eq.s32.totalorder %s24, 3
      %p55 = por %p53, %p54
      %p56 = scmp.ne.s32.totalorder %s48, %s51
      %p57 = scmp.eq.s32.totalorder %s24, 0
      %p58 = por %p56, %p57
      %p59 = scmp.ne.s32.totalorder %s48, %s51
      %p60 = scmp.eq.s32.totalorder %s29, 3
      %p61 = por %p59, %p60
      %p62 = scmp.ne.s32.totalorder %s51, %s52
      %p63 = scmp.eq.s32.totalorder %s29, 0
      %p64 = por %p62, %p63
      %p65 = scmp.ne.s32.totalorder %s51, %s52
      %p66 = scmp.eq.s32.totalorder %s30, 3
      %p67 = por %p65, %p66
      %p69 = scmp.ne.s32.totalorder %s52, %s68
      %p70 = scmp.eq.s32.totalorder %s30, 0
      %p71 = por %p69, %p70
      %s72 = smul.u32 %s32, 8
      %s73 = ssub.s32 %s72, 1
      %p74 = scmp.gt.s32.totalorder %s73, 0
      %s75 = scalar_select %p74, %s73, 0
      %s76 = smul.u32 %s39, 8
      %s77 = ssub.s32 %s76, 1
      %p78 = scmp.gt.s32.totalorder %s77, 0
      %s79 = scalar_select %p78, %s77, 0
      %s80 = ssub.s32 %s31, %s43
      %s81 = ssub.s32 %s75, %s79
      %s82 = sor.u32 %s80, %s81
      %p83 = scmp.eq.s32.totalorder %s82, 0
      %s85 = sadd.s32 %s84, 1
      %s86 = scalar_select %p83, %s84, %s85
      %p89 = pneg %p83
      %p90 = scmp.eq.s32.totalorder %s24, 3
      %p91 = por %p89, %p90
      %p92 = scmp.ne.s32.totalorder %s84, %s87
      %p93 = scmp.eq.s32.totalorder %s24, 0
      %p94 = por %p92, %p93
      %p95 = scmp.ne.s32.totalorder %s84, %s87
      %p96 = scmp.eq.s32.totalorder %s29, 3
      %p97 = por %p95, %p96
      %p98 = scmp.ne.s32.totalorder %s87, %s88
      %p99 = scmp.eq.s32.totalorder %s29, 0
      %p100 = por %p98, %p99
      %p101 = scmp.ne.s32.totalorder %s87, %s88
      %p102 = scmp.eq.s32.totalorder %s30, 3
      %p103 = por %p101, %p102
      %p105 = scmp.ne.s32.totalorder %s88, %s104
      %p106 = scmp.eq.s32.totalorder %s30, 0
      %p107 = por %p105, %p106
      %s108 = sadd.s32 %s32, 1
      %s109 = smul.u32 %s108, 8
      %p110 = scmp.lt.s32.totalorder %s109, 15
      %s111 = scalar_select %p110, %s109, 15
      %s112 = sadd.s32 %s39, 1
      %s113 = smul.u32 %s112, 8
      %p114 = scmp.lt.s32.totalorder %s113, 15
      %s115 = scalar_select %p114, %s113, 15
      %s116 = ssub.s32 %s31, %s43
      %s117 = ssub.s32 %s111, %s115
      %s118 = sor.u32 %s116, %s117
      %p119 = scmp.eq.s32.totalorder %s118, 0
      %s121 = sadd.s32 %s120, 1
      %s122 = scalar_select %p119, %s120, %s121
      %p125 = pneg %p119
      %p126 = scmp.eq.s32.totalorder %s24, 3
      %p127 = por %p125, %p126
      %p128 = scmp.ne.s32.totalorder %s120, %s123
      %p129 = scmp.eq.s32.totalorder %s24, 0
      %p130 = por %p128, %p129
      %p131 = scmp.ne.s32.totalorder %s120, %s123
      %p132 = scmp.eq.s32.totalorder %s29, 3
      %p133 = por %p131, %p132
      %p134 = scmp.ne.s32.totalorder %s123, %s124
      %p135 = scmp.eq.s32.totalorder %s29, 0
      %p136 = por %p134, %p135
      %p137 = scmp.ne.s32.totalorder %s123, %s124
      %p138 = scmp.eq.s32.totalorder %s30, 3
      %p139 = por %p137, %p138
      %p141 = scmp.ne.s32.totalorder %s124, %s140
      %p142 = scmp.eq.s32.totalorder %s30, 0
      %p143 = por %p141, %p142
      %s145 = sadd.s32 %s144, 1
      %p148 = scmp.eq.s32.totalorder %s24, 3
      %p149 = scmp.ne.s32.totalorder %s144, %s146
      %p150 = scmp.eq.s32.totalorder %s24, 0
      %p151 = por %p149, %p150
      %p152 = scmp.ne.s32.totalorder %s144, %s146
      %p153 = scmp.eq.s32.totalorder %s29, 3
      %p154 = por %p152, %p153
      %p155 = scmp.ne.s32.totalorder %s146, %s147
      %p156 = scmp.eq.s32.totalorder %s29, 0
      %p157 = por %p155, %p156
      %p158 = scmp.ne.s32.totalorder %s146, %s147
      %p159 = scmp.eq.s32.totalorder %s30, 3
      %p160 = por %p158, %p159
      %p162 = scmp.ne.s32.totalorder %s147, %s161
      %p163 = scmp.eq.s32.totalorder %s30, 0
      %p164 = por %p162, %p163
      %s166 = sadd.s32 %s165, 1
      %p169 = scmp.eq.s32.totalorder %s24, 3
      %p170 = scmp.ne.s32.totalorder %s165, %s167
      %p171 = scmp.eq.s32.totalorder %s24, 0
      %p172 = por %p170, %p171
      %p173 = scmp.ne.s32.totalorder %s165, %s167
      %p174 = scmp.eq.s32.totalorder %s29, 3
      %p175 = por %p173, %p174
      %p176 = scmp.ne.s32.totalorder %s167, %s168
      %p177 = scmp.eq.s32.totalorder %s29, 0
      %p178 = por %p176, %p177
      %p179 = scmp.ne.s32.totalorder %s167, %s168
      %p180 = scmp.eq.s32.totalorder %s30, 3
      %p181 = por %p179, %p180
      %p183 = scmp.ne.s32.totalorder %s168, %s182
      %p184 = scmp.eq.s32.totalorder %s30, 0
      %p185 = por %p183, %p184
      %s187 = sadd.s32 %s186, 1
      %p190 = scmp.eq.s32.totalorder %s24, 3
      %p191 = scmp.ne.s32.totalorder %s186, %s188
      %p192 = scmp.eq.s32.totalorder %s24, 0
      %p193 = por %p191, %p192
      %p194 = scmp.ne.s32.totalorder %s186, %s188
      %p195 = scmp.eq.s32.totalorder %s29, 3
      %p196 = por %p194, %p195
      %p197 = scmp.ne.s32.totalorder %s188, %s189
      %p198 = scmp.eq.s32.totalorder %s29, 0
      %p199 = por %p197, %p198
      %p200 = scmp.ne.s32.totalorder %s188, %s189
      %p201 = scmp.eq.s32.totalorder %s30, 3
      %p202 = por %p200, %p201
      %p204 = scmp.ne.s32.totalorder %s189, %s203
      %p205 = scmp.eq.s32.totalorder %s30, 0
      %p206 = por %p204, %p205
      %s208 = sadd.s32 %s207, 1
      %p211 = scmp.eq.s32.totalorder %s24, 3
      %p212 = scmp.ne.s32.totalorder %s207, %s209
      %p213 = scmp.eq.s32.totalorder %s24, 0
      %p214 = por %p212, %p213
      %p215 = scmp.ne.s32.totalorder %s207, %s209
      %p216 = scmp.eq.s32.totalorder %s29, 3
      %p217 = por %p215, %p216
      %p218 = scmp.ne.s32.totalorder %s209, %s210
      %p219 = scmp.eq.s32.totalorder %s29, 0
      %p220 = por %p218, %p219
      %p221 = scmp.ne.s32.totalorder %s209, %s210
      %p222 = scmp.eq.s32.totalorder %s30, 3
      %p223 = por %p221, %p222
      %p225 = scmp.ne.s32.totalorder %s210, %s224
      %p226 = scmp.eq.s32.totalorder %s30, 0
      %p227 = por %p225, %p226
      %s228 = ssub.s32 %s31, %s43
      %s229 = ssub.s32 %s32, %s39
      %s230 = sor.u32 %s228, %s229
      %p231 = scmp.eq.s32.totalorder %s230, 0
      %s233 = sadd.s32 %s232, 1
      %s234 = scalar_select %p231, %s232, %s233
      %p237 = pneg %p231
      %p238 = scmp.eq.s32.totalorder %s24, 3
      %p239 = por %p237, %p238
      %p240 = scmp.ne.s32.totalorder %s232, %s235
      %p241 = scmp.eq.s32.totalorder %s24, 0
      %p242 = por %p240, %p241
      %p243 = scmp.ne.s32.totalorder %s232, %s235
      %p244 = scmp.eq.s32.totalorder %s29, 3
      %p245 = por %p243, %p244
      %p246 = scmp.ne.s32.totalorder %s235, %s236
      %p247 = scmp.eq.s32.totalorder %s29, 0
      %p248 = por %p246, %p247
      %p249 = scmp.ne.s32.totalorder %s235, %s236
      %p250 = scmp.eq.s32.totalorder %s30, 3
      %p251 = por %p249, %p250
      %p253 = scmp.ne.s32.totalorder %s236, %s252
      %p254 = scmp.eq.s32.totalorder %s30, 0
      %p255 = por %p253, %p254
      %p256 = scmp.le.s32.totalorder 1, %s24
      %p257 = scmp.lt.s32.totalorder %s24, 5
      %p258 = pnand %p256, %p257
      %p259 = pneg %p258
      // Predicated region
      $region9: #{tpu_custom_call.1} parent=5 // pred_check
        _
      $region10: #{tpu_custom_call.1} parent=5 // pred_check_branch
        %261 = sbr.rel (%p258) target = $region12
      $region11: #{tpu_custom_call.1} parent=5 // pred_region
        %s262 = ssub.s32 %s24, 1
        // Predicated region
        $region13: #{tpu_custom_call.1} parent=11 // pred_check
          %p263 = pneg %p157
        $region14: #{tpu_custom_call.1} parent=11 // pred_check_branch
          %265 = sbr.rel (%p263) target = $region16
        $region15: #{tpu_custom_call.1} parent=11 // pred_region
          %s267 = ssub.s32 4096, 4096
          %268 = vsyncadd [#allocation9], %s267
          %s269 = sshll.u32 [#allocation8], 4
          %s270 = int_to_ptr.vmem [resolvable:$true] %s269
          %275 = dma.hbm_to_vmem [thread:$0]  %s3, 4096, %s270, [#allocation9], 256, 256, 16
        $region16: #{tpu_custom_call.1} parent=11 // pred_fallthru
          _
        // Predicated region
        $region17: #{tpu_custom_call.1} parent=11 // pred_check
          %p276 = pneg %p178
        $region18: #{tpu_custom_call.1} parent=11 // pred_check_branch
          %278 = sbr.rel (%p276) target = $region20
        $region19: #{tpu_custom_call.1} parent=11 // pred_region
          %s280 = ssub.s32 192, 192
          %281 = vsyncadd [#allocation9], %s280
          %s282 = sshll.u32 [#allocation10], 4
          %s283 = int_to_ptr.vmem [resolvable:$true] %s282
          %288 = dma.hbm_to_vmem [thread:$0]  %s4, 192, %s283, [#allocation9], 64, 64, 4
        $region20: #{tpu_custom_call.1} parent=11 // pred_fallthru
          _
        // Predicated region
        $region21: #{tpu_custom_call.1} parent=11 // pred_check
          %p289 = pneg %p199
        $region22: #{tpu_custom_call.1} parent=11 // pred_check_branch
          %291 = sbr.rel (%p289) target = $region24
        $region23: #{tpu_custom_call.1} parent=11 // pred_region
          %s293 = ssub.s32 192, 192
          %294 = vsyncadd [#allocation12], %s293
          %s295 = sshll.u32 [#allocation11], 4
          %s296 = int_to_ptr.vmem [resolvable:$true] %s295
          %301 = dma.hbm_to_vmem [thread:$0]  %s5, 192, %s296, [#allocation12], 64, 64, 4
        $region24: #{tpu_custom_call.1} parent=11 // pred_fallthru
          _
        // Predicated region
        $region25: #{tpu_custom_call.1} parent=11 // pred_check
          %p302 = pneg %p220
        $region26: #{tpu_custom_call.1} parent=11 // pred_check_branch
          %304 = sbr.rel (%p302) target = $region28
        $region27: #{tpu_custom_call.1} parent=11 // pred_region
          %s306 = ssub.s32 2048, 2048
          %307 = vsyncadd [#allocation12], %s306
          %s308 = sshll.u32 [#allocation13], 4
          %s309 = int_to_ptr.vmem [resolvable:$true] %s308
          %314 = dma.hbm_to_vmem [thread:$0]  %s6, 2048, %s309, [#allocation12], 128, 128, 8
        $region28: #{tpu_custom_call.1} parent=11 // pred_fallthru
          _
      $region12: #{tpu_custom_call.1} parent=5 // pred_fallthru
        _
      %p315 = scmp.lt.s32.totalorder %s24, 4
      // Predicated region
      $region29: #{tpu_custom_call.1} parent=5 // pred_check
        %p316 = pneg %p315
      $region30: #{tpu_custom_call.1} parent=5 // pred_check_branch
        %318 = sbr.rel (%p316) target = $region32
      $region31: #{tpu_custom_call.1} parent=5 // pred_region
        // Predicated region
        $region33: #{tpu_custom_call.1} parent=31 // pred_check
          %p319 = pneg %p58
        $region34: #{tpu_custom_call.1} parent=31 // pred_check_branch
          %321 = sbr.rel (%p319) target = $region36
        $region35: #{tpu_custom_call.1} parent=31 // pred_region
          %s322 = sand.u32 %s48, 1
          %s323 = scalar_lea.sflag [#allocation3], %s322
          %s324 = sand.u32 %s48, 1
          %s325 = smul.addr %s324, 128
          %s326 = scalar_lea.vmem [#allocation2], %s325
          %s327 = smul.u32 8, %s32
          %s329 = ssub.s32 2048, 2048
          %330 = vsyncadd %s323, %s329
          %s331 = smul.addr %s327, 2
          %s332 = smul.addr %s31, 32
          %s333 = sadd.s32 %s331, %s332
          %s334 = smul.addr %s333, 128
          %s335 = scalar_lea.hbm %s0, %s334
          %s336 = sshll.u32 %s326, 4
          %s337 = int_to_ptr.vmem [resolvable:$true] %s336
          %342 = dma.hbm_to_vmem [thread:$0]  %s335, 2048, %s337, %s323, 128, 128, 8
        $region36: #{tpu_custom_call.1} parent=31 // pred_fallthru
          _
        // Predicated region
        $region37: #{tpu_custom_call.1} parent=31 // pred_check
          %p343 = pneg %p94
        $region38: #{tpu_custom_call.1} parent=31 // pred_check_branch
          %345 = sbr.rel (%p343) target = $region40
        $region39: #{tpu_custom_call.1} parent=31 // pred_region
          %s346 = sand.u32 %s24, 1
          %s347 = scalar_lea.sflag [#allocation6], %s346
          %s348 = sand.u32 %s84, 1
          %s349 = smul.addr %s348, 16
          %s350 = scalar_lea.vmem [#allocation5], %s349
          %s351 = smul.u32 %s32, 8
          %s352 = ssub.s32 %s351, 1
          %p353 = scmp.gt.s32.totalorder %s352, 0
          %s354 = scalar_select %p353, %s352, 0
          %s356 = ssub.s32 256, 256
          %357 = vsyncadd %s347, %s356
          %s358 = smul.addr %s354, 2
          %s359 = smul.addr %s31, 32
          %s360 = sadd.s32 %s358, %s359
          %s361 = smul.addr %s360, 128
          %s362 = scalar_lea.hbm %s1, %s361
          %s363 = sshll.u32 %s350, 4
          %s364 = int_to_ptr.vmem [resolvable:$true] %s363
          %369 = dma.hbm_to_vmem [thread:$0]  %s362, 256, %s364, %s347, 128, 128, 8
        $region40: #{tpu_custom_call.1} parent=31 // pred_fallthru
          _
        // Predicated region
        $region41: #{tpu_custom_call.1} parent=31 // pred_check
          %p370 = pneg %p130
        $region42: #{tpu_custom_call.1} parent=31 // pred_check_branch
          %372 = sbr.rel (%p370) target = $region44
        $region43: #{tpu_custom_call.1} parent=31 // pred_region
          %s373 = sand.u32 %s24, 1
          %s374 = scalar_lea.sflag [#allocation6], %s373
          %s375 = sand.u32 %s120, 1
          %s376 = smul.addr %s375, 16
          %s377 = scalar_lea.vmem [#allocation7], %s376
          %s378 = sadd.s32 %s32, 1
          %s379 = smul.u32 %s378, 8
          %p380 = scmp.lt.s32.totalorder %s379, 15
          %s381 = scalar_select %p380, %s379, 15
          %s383 = ssub.s32 256, 256
          %384 = vsyncadd %s374, %s383
          %s385 = smul.addr %s381, 2
          %s386 = smul.addr %s31, 32
          %s387 = sadd.s32 %s385, %s386
          %s388 = smul.addr %s387, 128
          %s389 = scalar_lea.hbm %s2, %s388
          %s390 = sshll.u32 %s377, 4
          %s391 = int_to_ptr.vmem [resolvable:$true] %s390
          %396 = dma.hbm_to_vmem [thread:$0]  %s389, 256, %s391, %s374, 128, 128, 8
        $region44: #{tpu_custom_call.1} parent=31 // pred_fallthru
          _
      $region32: #{tpu_custom_call.1} parent=5 // pred_fallthru
        _
      %p397 = scmp.le.s32.totalorder 1, %s24
      %p398 = scmp.lt.s32.totalorder %s24, 5
      %p399 = pnand %p397, %p398
      %p400 = pneg %p399
      // Predicated region
      $region45: #{tpu_custom_call.1} parent=5 // pred_check
        _
      $region46: #{tpu_custom_call.1} parent=5 // pred_check_branch
        %402 = sbr.rel (%p399) target = $region48
      $region47: #{tpu_custom_call.1} parent=5 // pred_region
        %s403 = ssub.s32 %s24, 1
        %s404 = sand.u32 %s51, 1
        %s405 = scalar_lea.sflag [#allocation3], %s404
        %s406 = sand.u32 %s51, 1
        %s407 = smul.addr %s406, 128
        %s408 = scalar_lea.vmem [#allocation2], %s407
        // Predicated region
        $region49: #{tpu_custom_call.1} parent=47 // pred_check
          %p409 = pneg %p64
        $region50: #{tpu_custom_call.1} parent=47 // pred_check_branch
          %411 = sbr.rel (%p409) target = $region52
        $region51: #{tpu_custom_call.1} parent=47 // pred_region
          %412 = dma.done %s405, 2048
        $region52: #{tpu_custom_call.1} parent=47 // pred_fallthru
          _
        %s413 = sand.u32 %s29, 1
        %s414 = scalar_lea.sflag [#allocation6], %s413
        %s415 = sand.u32 %s87, 1
        %s416 = smul.addr %s415, 16
        %s417 = scalar_lea.vmem [#allocation5], %s416
        // Predicated region
        $region53: #{tpu_custom_call.1} parent=47 // pred_check
          %p418 = pneg %p100
        $region54: #{tpu_custom_call.1} parent=47 // pred_check_branch
          %420 = sbr.rel (%p418) target = $region56
        $region55: #{tpu_custom_call.1} parent=47 // pred_region
          %421 = dma.done %s414, 256
        $region56: #{tpu_custom_call.1} parent=47 // pred_fallthru
          _
        %s422 = sand.u32 %s29, 1
        %s423 = scalar_lea.sflag [#allocation6], %s422
        %s424 = sand.u32 %s123, 1
        %s425 = smul.addr %s424, 16
        %s426 = scalar_lea.vmem [#allocation7], %s425
        // Predicated region
        $region57: #{tpu_custom_call.1} parent=47 // pred_check
          %p427 = pneg %p136
        $region58: #{tpu_custom_call.1} parent=47 // pred_check_branch
          %429 = sbr.rel (%p427) target = $region60
        $region59: #{tpu_custom_call.1} parent=47 // pred_region
          %430 = dma.done %s423, 256
        $region60: #{tpu_custom_call.1} parent=47 // pred_fallthru
          _
        // Predicated region
        $region61: #{tpu_custom_call.1} parent=47 // pred_check
          %p431 = pneg %p157
        $region62: #{tpu_custom_call.1} parent=47 // pred_check_branch
          %433 = sbr.rel (%p431) target = $region64
        $region63: #{tpu_custom_call.1} parent=47 // pred_region
          %434 = dma.done [#allocation9], 4096
        $region64: #{tpu_custom_call.1} parent=47 // pred_fallthru
          _
        // Predicated region
        $region65: #{tpu_custom_call.1} parent=47 // pred_check
          %p435 = pneg %p178
        $region66: #{tpu_custom_call.1} parent=47 // pred_check_branch
          %437 = sbr.rel (%p435) target = $region68
        $region67: #{tpu_custom_call.1} parent=47 // pred_region
          %438 = dma.done [#allocation9], 192
        $region68: #{tpu_custom_call.1} parent=47 // pred_fallthru
          _
        // Predicated region
        $region69: #{tpu_custom_call.1} parent=47 // pred_check
          %p439 = pneg %p199
        $region70: #{tpu_custom_call.1} parent=47 // pred_check_branch
          %441 = sbr.rel (%p439) target = $region72
        $region71: #{tpu_custom_call.1} parent=47 // pred_region
          %442 = dma.done [#allocation12], 192
        $region72: #{tpu_custom_call.1} parent=47 // pred_fallthru
          _
        // Predicated region
        $region73: #{tpu_custom_call.1} parent=47 // pred_check
          %p443 = pneg %p220
        $region74: #{tpu_custom_call.1} parent=47 // pred_check_branch
          %445 = sbr.rel (%p443) target = $region76
        $region75: #{tpu_custom_call.1} parent=47 // pred_region
          %446 = dma.done [#allocation12], 2048
        $region76: #{tpu_custom_call.1} parent=47 // pred_fallthru
          _
        %s447 = sand.u32 %s51, 1
        %s448 = scalar_lea.sflag [#allocation3], %s447
        %s449 = sand.u32 %s51, 1
        %s450 = smul.addr %s449, 128
        %s451 = scalar_lea.vmem [#allocation2], %s450
        %p452 = pneg %p64
        %p453 = pneg %p61
        %s454 = sand.u32 %s29, 1
        %s455 = scalar_lea.sflag [#allocation6], %s454
        %s456 = sand.u32 %s87, 1
        %s457 = smul.addr %s456, 16
        %s458 = scalar_lea.vmem [#allocation5], %s457
        %p459 = pneg %p100
        %p460 = pneg %p97
        %s461 = sand.u32 %s29, 1
        %s462 = scalar_lea.sflag [#allocation6], %s461
        %s463 = sand.u32 %s123, 1
        %s464 = smul.addr %s463, 16
        %s465 = scalar_lea.vmem [#allocation7], %s464
        %p466 = pneg %p136
        %p467 = pneg %p133
        %p468 = pneg %p157
        %p469 = pneg %p154
        %p470 = pneg %p178
        %p471 = pneg %p175
        %p472 = pneg %p199
        %p473 = pneg %p196
        %p474 = pneg %p220
        %p475 = pneg %p217
        %p476 = pneg %p248
        %p477 = pneg %p245
        %s478 = sand.u32 %s235, 1
        %s479 = scalar_lea.sflag [#allocation4], %s478
        %s480 = sand.u32 %s235, 1
        %s481 = smul.addr %s480, 128
        %s482 = scalar_lea.vmem [#allocation14], %s481
        %s483 = smul.u32 8, %s34
        %s484 = smul.u32 %s34, 8
        %s485 = ssub.s32 %s484, 1
        %p486 = scmp.gt.s32.totalorder %s485, 0
        %s487 = scalar_select %p486, %s485, 0
        %s488 = sadd.s32 %s34, 1
        %s489 = smul.u32 %s488, 8
        %p490 = scmp.lt.s32.totalorder %s489, 15
        %s491 = scalar_select %p490, %s489, 15
        %s492 = smul.u32 8, %s34
        %v493 = vld [vmem:[%s408] sm:$0xff]
        %v494 = vld [vmem:[%s408 + $0x8] sm:$0xff]
        %v495 = vld [vmem:[%s408 + $0x10] sm:$0xff]
        %v496 = vld [vmem:[%s408 + $0x18] sm:$0xff]
        %v497 = vld [vmem:[%s408 + $0x20] sm:$0xff]
        %v498 = vld [vmem:[%s408 + $0x28] sm:$0xff]
        %v499 = vld [vmem:[%s408 + $0x30] sm:$0xff]
        %v500 = vld [vmem:[%s408 + $0x38] sm:$0xff]
        %v501 = vld [vmem:[%s408 + $0x40] sm:$0xff]
        %v502 = vld [vmem:[%s408 + $0x48] sm:$0xff]
        %v503 = vld [vmem:[%s408 + $0x50] sm:$0xff]
        %v504 = vld [vmem:[%s408 + $0x58] sm:$0xff]
        %v505 = vld [vmem:[%s408 + $0x60] sm:$0xff]
        %v506 = vld [vmem:[%s408 + $0x68] sm:$0xff]
        %v507 = vld [vmem:[%s408 + $0x70] sm:$0xff]
        %v508 = vld [vmem:[%s408 + $0x78] sm:$0xff]
        %v509 = vld [vmem:[%s417] sm:$0xff]
        %v510 = vld [vmem:[%s417 + $0x8] sm:$0xff]
        %p511 = scmp.gt.s32.totalorder %s34, 0
        %s512 = scalar_select %p511, 1, 0
        %s513 = scvt.s32.f32 %s512
        %v514 = vstv %s513
        %v515 = vmul.f32 %v509, %v514
        %v516 = vmul.f32 %v510, %v514
        %v517 = vld [vmem:[%s426] sm:$0xff]
        %v518 = vld [vmem:[%s426 + $0x8] sm:$0xff]
        %p519 = scmp.lt.s32.totalorder %s34, 1
        %s520 = scalar_select %p519, 1, 0
        %s521 = scvt.s32.f32 %s520
        %v522 = vstv %s521
        %v523 = vmul.f32 %v517, %v522
        %v524 = vmul.f32 %v518, %v522
        %v525 = vld [vmem:[#allocation8] sm:$0xff]
        %v526 = vld [vmem:[#allocation8 + $0x8] sm:$0xff]
        %v527 = vld [vmem:[#allocation8 + $0x10] sm:$0xff]
        %v528 = vld [vmem:[#allocation8 + $0x18] sm:$0xff]
        %v529 = vld [vmem:[#allocation8 + $0x20] sm:$0xff]
        %v530 = vld [vmem:[#allocation8 + $0x28] sm:$0xff]
        %v531 = vld [vmem:[#allocation8 + $0x30] sm:$0xff]
        %v532 = vld [vmem:[#allocation8 + $0x38] sm:$0xff]
        %v533 = vld [vmem:[#allocation8 + $0x40] sm:$0xff]
        %v534 = vld [vmem:[#allocation8 + $0x48] sm:$0xff]
        %v535 = vld [vmem:[#allocation8 + $0x50] sm:$0xff]
        %v536 = vld [vmem:[#allocation8 + $0x58] sm:$0xff]
        %v537 = vld [vmem:[#allocation8 + $0x60] sm:$0xff]
        %v538 = vld [vmem:[#allocation8 + $0x68] sm:$0xff]
        %v539 = vld [vmem:[#allocation8 + $0x70] sm:$0xff]
        %v540 = vld [vmem:[#allocation8 + $0x78] sm:$0xff]
        %v541 = vld [vmem:[#allocation8 + $0x80] sm:$0xff]
        %v542 = vld [vmem:[#allocation8 + $0x88] sm:$0xff]
        %v543 = vld [vmem:[#allocation8 + $0x90] sm:$0xff]
        %v544 = vld [vmem:[#allocation8 + $0x98] sm:$0xff]
        %v545 = vld [vmem:[#allocation8 + $0xa0] sm:$0xff]
        %v546 = vld [vmem:[#allocation8 + $0xa8] sm:$0xff]
        %v547 = vld [vmem:[#allocation8 + $0xb0] sm:$0xff]
        %v548 = vld [vmem:[#allocation8 + $0xb8] sm:$0xff]
        %v549 = vld [vmem:[#allocation8 + $0xc0] sm:$0xff]
        %v550 = vld [vmem:[#allocation8 + $0xc8] sm:$0xff]
        %v551 = vld [vmem:[#allocation8 + $0xd0] sm:$0xff]
        %v552 = vld [vmem:[#allocation8 + $0xd8] sm:$0xff]
        %v553 = vld [vmem:[#allocation8 + $0xe0] sm:$0xff]
        %v554 = vld [vmem:[#allocation8 + $0xe8] sm:$0xff]
        %v555 = vld [vmem:[#allocation8 + $0xf0] sm:$0xff]
        %v556 = vld [vmem:[#allocation8 + $0xf8] sm:$0xff]
        %557 = vmatprep.subr.mxu0 %v556
        %558 = vmatpush1.msra.mxu0 %v555
        %559 = vmatprep.subr.mxu0 %v554
        %560 = vmatpush1.msra.mxu0 %v553
        %561 = vmatprep.subr.mxu0 %v552
        %562 = vmatpush1.msra.mxu0 %v551
        %563 = vmatprep.subr.mxu0 %v550
        %564 = vmatpush1.msra.mxu0 %v549
        %565 = vmatprep.subr.mxu0 %v548
        %566 = vmatpush1.msra.mxu0 %v547
        %567 = vmatprep.subr.mxu0 %v546
        %568 = vmatpush1.msra.mxu0 %v545
        %569 = vmatprep.subr.mxu0 %v544
        %570 = vmatpush1.msra.mxu0 %v543
        %571 = vmatprep.subr.mxu0 %v542
        %572 = vmatpush1.msra.mxu0 %v541
        %573 = vmatprep.subr.mxu0 %v540
        %574 = vmatpush1.msra.mxu0 %v539
        %575 = vmatprep.subr.mxu0 %v538
        %576 = vmatpush1.msra.mxu0 %v537
        %577 = vmatprep.subr.mxu0 %v536
        %578 = vmatpush1.msra.mxu0 %v535
        %579 = vmatprep.subr.mxu0 %v534
        %580 = vmatpush1.msra.mxu0 %v533
        %581 = vmatprep.subr.mxu0 %v532
        %582 = vmatpush1.msra.mxu0 %v531
        %583 = vmatprep.subr.mxu0 %v530
        %584 = vmatpush1.msra.mxu0 %v529
        %585 = vmatprep.subr.mxu0 %v528
        %586 = vmatpush1.msra.mxu0 %v527
        %587 = vmatprep.subr.mxu0 %v526
        %588 = vmatpush1.msra.mxu0 %v525
        %589 = vmatprep.subr.mxu0 0.0
        %590 = vmatpush2.msra.mxu0 0.0
        %591 = vmatprep.subr.mxu0 0.0
        %592 = vmatpush2.msra.mxu0 0.0
        %593 = vmatprep.subr.mxu0 0.0
        %594 = vmatpush2.msra.mxu0 0.0
        %595 = vmatprep.subr.mxu0 0.0
        %596 = vmatpush2.msra.mxu0 0.0
        %597 = vmatprep.subr.mxu0 0.0
        %598 = vmatpush2.msra.mxu0 0.0
        %599 = vmatprep.subr.mxu0 0.0
        %600 = vmatpush2.msra.mxu0 0.0
        %601 = vmatprep.subr.mxu0 0.0
        %602 = vmatpush2.msra.mxu0 0.0
        %603 = vmatprep.subr.mxu0 0.0
        %604 = vmatpush2.msra.mxu0 0.0
        %605 = vmatprep.subr.mxu0 0.0
        %606 = vmatpush2.msra.mxu0 0.0
        %607 = vmatprep.subr.mxu0 0.0
        %608 = vmatpush2.msra.mxu0 0.0
        %609 = vmatprep.subr.mxu0 0.0
        %610 = vmatpush2.msra.mxu0 0.0
        %611 = vmatprep.subr.mxu0 0.0
        %612 = vmatpush2.msra.mxu0 0.0
        %613 = vmatprep.subr.mxu0 0.0
        %614 = vmatpush2.msra.mxu0 0.0
        %615 = vmatprep.subr.mxu0 0.0
        %616 = vmatpush2.msra.mxu0 0.0
        %617 = vmatprep.subr.mxu0 0.0
        %618 = vmatpush2.msra.mxu0 0.0
        %619 = vmatprep.subr.mxu0 0.0
        %620 = vmatpush2.msra.mxu0 0.0
        %621 = vmatprep.mubr.f32.mxu0 0.0
        %622 = vmatmul.mubr.f32.gmra.mxu0 %v515
        %v623 = vpop.f32.mrf.mxu0
        %v624 = vadd.f32 0.0, %v623
        %v625 = vpop.f32.mrf.mxu0
        %v626 = vadd.f32 0.0, %v625
        %627 = vmatprep.mubr.f32.mxu0 0.0
        %628 = vmatmul.mubr.f32.gmra.mxu0 %v516
        %v629 = vpop.f32.mrf.mxu0
        %v630 = vadd.f32 0.0, %v629
        %v631 = vpop.f32.mrf.mxu0
        %v632 = vadd.f32 0.0, %v631
        %633 = vmatprep.mubr.f32.mxu0 0.0
        %634 = vmatmul.mubr.f32.gmra.mxu0 %v493
        %v635 = vpop.f32.mrf.mxu0
        %v636 = vadd.f32 0.0, %v635
        %v637 = vpop.f32.mrf.mxu0
        %v638 = vadd.f32 0.0, %v637
        %639 = vmatprep.mubr.f32.mxu0 0.0
        %640 = vmatmul.mubr.f32.gmra.mxu0 %v494
        %v641 = vpop.f32.mrf.mxu0
        %v642 = vadd.f32 0.0, %v641
        %v643 = vpop.f32.mrf.mxu0
        %v644 = vadd.f32 0.0, %v643
        %645 = vmatprep.mubr.f32.mxu0 0.0
        %646 = vmatmul.mubr.f32.gmra.mxu0 %v495
        %v647 = vpop.f32.mrf.mxu0
        %v648 = vadd.f32 0.0, %v647
        %v649 = vpop.f32.mrf.mxu0
        %v650 = vadd.f32 0.0, %v649
        %651 = vmatprep.mubr.f32.mxu0 0.0
        %652 = vmatmul.mubr.f32.gmra.mxu0 %v496
        %v653 = vpop.f32.mrf.mxu0
        %v654 = vadd.f32 0.0, %v653
        %v655 = vpop.f32.mrf.mxu0
        %v656 = vadd.f32 0.0, %v655
        %657 = vmatprep.mubr.f32.mxu0 0.0
        %658 = vmatmul.mubr.f32.gmra.mxu0 %v497
        %v659 = vpop.f32.mrf.mxu0
        %v660 = vadd.f32 0.0, %v659
        %v661 = vpop.f32.mrf.mxu0
        %v662 = vadd.f32 0.0, %v661
        %663 = vmatprep.mubr.f32.mxu0 0.0
        %664 = vmatmul.mubr.f32.gmra.mxu0 %v498
        %v665 = vpop.f32.mrf.mxu0
        %v666 = vadd.f32 0.0, %v665
        %v667 = vpop.f32.mrf.mxu0
        %v668 = vadd.f32 0.0, %v667
        %669 = vmatprep.mubr.f32.mxu0 0.0
        %670 = vmatmul.mubr.f32.gmra.mxu0 %v499
        %v671 = vpop.f32.mrf.mxu0
        %v672 = vadd.f32 0.0, %v671
        %v673 = vpop.f32.mrf.mxu0
        %v674 = vadd.f32 0.0, %v673
        %675 = vmatprep.mubr.f32.mxu0 0.0
        %676 = vmatmul.mubr.f32.gmra.mxu0 %v500
        %v677 = vpop.f32.mrf.mxu0
        %v678 = vadd.f32 0.0, %v677
        %v679 = vpop.f32.mrf.mxu0
        %v680 = vadd.f32 0.0, %v679
        %681 = vmatprep.mubr.f32.mxu0 0.0
        %682 = vmatmul.mubr.f32.gmra.mxu0 %v501
        %v683 = vpop.f32.mrf.mxu0
        %v684 = vadd.f32 0.0, %v683
        %v685 = vpop.f32.mrf.mxu0
        %v686 = vadd.f32 0.0, %v685
        %687 = vmatprep.mubr.f32.mxu0 0.0
        %688 = vmatmul.mubr.f32.gmra.mxu0 %v502
        %v689 = vpop.f32.mrf.mxu0
        %v690 = vadd.f32 0.0, %v689
        %v691 = vpop.f32.mrf.mxu0
        %v692 = vadd.f32 0.0, %v691
        %693 = vmatprep.mubr.f32.mxu0 0.0
        %694 = vmatmul.mubr.f32.gmra.mxu0 %v503
        %v695 = vpop.f32.mrf.mxu0
        %v696 = vadd.f32 0.0, %v695
        %v697 = vpop.f32.mrf.mxu0
        %v698 = vadd.f32 0.0, %v697
        %699 = vmatprep.mubr.f32.mxu0 0.0
        %700 = vmatmul.mubr.f32.gmra.mxu0 %v504
        %v701 = vpop.f32.mrf.mxu0
        %v702 = vadd.f32 0.0, %v701
        %v703 = vpop.f32.mrf.mxu0
        %v704 = vadd.f32 0.0, %v703
        %705 = vmatprep.mubr.f32.mxu0 0.0
        %706 = vmatmul.mubr.f32.gmra.mxu0 %v505
        %v707 = vpop.f32.mrf.mxu0
        %v708 = vadd.f32 0.0, %v707
        %v709 = vpop.f32.mrf.mxu0
        %v710 = vadd.f32 0.0, %v709
        %711 = vmatprep.mubr.f32.mxu0 0.0
        %712 = vmatmul.mubr.f32.gmra.mxu0 %v506
        %v713 = vpop.f32.mrf.mxu0
        %v714 = vadd.f32 0.0, %v713
        %v715 = vpop.f32.mrf.mxu0
        %v716 = vadd.f32 0.0, %v715
        %717 = vmatprep.mubr.f32.mxu0 0.0
        %718 = vmatmul.mubr.f32.gmra.mxu0 %v507
        %v719 = vpop.f32.mrf.mxu0
        %v720 = vadd.f32 0.0, %v719
        %v721 = vpop.f32.mrf.mxu0
        %v722 = vadd.f32 0.0, %v721
        %723 = vmatprep.mubr.f32.mxu0 0.0
        %724 = vmatmul.mubr.f32.gmra.mxu0 %v508
        %v725 = vpop.f32.mrf.mxu0
        %v726 = vadd.f32 0.0, %v725
        %v727 = vpop.f32.mrf.mxu0
        %v728 = vadd.f32 0.0, %v727
        %729 = vmatprep.mubr.f32.mxu0 0.0
        %730 = vmatmul.mubr.f32.gmra.mxu0 %v523
        %v731 = vpop.f32.mrf.mxu0
        %v732 = vadd.f32 0.0, %v731
        %v733 = vpop.f32.mrf.mxu0
        %v734 = vadd.f32 0.0, %v733
        %735 = vmatprep.mubr.f32.mxu0 0.0
        %736 = vmatmul.mubr.f32.gmra.mxu0 %v524
        %v737 = vpop.f32.mrf.mxu0
        %v738 = vadd.f32 0.0, %v737
        %v739 = vpop.f32.mrf.mxu0
        %v740 = vadd.f32 0.0, %v739
        %741 = vdwg.mxu0
        %v742 = vlaneseq
        %v743 = vshrl.u32 %v742, 7
        %v744 = vadd.s32 %v743, 8
        %vm745 = vcmp.gt.s32.totalorder %v743, 0
        %vm746 = vcmp.gt.s32.totalorder %v744, 0
        %v747 = vsel %vm745, 1, 0
        %v748 = vsel %vm746, 1, 0
        %v749 = vcvt.s32.f32 %v747
        %v750 = vcvt.s32.f32 %v748
        %vm751 = vcmp.lt.s32.totalorder %v743, 15
        %vm752 = vcmp.lt.s32.totalorder %v744, 15
        %v753 = vsel %vm751, 1, 0
        %v754 = vsel %vm752, 1, 0
        %v755 = vcvt.s32.f32 %v753
        %v756 = vcvt.s32.f32 %v754
        %v757 = vld [vmem:[#allocation10] sm:$0x7]
        %v758 = vld [vmem:[#allocation10 + $0x4] sm:$0x7]
        %v759 = vld [vmem:[#allocation10 + $0x8] sm:$0x7]
        %v760 = vrot.slane %v624, 7
        %v761 = vrot.slane %v630, 7
        %v762 = vrot.slane %v636, 7
        %v763 = vrot.slane %v642, 7
        %v764 = vrot.slane %v648, 7
        %v765 = vrot.slane %v654, 7
        %v766 = vrot.slane %v660, 7
        %v767 = vrot.slane %v666, 7
        %v768 = vrot.slane %v672, 7
        %v769 = vrot.slane %v678, 7
        %v770 = vrot.slane %v684, 7
        %v771 = vrot.slane %v690, 7
        %v772 = vrot.slane %v696, 7
        %v773 = vrot.slane %v702, 7
        %v774 = vrot.slane %v708, 7
        %v775 = vrot.slane %v714, 7
        %v776 = vrot.slane %v720, 7
        %v777 = vrot.slane %v726, 7
        %v778 = vrot.slane %v732, 7
        %v779 = vrot.slane %v738, 7
        %vm780 = vcmp.lt.s32.totalorder %v743, 1
        %v781 = vsel %vm780, %v778, %v779
        %v782 = vsel %vm780, %v777, %v778
        %v783 = vsel %vm780, %v776, %v777
        %v784 = vsel %vm780, %v775, %v776
        %v785 = vsel %vm780, %v774, %v775
        %v786 = vsel %vm780, %v773, %v774
        %v787 = vsel %vm780, %v772, %v773
        %v788 = vsel %vm780, %v771, %v772
        %v789 = vsel %vm780, %v770, %v771
        %v790 = vsel %vm780, %v769, %v770
        %v791 = vsel %vm780, %v768, %v769
        %v792 = vsel %vm780, %v767, %v768
        %v793 = vsel %vm780, %v766, %v767
        %v794 = vsel %vm780, %v765, %v766
        %v795 = vsel %vm780, %v764, %v765
        %v796 = vsel %vm780, %v763, %v764
        %v797 = vsel %vm780, %v762, %v763
        %v798 = vsel %vm780, %v761, %v762
        %v799 = vsel %vm780, %v760, %v761
        %v800 = vsel %vm780, %v779, %v760
        %v801 = vrot.slane %v624, 1
        %v802 = vrot.slane %v630, 1
        %v803 = vrot.slane %v636, 1
        %v804 = vrot.slane %v642, 1
        %v805 = vrot.slane %v648, 1
        %v806 = vrot.slane %v654, 1
        %v807 = vrot.slane %v660, 1
        %v808 = vrot.slane %v666, 1
        %v809 = vrot.slane %v672, 1
        %v810 = vrot.slane %v678, 1
        %v811 = vrot.slane %v684, 1
        %v812 = vrot.slane %v690, 1
        %v813 = vrot.slane %v696, 1
        %v814 = vrot.slane %v702, 1
        %v815 = vrot.slane %v708, 1
        %v816 = vrot.slane %v714, 1
        %v817 = vrot.slane %v720, 1
        %v818 = vrot.slane %v726, 1
        %v819 = vrot.slane %v732, 1
        %v820 = vrot.slane %v738, 1
        %vm821 = vcmp.lt.s32.totalorder %v743, 7
        %v822 = vsel %vm821, %v819, %v820
        %v823 = vsel %vm821, %v818, %v819
        %v824 = vsel %vm821, %v817, %v818
        %v825 = vsel %vm821, %v816, %v817
        %v826 = vsel %vm821, %v815, %v816
        %v827 = vsel %vm821, %v814, %v815
        %v828 = vsel %vm821, %v813, %v814
        %v829 = vsel %vm821, %v812, %v813
        %v830 = vsel %vm821, %v811, %v812
        %v831 = vsel %vm821, %v810, %v811
        %v832 = vsel %vm821, %v809, %v810
        %v833 = vsel %vm821, %v808, %v809
        %v834 = vsel %vm821, %v807, %v808
        %v835 = vsel %vm821, %v806, %v807
        %v836 = vsel %vm821, %v805, %v806
        %v837 = vsel %vm821, %v804, %v805
        %v838 = vsel %vm821, %v803, %v804
        %v839 = vsel %vm821, %v802, %v803
        %v840 = vsel %vm821, %v801, %v802
        %v841 = vsel %vm821, %v820, %v801
        %v842 = vlaneseq
        %v843 = vshrl.u32 %v842, 7
        %v844 = vsub.s32 0, %v843
        %v845 = vrot.slane %v757, %v844
        %v846 = vlaneseq
        %v847 = vshrl.u32 %v846, 7
        %v848 = vsub.s32 0, %v847
        %v849 = vrot.slane %v758, %v848
        %v850 = vlaneseq
        %v851 = vshrl.u32 %v850, 7
        %v852 = vsub.s32 0, %v851
        %v853 = vrot.slane %v759, %v852
        %v854 = vmul.f32 %v845, %v749
        %v855 = vmul.f32 %v845, %v750
        %v856 = vmul.f32 %v849, %v749
        %v857 = vmul.f32 %v849, %v750
        %v858 = vmul.f32 %v853, %v749
        %v859 = vmul.f32 %v853, %v750
        %v860 = vlaneseq
        %v861 = vshrl.u32 %v860, 7
        %v862 = vsub.s32 2, %v861
        %v863 = vrot.slane %v757, %v862
        %v864 = vlaneseq
        %v865 = vshrl.u32 %v864, 7
        %v866 = vsub.s32 2, %v865
        %v867 = vrot.slane %v758, %v866
        %v868 = vlaneseq
        %v869 = vshrl.u32 %v868, 7
        %v870 = vsub.s32 2, %v869
        %v871 = vrot.slane %v759, %v870
        %v872 = vmul.f32 %v863, %v755
        %v873 = vmul.f32 %v863, %v756
        %v874 = vmul.f32 %v867, %v755
        %v875 = vmul.f32 %v867, %v756
        %v876 = vmul.f32 %v871, %v755
        %v877 = vmul.f32 %v871, %v756
        %v878 = vmul.f32 %v800, %v854
        %v879 = vmul.f32 %v799, %v855
        %v880 = vmul.f32 %v798, %v854
        %v881 = vmul.f32 %v797, %v855
        %v882 = vmul.f32 %v796, %v854
        %v883 = vmul.f32 %v795, %v855
        %v884 = vmul.f32 %v794, %v854
        %v885 = vmul.f32 %v793, %v855
        %v886 = vmul.f32 %v792, %v854
        %v887 = vmul.f32 %v791, %v855
        %v888 = vmul.f32 %v790, %v854
        %v889 = vmul.f32 %v789, %v855
        %v890 = vmul.f32 %v788, %v854
        %v891 = vmul.f32 %v787, %v855
        %v892 = vmul.f32 %v786, %v854
        %v893 = vmul.f32 %v785, %v855
        %v894 = vlaneseq
        %v895 = vshrl.u32 %v894, 7
        %v896 = vsub.s32 1, %v895
        %v897 = vrot.slane %v757, %v896
        %v898 = vmul.f32 %v624, %v897
        %v899 = vmul.f32 %v630, %v897
        %v900 = vmul.f32 %v636, %v897
        %v901 = vmul.f32 %v642, %v897
        %v902 = vmul.f32 %v648, %v897
        %v903 = vmul.f32 %v654, %v897
        %v904 = vmul.f32 %v660, %v897
        %v905 = vmul.f32 %v666, %v897
        %v906 = vmul.f32 %v672, %v897
        %v907 = vmul.f32 %v678, %v897
        %v908 = vmul.f32 %v684, %v897
        %v909 = vmul.f32 %v690, %v897
        %v910 = vmul.f32 %v696, %v897
        %v911 = vmul.f32 %v702, %v897
        %v912 = vmul.f32 %v708, %v897
        %v913 = vmul.f32 %v714, %v897
        %v914 = vadd.f32 %v878, %v898
        %v915 = vadd.f32 %v879, %v899
        %v916 = vadd.f32 %v880, %v900
        %v917 = vadd.f32 %v881, %v901
        %v918 = vadd.f32 %v882, %v902
        %v919 = vadd.f32 %v883, %v903
        %v920 = vadd.f32 %v884, %v904
        %v921 = vadd.f32 %v885, %v905
        %v922 = vadd.f32 %v886, %v906
        %v923 = vadd.f32 %v887, %v907
        %v924 = vadd.f32 %v888, %v908
        %v925 = vadd.f32 %v889, %v909
        %v926 = vadd.f32 %v890, %v910
        %v927 = vadd.f32 %v891, %v911
        %v928 = vadd.f32 %v892, %v912
        %v929 = vadd.f32 %v893, %v913
        %v930 = vmul.f32 %v840, %v872
        %v931 = vmul.f32 %v839, %v873
        %v932 = vmul.f32 %v838, %v872
        %v933 = vmul.f32 %v837, %v873
        %v934 = vmul.f32 %v836, %v872
        %v935 = vmul.f32 %v835, %v873
        %v936 = vmul.f32 %v834, %v872
        %v937 = vmul.f32 %v833, %v873
        %v938 = vmul.f32 %v832, %v872
        %v939 = vmul.f32 %v831, %v873
        %v940 = vmul.f32 %v830, %v872
        %v941 = vmul.f32 %v829, %v873
        %v942 = vmul.f32 %v828, %v872
        %v943 = vmul.f32 %v827, %v873
        %v944 = vmul.f32 %v826, %v872
        %v945 = vmul.f32 %v825, %v873
        %v946 = vadd.f32 %v914, %v930
        %v947 = vadd.f32 %v915, %v931
        %v948 = vadd.f32 %v916, %v932
        %v949 = vadd.f32 %v917, %v933
        %v950 = vadd.f32 %v918, %v934
        %v951 = vadd.f32 %v919, %v935
        %v952 = vadd.f32 %v920, %v936
        %v953 = vadd.f32 %v921, %v937
        %v954 = vadd.f32 %v922, %v938
        %v955 = vadd.f32 %v923, %v939
        %v956 = vadd.f32 %v924, %v940
        %v957 = vadd.f32 %v925, %v941
        %v958 = vadd.f32 %v926, %v942
        %v959 = vadd.f32 %v927, %v943
        %v960 = vadd.f32 %v928, %v944
        %v961 = vadd.f32 %v929, %v945
        %v962 = vmul.f32 %v798, %v856
        %v963 = vmul.f32 %v797, %v857
        %v964 = vmul.f32 %v796, %v856
        %v965 = vmul.f32 %v795, %v857
        %v966 = vmul.f32 %v794, %v856
        %v967 = vmul.f32 %v793, %v857
        %v968 = vmul.f32 %v792, %v856
        %v969 = vmul.f32 %v791, %v857
        %v970 = vmul.f32 %v790, %v856
        %v971 = vmul.f32 %v789, %v857
        %v972 = vmul.f32 %v788, %v856
        %v973 = vmul.f32 %v787, %v857
        %v974 = vmul.f32 %v786, %v856
        %v975 = vmul.f32 %v785, %v857
        %v976 = vmul.f32 %v784, %v856
        %v977 = vmul.f32 %v783, %v857
        %v978 = vlaneseq
        %v979 = vshrl.u32 %v978, 7
        %v980 = vsub.s32 1, %v979
        %v981 = vrot.slane %v758, %v980
        %v982 = vmul.f32 %v636, %v981
        %v983 = vmul.f32 %v642, %v981
        %v984 = vmul.f32 %v648, %v981
        %v985 = vmul.f32 %v654, %v981
        %v986 = vmul.f32 %v660, %v981
        %v987 = vmul.f32 %v666, %v981
        %v988 = vmul.f32 %v672, %v981
        %v989 = vmul.f32 %v678, %v981
        %v990 = vmul.f32 %v684, %v981
        %v991 = vmul.f32 %v690, %v981
        %v992 = vmul.f32 %v696, %v981
        %v993 = vmul.f32 %v702, %v981
        %v994 = vmul.f32 %v708, %v981
        %v995 = vmul.f32 %v714, %v981
        %v996 = vmul.f32 %v720, %v981
        %v997 = vmul.f32 %v726, %v981
        %v998 = vadd.f32 %v962, %v982
        %v999 = vadd.f32 %v963, %v983
        %v1000 = vadd.f32 %v964, %v984
        %v1001 = vadd.f32 %v965, %v985
        %v1002 = vadd.f32 %v966, %v986
        %v1003 = vadd.f32 %v967, %v987
        %v1004 = vadd.f32 %v968, %v988
        %v1005 = vadd.f32 %v969, %v989
        %v1006 = vadd.f32 %v970, %v990
        %v1007 = vadd.f32 %v971, %v991
        %v1008 = vadd.f32 %v972, %v992
        %v1009 = vadd.f32 %v973, %v993
        %v1010 = vadd.f32 %v974, %v994
        %v1011 = vadd.f32 %v975, %v995
        %v1012 = vadd.f32 %v976, %v996
        %v1013 = vadd.f32 %v977, %v997
        %v1014 = vmul.f32 %v838, %v874
        %v1015 = vmul.f32 %v837, %v875
        %v1016 = vmul.f32 %v836, %v874
        %v1017 = vmul.f32 %v835, %v875
        %v1018 = vmul.f32 %v834, %v874
        %v1019 = vmul.f32 %v833, %v875
        %v1020 = vmul.f32 %v832, %v874
        %v1021 = vmul.f32 %v831, %v875
        %v1022 = vmul.f32 %v830, %v874
        %v1023 = vmul.f32 %v829, %v875
        %v1024 = vmul.f32 %v828, %v874
        %v1025 = vmul.f32 %v827, %v875
        %v1026 = vmul.f32 %v826, %v874
        %v1027 = vmul.f32 %v825, %v875
        %v1028 = vmul.f32 %v824, %v874
        %v1029 = vmul.f32 %v823, %v875
        %v1030 = vadd.f32 %v998, %v1014
        %v1031 = vadd.f32 %v999, %v1015
        %v1032 = vadd.f32 %v1000, %v1016
        %v1033 = vadd.f32 %v1001, %v1017
        %v1034 = vadd.f32 %v1002, %v1018
        %v1035 = vadd.f32 %v1003, %v1019
        %v1036 = vadd.f32 %v1004, %v1020
        %v1037 = vadd.f32 %v1005, %v1021
        %v1038 = vadd.f32 %v1006, %v1022
        %v1039 = vadd.f32 %v1007, %v1023
        %v1040 = vadd.f32 %v1008, %v1024
        %v1041 = vadd.f32 %v1009, %v1025
        %v1042 = vadd.f32 %v1010, %v1026
        %v1043 = vadd.f32 %v1011, %v1027
        %v1044 = vadd.f32 %v1012, %v1028
        %v1045 = vadd.f32 %v1013, %v1029
        %v1046 = vadd.f32 %v946, %v1030
        %v1047 = vadd.f32 %v947, %v1031
        %v1048 = vadd.f32 %v948, %v1032
        %v1049 = vadd.f32 %v949, %v1033
        %v1050 = vadd.f32 %v950, %v1034
        %v1051 = vadd.f32 %v951, %v1035
        %v1052 = vadd.f32 %v952, %v1036
        %v1053 = vadd.f32 %v953, %v1037
        %v1054 = vadd.f32 %v954, %v1038
        %v1055 = vadd.f32 %v955, %v1039
        %v1056 = vadd.f32 %v956, %v1040
        %v1057 = vadd.f32 %v957, %v1041
        %v1058 = vadd.f32 %v958, %v1042
        %v1059 = vadd.f32 %v959, %v1043
        %v1060 = vadd.f32 %v960, %v1044
        %v1061 = vadd.f32 %v961, %v1045
        %v1062 = vmul.f32 %v796, %v858
        %v1063 = vmul.f32 %v795, %v859
        %v1064 = vmul.f32 %v794, %v858
        %v1065 = vmul.f32 %v793, %v859
        %v1066 = vmul.f32 %v792, %v858
        %v1067 = vmul.f32 %v791, %v859
        %v1068 = vmul.f32 %v790, %v858
        %v1069 = vmul.f32 %v789, %v859
        %v1070 = vmul.f32 %v788, %v858
        %v1071 = vmul.f32 %v787, %v859
        %v1072 = vmul.f32 %v786, %v858
        %v1073 = vmul.f32 %v785, %v859
        %v1074 = vmul.f32 %v784, %v858
        %v1075 = vmul.f32 %v783, %v859
        %v1076 = vmul.f32 %v782, %v858
        %v1077 = vmul.f32 %v781, %v859
        %v1078 = vlaneseq
        %v1079 = vshrl.u32 %v1078, 7
        %v1080 = vsub.s32 1, %v1079
        %v1081 = vrot.slane %v759, %v1080
        %v1082 = vmul.f32 %v648, %v1081
        %v1083 = vmul.f32 %v654, %v1081
        %v1084 = vmul.f32 %v660, %v1081
        %v1085 = vmul.f32 %v666, %v1081
        %v1086 = vmul.f32 %v672, %v1081
        %v1087 = vmul.f32 %v678, %v1081
        %v1088 = vmul.f32 %v684, %v1081
        %v1089 = vmul.f32 %v690, %v1081
        %v1090 = vmul.f32 %v696, %v1081
        %v1091 = vmul.f32 %v702, %v1081
        %v1092 = vmul.f32 %v708, %v1081
        %v1093 = vmul.f32 %v714, %v1081
        %v1094 = vmul.f32 %v720, %v1081
        %v1095 = vmul.f32 %v726, %v1081
        %v1096 = vmul.f32 %v732, %v1081
        %v1097 = vmul.f32 %v738, %v1081
        %v1098 = vadd.f32 %v1062, %v1082
        %v1099 = vadd.f32 %v1063, %v1083
        %v1100 = vadd.f32 %v1064, %v1084
        %v1101 = vadd.f32 %v1065, %v1085
        %v1102 = vadd.f32 %v1066, %v1086
        %v1103 = vadd.f32 %v1067, %v1087
        %v1104 = vadd.f32 %v1068, %v1088
        %v1105 = vadd.f32 %v1069, %v1089
        %v1106 = vadd.f32 %v1070, %v1090
        %v1107 = vadd.f32 %v1071, %v1091
        %v1108 = vadd.f32 %v1072, %v1092
        %v1109 = vadd.f32 %v1073, %v1093
        %v1110 = vadd.f32 %v1074, %v1094
        %v1111 = vadd.f32 %v1075, %v1095
        %v1112 = vadd.f32 %v1076, %v1096
        %v1113 = vadd.f32 %v1077, %v1097
        %v1114 = vmul.f32 %v836, %v876
        %v1115 = vmul.f32 %v835, %v877
        %v1116 = vmul.f32 %v834, %v876
        %v1117 = vmul.f32 %v833, %v877
        %v1118 = vmul.f32 %v832, %v876
        %v1119 = vmul.f32 %v831, %v877
        %v1120 = vmul.f32 %v830, %v876
        %v1121 = vmul.f32 %v829, %v877
        %v1122 = vmul.f32 %v828, %v876
        %v1123 = vmul.f32 %v827, %v877
        %v1124 = vmul.f32 %v826, %v876
        %v1125 = vmul.f32 %v825, %v877
        %v1126 = vmul.f32 %v824, %v876
        %v1127 = vmul.f32 %v823, %v877
        %v1128 = vmul.f32 %v822, %v876
        %v1129 = vmul.f32 %v841, %v877
        %v1130 = vadd.f32 %v1098, %v1114
        %v1131 = vadd.f32 %v1099, %v1115
        %v1132 = vadd.f32 %v1100, %v1116
        %v1133 = vadd.f32 %v1101, %v1117
        %v1134 = vadd.f32 %v1102, %v1118
        %v1135 = vadd.f32 %v1103, %v1119
        %v1136 = vadd.f32 %v1104, %v1120
        %v1137 = vadd.f32 %v1105, %v1121
        %v1138 = vadd.f32 %v1106, %v1122
        %v1139 = vadd.f32 %v1107, %v1123
        %v1140 = vadd.f32 %v1108, %v1124
        %v1141 = vadd.f32 %v1109, %v1125
        %v1142 = vadd.f32 %v1110, %v1126
        %v1143 = vadd.f32 %v1111, %v1127
        %v1144 = vadd.f32 %v1112, %v1128
        %v1145 = vadd.f32 %v1113, %v1129
        %v1146 = vadd.f32 %v1046, %v1130
        %v1147 = vadd.f32 %v1047, %v1131
        %v1148 = vadd.f32 %v1048, %v1132
        %v1149 = vadd.f32 %v1049, %v1133
        %v1150 = vadd.f32 %v1050, %v1134
        %v1151 = vadd.f32 %v1051, %v1135
        %v1152 = vadd.f32 %v1052, %v1136
        %v1153 = vadd.f32 %v1053, %v1137
        %v1154 = vadd.f32 %v1054, %v1138
        %v1155 = vadd.f32 %v1055, %v1139
        %v1156 = vadd.f32 %v1056, %v1140
        %v1157 = vadd.f32 %v1057, %v1141
        %v1158 = vadd.f32 %v1058, %v1142
        %v1159 = vadd.f32 %v1059, %v1143
        %v1160 = vadd.f32 %v1060, %v1144
        %v1161 = vadd.f32 %v1061, %v1145
        %v1162 = vld [vmem:[#allocation11] sm:$0x7]
        %v1163 = vld [vmem:[#allocation11 + $0x4] sm:$0x7]
        %v1164 = vld [vmem:[#allocation11 + $0x8] sm:$0x7]
        %v1165 = vrot.slane %v626, 7
        %v1166 = vrot.slane %v632, 7
        %v1167 = vrot.slane %v638, 7
        %v1168 = vrot.slane %v644, 7
        %v1169 = vrot.slane %v650, 7
        %v1170 = vrot.slane %v656, 7
        %v1171 = vrot.slane %v662, 7
        %v1172 = vrot.slane %v668, 7
        %v1173 = vrot.slane %v674, 7
        %v1174 = vrot.slane %v680, 7
        %v1175 = vrot.slane %v686, 7
        %v1176 = vrot.slane %v692, 7
        %v1177 = vrot.slane %v698, 7
        %v1178 = vrot.slane %v704, 7
        %v1179 = vrot.slane %v710, 7
        %v1180 = vrot.slane %v716, 7
        %v1181 = vrot.slane %v722, 7
        %v1182 = vrot.slane %v728, 7
        %v1183 = vrot.slane %v734, 7
        %v1184 = vrot.slane %v740, 7
        %v1185 = vsel %vm780, %v1183, %v1184
        %v1186 = vsel %vm780, %v1182, %v1183
        %v1187 = vsel %vm780, %v1181, %v1182
        %v1188 = vsel %vm780, %v1180, %v1181
        %v1189 = vsel %vm780, %v1179, %v1180
        %v1190 = vsel %vm780, %v1178, %v1179
        %v1191 = vsel %vm780, %v1177, %v1178
        %v1192 = vsel %vm780, %v1176, %v1177
        %v1193 = vsel %vm780, %v1175, %v1176
        %v1194 = vsel %vm780, %v1174, %v1175
        %v1195 = vsel %vm780, %v1173, %v1174
        %v1196 = vsel %vm780, %v1172, %v1173
        %v1197 = vsel %vm780, %v1171, %v1172
        %v1198 = vsel %vm780, %v1170, %v1171
        %v1199 = vsel %vm780, %v1169, %v1170
        %v1200 = vsel %vm780, %v1168, %v1169
        %v1201 = vsel %vm780, %v1167, %v1168
        %v1202 = vsel %vm780, %v1166, %v1167
        %v1203 = vsel %vm780, %v1165, %v1166
        %v1204 = vsel %vm780, %v1184, %v1165
        %v1205 = vrot.slane %v626, 1
        %v1206 = vrot.slane %v632, 1
        %v1207 = vrot.slane %v638, 1
        %v1208 = vrot.slane %v644, 1
        %v1209 = vrot.slane %v650, 1
        %v1210 = vrot.slane %v656, 1
        %v1211 = vrot.slane %v662, 1
        %v1212 = vrot.slane %v668, 1
        %v1213 = vrot.slane %v674, 1
        %v1214 = vrot.slane %v680, 1
        %v1215 = vrot.slane %v686, 1
        %v1216 = vrot.slane %v692, 1
        %v1217 = vrot.slane %v698, 1
        %v1218 = vrot.slane %v704, 1
        %v1219 = vrot.slane %v710, 1
        %v1220 = vrot.slane %v716, 1
        %v1221 = vrot.slane %v722, 1
        %v1222 = vrot.slane %v728, 1
        %v1223 = vrot.slane %v734, 1
        %v1224 = vrot.slane %v740, 1
        %v1225 = vsel %vm821, %v1223, %v1224
        %v1226 = vsel %vm821, %v1222, %v1223
        %v1227 = vsel %vm821, %v1221, %v1222
        %v1228 = vsel %vm821, %v1220, %v1221
        %v1229 = vsel %vm821, %v1219, %v1220
        %v1230 = vsel %vm821, %v1218, %v1219
        %v1231 = vsel %vm821, %v1217, %v1218
        %v1232 = vsel %vm821, %v1216, %v1217
        %v1233 = vsel %vm821, %v1215, %v1216
        %v1234 = vsel %vm821, %v1214, %v1215
        %v1235 = vsel %vm821, %v1213, %v1214
        %v1236 = vsel %vm821, %v1212, %v1213
        %v1237 = vsel %vm821, %v1211, %v1212
        %v1238 = vsel %vm821, %v1210, %v1211
        %v1239 = vsel %vm821, %v1209, %v1210
        %v1240 = vsel %vm821, %v1208, %v1209
        %v1241 = vsel %vm821, %v1207, %v1208
        %v1242 = vsel %vm821, %v1206, %v1207
        %v1243 = vsel %vm821, %v1205, %v1206
        %v1244 = vsel %vm821, %v1224, %v1205
        %v1245 = vlaneseq
        %v1246 = vshrl.u32 %v1245, 7
        %v1247 = vsub.s32 0, %v1246
        %v1248 = vrot.slane %v1162, %v1247
        %v1249 = vlaneseq
        %v1250 = vshrl.u32 %v1249, 7
        %v1251 = vsub.s32 0, %v1250
        %v1252 = vrot.slane %v1163, %v1251
        %v1253 = vlaneseq
        %v1254 = vshrl.u32 %v1253, 7
        %v1255 = vsub.s32 0, %v1254
        %v1256 = vrot.slane %v1164, %v1255
        %v1257 = vmul.f32 %v1248, %v749
        %v1258 = vmul.f32 %v1248, %v750
        %v1259 = vmul.f32 %v1252, %v749
        %v1260 = vmul.f32 %v1252, %v750
        %v1261 = vmul.f32 %v1256, %v749
        %v1262 = vmul.f32 %v1256, %v750
        %v1263 = vlaneseq
        %v1264 = vshrl.u32 %v1263, 7
        %v1265 = vsub.s32 2, %v1264
        %v1266 = vrot.slane %v1162, %v1265
        %v1267 = vlaneseq
        %v1268 = vshrl.u32 %v1267, 7
        %v1269 = vsub.s32 2, %v1268
        %v1270 = vrot.slane %v1163, %v1269
        %v1271 = vlaneseq
        %v1272 = vshrl.u32 %v1271, 7
        %v1273 = vsub.s32 2, %v1272
        %v1274 = vrot.slane %v1164, %v1273
        %v1275 = vmul.f32 %v1266, %v755
        %v1276 = vmul.f32 %v1266, %v756
        %v1277 = vmul.f32 %v1270, %v755
        %v1278 = vmul.f32 %v1270, %v756
        %v1279 = vmul.f32 %v1274, %v755
        %v1280 = vmul.f32 %v1274, %v756
        %v1281 = vmul.f32 %v1204, %v1257
        %v1282 = vmul.f32 %v1203, %v1258
        %v1283 = vmul.f32 %v1202, %v1257
        %v1284 = vmul.f32 %v1201, %v1258
        %v1285 = vmul.f32 %v1200, %v1257
        %v1286 = vmul.f32 %v1199, %v1258
        %v1287 = vmul.f32 %v1198, %v1257
        %v1288 = vmul.f32 %v1197, %v1258
        %v1289 = vmul.f32 %v1196, %v1257
        %v1290 = vmul.f32 %v1195, %v1258
        %v1291 = vmul.f32 %v1194, %v1257
        %v1292 = vmul.f32 %v1193, %v1258
        %v1293 = vmul.f32 %v1192, %v1257
        %v1294 = vmul.f32 %v1191, %v1258
        %v1295 = vmul.f32 %v1190, %v1257
        %v1296 = vmul.f32 %v1189, %v1258
        %v1297 = vlaneseq
        %v1298 = vshrl.u32 %v1297, 7
        %v1299 = vsub.s32 1, %v1298
        %v1300 = vrot.slane %v1162, %v1299
        %v1301 = vmul.f32 %v626, %v1300
        %v1302 = vmul.f32 %v632, %v1300
        %v1303 = vmul.f32 %v638, %v1300
        %v1304 = vmul.f32 %v644, %v1300
        %v1305 = vmul.f32 %v650, %v1300
        %v1306 = vmul.f32 %v656, %v1300
        %v1307 = vmul.f32 %v662, %v1300
        %v1308 = vmul.f32 %v668, %v1300
        %v1309 = vmul.f32 %v674, %v1300
        %v1310 = vmul.f32 %v680, %v1300
        %v1311 = vmul.f32 %v686, %v1300
        %v1312 = vmul.f32 %v692, %v1300
        %v1313 = vmul.f32 %v698, %v1300
        %v1314 = vmul.f32 %v704, %v1300
        %v1315 = vmul.f32 %v710, %v1300
        %v1316 = vmul.f32 %v716, %v1300
        %v1317 = vadd.f32 %v1281, %v1301
        %v1318 = vadd.f32 %v1282, %v1302
        %v1319 = vadd.f32 %v1283, %v1303
        %v1320 = vadd.f32 %v1284, %v1304
        %v1321 = vadd.f32 %v1285, %v1305
        %v1322 = vadd.f32 %v1286, %v1306
        %v1323 = vadd.f32 %v1287, %v1307
        %v1324 = vadd.f32 %v1288, %v1308
        %v1325 = vadd.f32 %v1289, %v1309
        %v1326 = vadd.f32 %v1290, %v1310
        %v1327 = vadd.f32 %v1291, %v1311
        %v1328 = vadd.f32 %v1292, %v1312
        %v1329 = vadd.f32 %v1293, %v1313
        %v1330 = vadd.f32 %v1294, %v1314
        %v1331 = vadd.f32 %v1295, %v1315
        %v1332 = vadd.f32 %v1296, %v1316
        %v1333 = vmul.f32 %v1243, %v1275
        %v1334 = vmul.f32 %v1242, %v1276
        %v1335 = vmul.f32 %v1241, %v1275
        %v1336 = vmul.f32 %v1240, %v1276
        %v1337 = vmul.f32 %v1239, %v1275
        %v1338 = vmul.f32 %v1238, %v1276
        %v1339 = vmul.f32 %v1237, %v1275
        %v1340 = vmul.f32 %v1236, %v1276
        %v1341 = vmul.f32 %v1235, %v1275
        %v1342 = vmul.f32 %v1234, %v1276
        %v1343 = vmul.f32 %v1233, %v1275
        %v1344 = vmul.f32 %v1232, %v1276
        %v1345 = vmul.f32 %v1231, %v1275
        %v1346 = vmul.f32 %v1230, %v1276
        %v1347 = vmul.f32 %v1229, %v1275
        %v1348 = vmul.f32 %v1228, %v1276
        %v1349 = vadd.f32 %v1317, %v1333
        %v1350 = vadd.f32 %v1318, %v1334
        %v1351 = vadd.f32 %v1319, %v1335
        %v1352 = vadd.f32 %v1320, %v1336
        %v1353 = vadd.f32 %v1321, %v1337
        %v1354 = vadd.f32 %v1322, %v1338
        %v1355 = vadd.f32 %v1323, %v1339
        %v1356 = vadd.f32 %v1324, %v1340
        %v1357 = vadd.f32 %v1325, %v1341
        %v1358 = vadd.f32 %v1326, %v1342
        %v1359 = vadd.f32 %v1327, %v1343
        %v1360 = vadd.f32 %v1328, %v1344
        %v1361 = vadd.f32 %v1329, %v1345
        %v1362 = vadd.f32 %v1330, %v1346
        %v1363 = vadd.f32 %v1331, %v1347
        %v1364 = vadd.f32 %v1332, %v1348
        %v1365 = vmul.f32 %v1202, %v1259
        %v1366 = vmul.f32 %v1201, %v1260
        %v1367 = vmul.f32 %v1200, %v1259
        %v1368 = vmul.f32 %v1199, %v1260
        %v1369 = vmul.f32 %v1198, %v1259
        %v1370 = vmul.f32 %v1197, %v1260
        %v1371 = vmul.f32 %v1196, %v1259
        %v1372 = vmul.f32 %v1195, %v1260
        %v1373 = vmul.f32 %v1194, %v1259
        %v1374 = vmul.f32 %v1193, %v1260
        %v1375 = vmul.f32 %v1192, %v1259
        %v1376 = vmul.f32 %v1191, %v1260
        %v1377 = vmul.f32 %v1190, %v1259
        %v1378 = vmul.f32 %v1189, %v1260
        %v1379 = vmul.f32 %v1188, %v1259
        %v1380 = vmul.f32 %v1187, %v1260
        %v1381 = vlaneseq
        %v1382 = vshrl.u32 %v1381, 7
        %v1383 = vsub.s32 1, %v1382
        %v1384 = vrot.slane %v1163, %v1383
        %v1385 = vmul.f32 %v638, %v1384
        %v1386 = vmul.f32 %v644, %v1384
        %v1387 = vmul.f32 %v650, %v1384
        %v1388 = vmul.f32 %v656, %v1384
        %v1389 = vmul.f32 %v662, %v1384
        %v1390 = vmul.f32 %v668, %v1384
        %v1391 = vmul.f32 %v674, %v1384
        %v1392 = vmul.f32 %v680, %v1384
        %v1393 = vmul.f32 %v686, %v1384
        %v1394 = vmul.f32 %v692, %v1384
        %v1395 = vmul.f32 %v698, %v1384
        %v1396 = vmul.f32 %v704, %v1384
        %v1397 = vmul.f32 %v710, %v1384
        %v1398 = vmul.f32 %v716, %v1384
        %v1399 = vmul.f32 %v722, %v1384
        %v1400 = vmul.f32 %v728, %v1384
        %v1401 = vadd.f32 %v1365, %v1385
        %v1402 = vadd.f32 %v1366, %v1386
        %v1403 = vadd.f32 %v1367, %v1387
        %v1404 = vadd.f32 %v1368, %v1388
        %v1405 = vadd.f32 %v1369, %v1389
        %v1406 = vadd.f32 %v1370, %v1390
        %v1407 = vadd.f32 %v1371, %v1391
        %v1408 = vadd.f32 %v1372, %v1392
        %v1409 = vadd.f32 %v1373, %v1393
        %v1410 = vadd.f32 %v1374, %v1394
        %v1411 = vadd.f32 %v1375, %v1395
        %v1412 = vadd.f32 %v1376, %v1396
        %v1413 = vadd.f32 %v1377, %v1397
        %v1414 = vadd.f32 %v1378, %v1398
        %v1415 = vadd.f32 %v1379, %v1399
        %v1416 = vadd.f32 %v1380, %v1400
        %v1417 = vmul.f32 %v1241, %v1277
        %v1418 = vmul.f32 %v1240, %v1278
        %v1419 = vmul.f32 %v1239, %v1277
        %v1420 = vmul.f32 %v1238, %v1278
        %v1421 = vmul.f32 %v1237, %v1277
        %v1422 = vmul.f32 %v1236, %v1278
        %v1423 = vmul.f32 %v1235, %v1277
        %v1424 = vmul.f32 %v1234, %v1278
        %v1425 = vmul.f32 %v1233, %v1277
        %v1426 = vmul.f32 %v1232, %v1278
        %v1427 = vmul.f32 %v1231, %v1277
        %v1428 = vmul.f32 %v1230, %v1278
        %v1429 = vmul.f32 %v1229, %v1277
        %v1430 = vmul.f32 %v1228, %v1278
        %v1431 = vmul.f32 %v1227, %v1277
        %v1432 = vmul.f32 %v1226, %v1278
        %v1433 = vadd.f32 %v1401, %v1417
        %v1434 = vadd.f32 %v1402, %v1418
        %v1435 = vadd.f32 %v1403, %v1419
        %v1436 = vadd.f32 %v1404, %v1420
        %v1437 = vadd.f32 %v1405, %v1421
        %v1438 = vadd.f32 %v1406, %v1422
        %v1439 = vadd.f32 %v1407, %v1423
        %v1440 = vadd.f32 %v1408, %v1424
        %v1441 = vadd.f32 %v1409, %v1425
        %v1442 = vadd.f32 %v1410, %v1426
        %v1443 = vadd.f32 %v1411, %v1427
        %v1444 = vadd.f32 %v1412, %v1428
        %v1445 = vadd.f32 %v1413, %v1429
        %v1446 = vadd.f32 %v1414, %v1430
        %v1447 = vadd.f32 %v1415, %v1431
        %v1448 = vadd.f32 %v1416, %v1432
        %v1449 = vadd.f32 %v1349, %v1433
        %v1450 = vadd.f32 %v1350, %v1434
        %v1451 = vadd.f32 %v1351, %v1435
        %v1452 = vadd.f32 %v1352, %v1436
        %v1453 = vadd.f32 %v1353, %v1437
        %v1454 = vadd.f32 %v1354, %v1438
        %v1455 = vadd.f32 %v1355, %v1439
        %v1456 = vadd.f32 %v1356, %v1440
        %v1457 = vadd.f32 %v1357, %v1441
        %v1458 = vadd.f32 %v1358, %v1442
        %v1459 = vadd.f32 %v1359, %v1443
        %v1460 = vadd.f32 %v1360, %v1444
        %v1461 = vadd.f32 %v1361, %v1445
        %v1462 = vadd.f32 %v1362, %v1446
        %v1463 = vadd.f32 %v1363, %v1447
        %v1464 = vadd.f32 %v1364, %v1448
        %v1465 = vmul.f32 %v1200, %v1261
        %v1466 = vmul.f32 %v1199, %v1262
        %v1467 = vmul.f32 %v1198, %v1261
        %v1468 = vmul.f32 %v1197, %v1262
        %v1469 = vmul.f32 %v1196, %v1261
        %v1470 = vmul.f32 %v1195, %v1262
        %v1471 = vmul.f32 %v1194, %v1261
        %v1472 = vmul.f32 %v1193, %v1262
        %v1473 = vmul.f32 %v1192, %v1261
        %v1474 = vmul.f32 %v1191, %v1262
        %v1475 = vmul.f32 %v1190, %v1261
        %v1476 = vmul.f32 %v1189, %v1262
        %v1477 = vmul.f32 %v1188, %v1261
        %v1478 = vmul.f32 %v1187, %v1262
        %v1479 = vmul.f32 %v1186, %v1261
        %v1480 = vmul.f32 %v1185, %v1262
        %v1481 = vlaneseq
        %v1482 = vshrl.u32 %v1481, 7
        %v1483 = vsub.s32 1, %v1482
        %v1484 = vrot.slane %v1164, %v1483
        %v1485 = vmul.f32 %v650, %v1484
        %v1486 = vmul.f32 %v656, %v1484
        %v1487 = vmul.f32 %v662, %v1484
        %v1488 = vmul.f32 %v668, %v1484
        %v1489 = vmul.f32 %v674, %v1484
        %v1490 = vmul.f32 %v680, %v1484
        %v1491 = vmul.f32 %v686, %v1484
        %v1492 = vmul.f32 %v692, %v1484
        %v1493 = vmul.f32 %v698, %v1484
        %v1494 = vmul.f32 %v704, %v1484
        %v1495 = vmul.f32 %v710, %v1484
        %v1496 = vmul.f32 %v716, %v1484
        %v1497 = vmul.f32 %v722, %v1484
        %v1498 = vmul.f32 %v728, %v1484
        %v1499 = vmul.f32 %v734, %v1484
        %v1500 = vmul.f32 %v740, %v1484
        %v1501 = vadd.f32 %v1465, %v1485
        %v1502 = vadd.f32 %v1466, %v1486
        %v1503 = vadd.f32 %v1467, %v1487
        %v1504 = vadd.f32 %v1468, %v1488
        %v1505 = vadd.f32 %v1469, %v1489
        %v1506 = vadd.f32 %v1470, %v1490
        %v1507 = vadd.f32 %v1471, %v1491
        %v1508 = vadd.f32 %v1472, %v1492
        %v1509 = vadd.f32 %v1473, %v1493
        %v1510 = vadd.f32 %v1474, %v1494
        %v1511 = vadd.f32 %v1475, %v1495
        %v1512 = vadd.f32 %v1476, %v1496
        %v1513 = vadd.f32 %v1477, %v1497
        %v1514 = vadd.f32 %v1478, %v1498
        %v1515 = vadd.f32 %v1479, %v1499
        %v1516 = vadd.f32 %v1480, %v1500
        %v1517 = vmul.f32 %v1239, %v1279
        %v1518 = vmul.f32 %v1238, %v1280
        %v1519 = vmul.f32 %v1237, %v1279
        %v1520 = vmul.f32 %v1236, %v1280
        %v1521 = vmul.f32 %v1235, %v1279
        %v1522 = vmul.f32 %v1234, %v1280
        %v1523 = vmul.f32 %v1233, %v1279
        %v1524 = vmul.f32 %v1232, %v1280
        %v1525 = vmul.f32 %v1231, %v1279
        %v1526 = vmul.f32 %v1230, %v1280
        %v1527 = vmul.f32 %v1229, %v1279
        %v1528 = vmul.f32 %v1228, %v1280
        %v1529 = vmul.f32 %v1227, %v1279
        %v1530 = vmul.f32 %v1226, %v1280
        %v1531 = vmul.f32 %v1225, %v1279
        %v1532 = vmul.f32 %v1244, %v1280
        %v1533 = vadd.f32 %v1501, %v1517
        %v1534 = vadd.f32 %v1502, %v1518
        %v1535 = vadd.f32 %v1503, %v1519
        %v1536 = vadd.f32 %v1504, %v1520
        %v1537 = vadd.f32 %v1505, %v1521
        %v1538 = vadd.f32 %v1506, %v1522
        %v1539 = vadd.f32 %v1507, %v1523
        %v1540 = vadd.f32 %v1508, %v1524
        %v1541 = vadd.f32 %v1509, %v1525
        %v1542 = vadd.f32 %v1510, %v1526
        %v1543 = vadd.f32 %v1511, %v1527
        %v1544 = vadd.f32 %v1512, %v1528
        %v1545 = vadd.f32 %v1513, %v1529
        %v1546 = vadd.f32 %v1514, %v1530
        %v1547 = vadd.f32 %v1515, %v1531
        %v1548 = vadd.f32 %v1516, %v1532
        %v1549 = vadd.f32 %v1449, %v1533
        %v1550 = vadd.f32 %v1450, %v1534
        %v1551 = vadd.f32 %v1451, %v1535
        %v1552 = vadd.f32 %v1452, %v1536
        %v1553 = vadd.f32 %v1453, %v1537
        %v1554 = vadd.f32 %v1454, %v1538
        %v1555 = vadd.f32 %v1455, %v1539
        %v1556 = vadd.f32 %v1456, %v1540
        %v1557 = vadd.f32 %v1457, %v1541
        %v1558 = vadd.f32 %v1458, %v1542
        %v1559 = vadd.f32 %v1459, %v1543
        %v1560 = vadd.f32 %v1460, %v1544
        %v1561 = vadd.f32 %v1461, %v1545
        %v1562 = vadd.f32 %v1462, %v1546
        %v1563 = vadd.f32 %v1463, %v1547
        %v1564 = vadd.f32 %v1464, %v1548
        %v1565 = vmul.f32 %v1146, 0.70710677
        %v1566 = vmul.f32 %v1147, 0.70710677
        %v1567 = vmul.f32 %v1148, 0.70710677
        %v1568 = vmul.f32 %v1149, 0.70710677
        %v1569 = vmul.f32 %v1150, 0.70710677
        %v1570 = vmul.f32 %v1151, 0.70710677
        %v1571 = vmul.f32 %v1152, 0.70710677
        %v1572 = vmul.f32 %v1153, 0.70710677
        %v1573 = vmul.f32 %v1154, 0.70710677
        %v1574 = vmul.f32 %v1155, 0.70710677
        %v1575 = vmul.f32 %v1156, 0.70710677
        %v1576 = vmul.f32 %v1157, 0.70710677
        %v1577 = vmul.f32 %v1158, 0.70710677
        %v1578 = vmul.f32 %v1159, 0.70710677
        %v1579 = vmul.f32 %v1160, 0.70710677
        %v1580 = vmul.f32 %v1161, 0.70710677
        %v1581 = verf.f32.pop %v1565
        %v1582 = verf.f32.pop %v1566
        %v1583 = verf.f32.pop %v1567
        %v1584 = verf.f32.pop %v1568
        %v1585 = verf.f32.pop %v1569
        %v1586 = verf.f32.pop %v1570
        %v1587 = verf.f32.pop %v1571
        %v1588 = verf.f32.pop %v1572
        %v1589 = verf.f32.pop %v1573
        %v1590 = verf.f32.pop %v1574
        %v1591 = verf.f32.pop %v1575
        %v1592 = verf.f32.pop %v1576
        %v1593 = verf.f32.pop %v1577
        %v1594 = verf.f32.pop %v1578
        %v1595 = verf.f32.pop %v1579
        %v1596 = verf.f32.pop %v1580
        %v1597 = vadd.f32 %v1581, 1.0
        %v1598 = vadd.f32 %v1582, 1.0
        %v1599 = vadd.f32 %v1583, 1.0
        %v1600 = vadd.f32 %v1584, 1.0
        %v1601 = vadd.f32 %v1585, 1.0
        %v1602 = vadd.f32 %v1586, 1.0
        %v1603 = vadd.f32 %v1587, 1.0
        %v1604 = vadd.f32 %v1588, 1.0
        %v1605 = vadd.f32 %v1589, 1.0
        %v1606 = vadd.f32 %v1590, 1.0
        %v1607 = vadd.f32 %v1591, 1.0
        %v1608 = vadd.f32 %v1592, 1.0
        %v1609 = vadd.f32 %v1593, 1.0
        %v1610 = vadd.f32 %v1594, 1.0
        %v1611 = vadd.f32 %v1595, 1.0
        %v1612 = vadd.f32 %v1596, 1.0
        %v1613 = vmul.f32 %v1146, %v1597
        %v1614 = vmul.f32 %v1147, %v1598
        %v1615 = vmul.f32 %v1148, %v1599
        %v1616 = vmul.f32 %v1149, %v1600
        %v1617 = vmul.f32 %v1150, %v1601
        %v1618 = vmul.f32 %v1151, %v1602
        %v1619 = vmul.f32 %v1152, %v1603
        %v1620 = vmul.f32 %v1153, %v1604
        %v1621 = vmul.f32 %v1154, %v1605
        %v1622 = vmul.f32 %v1155, %v1606
        %v1623 = vmul.f32 %v1156, %v1607
        %v1624 = vmul.f32 %v1157, %v1608
        %v1625 = vmul.f32 %v1158, %v1609
        %v1626 = vmul.f32 %v1159, %v1610
        %v1627 = vmul.f32 %v1160, %v1611
        %v1628 = vmul.f32 %v1161, %v1612
        %v1629 = vmul.f32 %v1613, %v1549
        %v1630 = vmul.f32 %v1614, %v1550
        %v1631 = vmul.f32 %v1615, %v1551
        %v1632 = vmul.f32 %v1616, %v1552
        %v1633 = vmul.f32 %v1617, %v1553
        %v1634 = vmul.f32 %v1618, %v1554
        %v1635 = vmul.f32 %v1619, %v1555
        %v1636 = vmul.f32 %v1620, %v1556
        %v1637 = vmul.f32 %v1621, %v1557
        %v1638 = vmul.f32 %v1622, %v1558
        %v1639 = vmul.f32 %v1623, %v1559
        %v1640 = vmul.f32 %v1624, %v1560
        %v1641 = vmul.f32 %v1625, %v1561
        %v1642 = vmul.f32 %v1626, %v1562
        %v1643 = vmul.f32 %v1627, %v1563
        %v1644 = vmul.f32 %v1628, %v1564
        %v1645 = vld [vmem:[#allocation13] sm:$0xff]
        %v1646 = vld [vmem:[#allocation13 + $0x8] sm:$0xff]
        %v1647 = vld [vmem:[#allocation13 + $0x10] sm:$0xff]
        %v1648 = vld [vmem:[#allocation13 + $0x18] sm:$0xff]
        %v1649 = vld [vmem:[#allocation13 + $0x20] sm:$0xff]
        %v1650 = vld [vmem:[#allocation13 + $0x28] sm:$0xff]
        %v1651 = vld [vmem:[#allocation13 + $0x30] sm:$0xff]
        %v1652 = vld [vmem:[#allocation13 + $0x38] sm:$0xff]
        %v1653 = vld [vmem:[#allocation13 + $0x40] sm:$0xff]
        %v1654 = vld [vmem:[#allocation13 + $0x48] sm:$0xff]
        %v1655 = vld [vmem:[#allocation13 + $0x50] sm:$0xff]
        %v1656 = vld [vmem:[#allocation13 + $0x58] sm:$0xff]
        %v1657 = vld [vmem:[#allocation13 + $0x60] sm:$0xff]
        %v1658 = vld [vmem:[#allocation13 + $0x68] sm:$0xff]
        %v1659 = vld [vmem:[#allocation13 + $0x70] sm:$0xff]
        %v1660 = vld [vmem:[#allocation13 + $0x78] sm:$0xff]
        %1661 = vmatprep.subr.mxu0 0.0
        %1662 = vmatpush1.msra.mxu0 %v1660
        %1663 = vmatprep.subr.mxu0 0.0
        %1664 = vmatpush1.msra.mxu0 %v1659
        %1665 = vmatprep.subr.mxu0 0.0
        %1666 = vmatpush1.msra.mxu0 %v1658
        %1667 = vmatprep.subr.mxu0 0.0
        %1668 = vmatpush1.msra.mxu0 %v1657
        %1669 = vmatprep.subr.mxu0 0.0
        %1670 = vmatpush1.msra.mxu0 %v1656
        %1671 = vmatprep.subr.mxu0 0.0
        %1672 = vmatpush1.msra.mxu0 %v1655
        %1673 = vmatprep.subr.mxu0 0.0
        %1674 = vmatpush1.msra.mxu0 %v1654
        %1675 = vmatprep.subr.mxu0 0.0
        %1676 = vmatpush1.msra.mxu0 %v1653
        %1677 = vmatprep.subr.mxu0 0.0
        %1678 = vmatpush1.msra.mxu0 %v1652
        %1679 = vmatprep.subr.mxu0 0.0
        %1680 = vmatpush1.msra.mxu0 %v1651
        %1681 = vmatprep.subr.mxu0 0.0
        %1682 = vmatpush1.msra.mxu0 %v1650
        %1683 = vmatprep.subr.mxu0 0.0
        %1684 = vmatpush1.msra.mxu0 %v1649
        %1685 = vmatprep.subr.mxu0 0.0
        %1686 = vmatpush1.msra.mxu0 %v1648
        %1687 = vmatprep.subr.mxu0 0.0
        %1688 = vmatpush1.msra.mxu0 %v1647
        %1689 = vmatprep.subr.mxu0 0.0
        %1690 = vmatpush1.msra.mxu0 %v1646
        %1691 = vmatprep.subr.mxu0 0.0
        %1692 = vmatpush1.msra.mxu0 %v1645
        %1693 = vmatprep.subr.mxu0 0.0
        %1694 = vmatpush2.msra.mxu0 0.0
        %1695 = vmatprep.subr.mxu0 0.0
        %1696 = vmatpush2.msra.mxu0 0.0
        %1697 = vmatprep.subr.mxu0 0.0
        %1698 = vmatpush2.msra.mxu0 0.0
        %1699 = vmatprep.subr.mxu0 0.0
        %1700 = vmatpush2.msra.mxu0 0.0
        %1701 = vmatprep.subr.mxu0 0.0
        %1702 = vmatpush2.msra.mxu0 0.0
        %1703 = vmatprep.subr.mxu0 0.0
        %1704 = vmatpush2.msra.mxu0 0.0
        %1705 = vmatprep.subr.mxu0 0.0
        %1706 = vmatpush2.msra.mxu0 0.0
        %1707 = vmatprep.subr.mxu0 0.0
        %1708 = vmatpush2.msra.mxu0 0.0
        %1709 = vmatprep.subr.mxu0 0.0
        %1710 = vmatpush2.msra.mxu0 0.0
        %1711 = vmatprep.subr.mxu0 0.0
        %1712 = vmatpush2.msra.mxu0 0.0
        %1713 = vmatprep.subr.mxu0 0.0
        %1714 = vmatpush2.msra.mxu0 0.0
        %1715 = vmatprep.subr.mxu0 0.0
        %1716 = vmatpush2.msra.mxu0 0.0
        %1717 = vmatprep.subr.mxu0 0.0
        %1718 = vmatpush2.msra.mxu0 0.0
        %1719 = vmatprep.subr.mxu0 0.0
        %1720 = vmatpush2.msra.mxu0 0.0
        %1721 = vmatprep.subr.mxu0 0.0
        %1722 = vmatpush2.msra.mxu0 0.0
        %1723 = vmatprep.subr.mxu0 0.0
        %1724 = vmatpush2.msra.mxu0 0.0
        %1725 = vmatprep.mubr.f32.mxu0 0.0
        %1726 = vmatmul.mubr.f32.gmra.mxu0 %v1629
        %v1727 = vpop.f32.mrf.mxu0
        %v1728 = vadd.f32 0.0, %v1727
        %v1729 = vpop.f32.mrf.mxu0
        %1730 = vmatprep.mubr.f32.mxu0 0.0
        %1731 = vmatmul.mubr.f32.gmra.mxu0 %v1630
        %v1732 = vpop.f32.mrf.mxu0
        %v1733 = vadd.f32 0.0, %v1732
        %v1734 = vpop.f32.mrf.mxu0
        %1735 = vmatprep.mubr.f32.mxu0 0.0
        %1736 = vmatmul.mubr.f32.gmra.mxu0 %v1631
        %v1737 = vpop.f32.mrf.mxu0
        %v1738 = vadd.f32 0.0, %v1737
        %v1739 = vpop.f32.mrf.mxu0
        %1740 = vmatprep.mubr.f32.mxu0 0.0
        %1741 = vmatmul.mubr.f32.gmra.mxu0 %v1632
        %v1742 = vpop.f32.mrf.mxu0
        %v1743 = vadd.f32 0.0, %v1742
        %v1744 = vpop.f32.mrf.mxu0
        %1745 = vmatprep.mubr.f32.mxu0 0.0
        %1746 = vmatmul.mubr.f32.gmra.mxu0 %v1633
        %v1747 = vpop.f32.mrf.mxu0
        %v1748 = vadd.f32 0.0, %v1747
        %v1749 = vpop.f32.mrf.mxu0
        %1750 = vmatprep.mubr.f32.mxu0 0.0
        %1751 = vmatmul.mubr.f32.gmra.mxu0 %v1634
        %v1752 = vpop.f32.mrf.mxu0
        %v1753 = vadd.f32 0.0, %v1752
        %v1754 = vpop.f32.mrf.mxu0
        %1755 = vmatprep.mubr.f32.mxu0 0.0
        %1756 = vmatmul.mubr.f32.gmra.mxu0 %v1635
        %v1757 = vpop.f32.mrf.mxu0
        %v1758 = vadd.f32 0.0, %v1757
        %v1759 = vpop.f32.mrf.mxu0
        %1760 = vmatprep.mubr.f32.mxu0 0.0
        %1761 = vmatmul.mubr.f32.gmra.mxu0 %v1636
        %v1762 = vpop.f32.mrf.mxu0
        %v1763 = vadd.f32 0.0, %v1762
        %v1764 = vpop.f32.mrf.mxu0
        %1765 = vmatprep.mubr.f32.mxu0 0.0
        %1766 = vmatmul.mubr.f32.gmra.mxu0 %v1637
        %v1767 = vpop.f32.mrf.mxu0
        %v1768 = vadd.f32 0.0, %v1767
        %v1769 = vpop.f32.mrf.mxu0
        %1770 = vmatprep.mubr.f32.mxu0 0.0
        %1771 = vmatmul.mubr.f32.gmra.mxu0 %v1638
        %v1772 = vpop.f32.mrf.mxu0
        %v1773 = vadd.f32 0.0, %v1772
        %v1774 = vpop.f32.mrf.mxu0
        %1775 = vmatprep.mubr.f32.mxu0 0.0
        %1776 = vmatmul.mubr.f32.gmra.mxu0 %v1639
        %v1777 = vpop.f32.mrf.mxu0
        %v1778 = vadd.f32 0.0, %v1777
        %v1779 = vpop.f32.mrf.mxu0
        %1780 = vmatprep.mubr.f32.mxu0 0.0
        %1781 = vmatmul.mubr.f32.gmra.mxu0 %v1640
        %v1782 = vpop.f32.mrf.mxu0
        %v1783 = vadd.f32 0.0, %v1782
        %v1784 = vpop.f32.mrf.mxu0
        %1785 = vmatprep.mubr.f32.mxu0 0.0
        %1786 = vmatmul.mubr.f32.gmra.mxu0 %v1641
        %v1787 = vpop.f32.mrf.mxu0
        %v1788 = vadd.f32 0.0, %v1787
        %v1789 = vpop.f32.mrf.mxu0
        %1790 = vmatprep.mubr.f32.mxu0 0.0
        %1791 = vmatmul.mubr.f32.gmra.mxu0 %v1642
        %v1792 = vpop.f32.mrf.mxu0
        %v1793 = vadd.f32 0.0, %v1792
        %v1794 = vpop.f32.mrf.mxu0
        %1795 = vmatprep.mubr.f32.mxu0 0.0
        %1796 = vmatmul.mubr.f32.gmra.mxu0 %v1643
        %v1797 = vpop.f32.mrf.mxu0
        %v1798 = vadd.f32 0.0, %v1797
        %v1799 = vpop.f32.mrf.mxu0
        %1800 = vmatprep.mubr.f32.mxu0 0.0
        %1801 = vmatmul.mubr.f32.gmra.mxu0 %v1644
        %v1802 = vpop.f32.mrf.mxu0
        %v1803 = vadd.f32 0.0, %v1802
        %v1804 = vpop.f32.mrf.mxu0
        %1805 = vdwg.mxu0
        %1806 = vst [vmem:[%s482] sm:$0xff] %v1728
        %1807 = vst [vmem:[%s482 + $0x8] sm:$0xff] %v1733
        %1808 = vst [vmem:[%s482 + $0x10] sm:$0xff] %v1738
        %1809 = vst [vmem:[%s482 + $0x18] sm:$0xff] %v1743
        %1810 = vst [vmem:[%s482 + $0x20] sm:$0xff] %v1748
        %1811 = vst [vmem:[%s482 + $0x28] sm:$0xff] %v1753
        %1812 = vst [vmem:[%s482 + $0x30] sm:$0xff] %v1758
        %1813 = vst [vmem:[%s482 + $0x38] sm:$0xff] %v1763
        %1814 = vst [vmem:[%s482 + $0x40] sm:$0xff] %v1768
        %1815 = vst [vmem:[%s482 + $0x48] sm:$0xff] %v1773
        %1816 = vst [vmem:[%s482 + $0x50] sm:$0xff] %v1778
        %1817 = vst [vmem:[%s482 + $0x58] sm:$0xff] %v1783
        %1818 = vst [vmem:[%s482 + $0x60] sm:$0xff] %v1788
        %1819 = vst [vmem:[%s482 + $0x68] sm:$0xff] %v1793
        %1820 = vst [vmem:[%s482 + $0x70] sm:$0xff] %v1798
        %1821 = vst [vmem:[%s482 + $0x78] sm:$0xff] %v1803
        %s1822 = sand.u32 %s235, 1
        %s1823 = scalar_lea.sflag [#allocation4], %s1822
        %s1824 = sand.u32 %s235, 1
        %s1825 = smul.addr %s1824, 128
        %s1826 = scalar_lea.vmem [#allocation14], %s1825
        // Predicated region
        $region77: #{tpu_custom_call.1} parent=47 // pred_check
          %p1827 = pneg %p245
        $region78: #{tpu_custom_call.1} parent=47 // pred_check_branch
          %1829 = sbr.rel (%p1827) target = $region80
        $region79: #{tpu_custom_call.1} parent=47 // pred_region
          %s1830 = smul.u32 8, %s34
          %s1832 = ssub.s32 2048, 2048
          %1833 = vsyncadd %s1823, %s1832
          %s1834 = smul.addr %s1830, 2
          %s1835 = smul.addr %s33, 32
          %s1836 = sadd.s32 %s1834, %s1835
          %s1837 = smul.addr %s1836, 128
          %s1838 = scalar_lea.hbm %s7, %s1837
          %s1839 = sshll.u32 %s1826, 4
          %s1840 = int_to_ptr.vmem [resolvable:$true] %s1839
          %1845 = dma.vmem_to_hbm [thread:$0]  %s1840, 2048, %s1838, %s1823, 128, 128, 8
        $region80: #{tpu_custom_call.1} parent=47 // pred_fallthru
          _
      $region48: #{tpu_custom_call.1} parent=5 // pred_fallthru
        _
      %p1846 = scmp.le.s32.totalorder 2, %s24
      // Predicated region
      $region81: #{tpu_custom_call.1} parent=5 // pred_check
        %p1847 = pneg %p1846
      $region82: #{tpu_custom_call.1} parent=5 // pred_check_branch
        %1849 = sbr.rel (%p1847) target = $region84
      $region83: #{tpu_custom_call.1} parent=5 // pred_region
        %s1850 = ssub.s32 %s24, 2
        // Predicated region
        $region85: #{tpu_custom_call.1} parent=83 // pred_check
          %p1851 = pneg %p251
        $region86: #{tpu_custom_call.1} parent=83 // pred_check_branch
          %1853 = sbr.rel (%p1851) target = $region88
        $region87: #{tpu_custom_call.1} parent=83 // pred_region
          %s1854 = sand.u32 %s236, 1
          %s1855 = scalar_lea.sflag [#allocation4], %s1854
          %s1856 = sand.u32 %s236, 1
          %s1857 = smul.addr %s1856, 128
          %s1858 = scalar_lea.vmem [#allocation14], %s1857
          %1859 = dma.done %s1855, 2048
        $region88: #{tpu_custom_call.1} parent=83 // pred_fallthru
          _
      $region84: #{tpu_custom_call.1} parent=5 // pred_fallthru
        _
    $region6: #{tpu_custom_call.1} parent=1 // loop_footer
      %s28 = sadd.s32 1, %s24
    $region7: #{tpu_custom_call.1} parent=1 // loop_footer_branch
      %23 = sbr.rel target = $region3
    $region8: #{tpu_custom_call.1} parent=1 // loop_exit
      _
    %1860 = vsyncpa [#allocation3], 1
    %s1861 = scalar_lea.sflag [#allocation3], 1
    %1862 = vsyncpa %s1861, 1
    %1863 = vsyncpa [#allocation6], 1
    %s1864 = scalar_lea.sflag [#allocation6], 1
    %1865 = vsyncpa %s1864, 1
    %1866 = vsyncpa [#allocation9], 1
    %1867 = vsyncpa [#allocation12], 1
    %1868 = vsyncpa [#allocation4], 1
    %s1869 = scalar_lea.sflag [#allocation4], 1
    %1870 = vsyncpa %s1869, 1

</llo_original>
